<compile_context>
chip_gen: v6e
topology: v6e:2x2x1
jax: 0.10.0
libtpu: 0.0.40
codegen_flags: <defaults>
</compile_context>

<pallas_src>
import numpy as np
import jax
import jax.numpy as jnp
from jax.experimental import pallas as pl
from jax.experimental.pallas import tpu as pltpu


# ------------------------------ fused Pallas kernel --------------------------

def _fused_forward_kernel(x_ref, l0_ref, l1_ref, l2_ref,
                          g1a_ref, g1b_ref, g2a_ref, g2b_ref, bmat_ref,
                          w10_ref, w11_ref, b1_ref,
                          w20_ref, w21_ref, b2_ref,
                          w30_ref, w31_ref, b3_ref,
                          wf_ref, bf_ref, o_ref):
    f32 = jnp.float32
    bf16 = jnp.bfloat16

    def softplus(z):
        # numerically stable softplus (log1p form would be marginally more
        # accurate; kept as log(1+x) for guaranteed Mosaic lowering)
        return jnp.maximum(z, 0.0) + jnp.log(1.0 + jnp.exp(-jnp.abs(z)))

    def cheb_bn_act(lhat, h_b, w0, w1, bias):
        # ChebConv K=2 (lambda_max=2) with folded BatchNorm(eval)+bias:
        #   z = T0(L^)h @ W0' + T1(L^)h @ W1' + b'
        # two MXU pushes into the same f32 value; h_b is bf16, cast once.
        tx1 = jnp.dot(lhat, h_b, preferred_element_type=f32)          # T1(L^) h
        z = (jnp.dot(h_b, w0, preferred_element_type=f32)
             + jnp.dot(tx1.astype(bf16), w1, preferred_element_type=f32)
             + bias)
        return softplus(z)                                            # f32

    def cluster_max_pool(ga, gb, h_b):
        # graclus max_pool: every cluster has <= 2 members; ga/gb are one-hot
        # selectors of member 0 / member 1 (== member 0 for singletons).
        # TODO(synk): at real N replace these one-hot matmuls with an
        # index-based gather (scalar-prefetched member indices) to avoid O(N^2).
        pa = jnp.dot(ga, h_b, preferred_element_type=f32)
        pb = jnp.dot(gb, h_b, preferred_element_type=f32)
        return jnp.maximum(pa, pb)                                    # f32

    h = cheb_bn_act(l0_ref[...], x_ref[...], w10_ref[...], w11_ref[...], b1_ref[...])
    h = cluster_max_pool(g1a_ref[...], g1b_ref[...], h.astype(bf16))
    h = cheb_bn_act(l1_ref[...], h.astype(bf16), w20_ref[...], w21_ref[...], b2_ref[...])
    h = cluster_max_pool(g2a_ref[...], g2b_ref[...], h.astype(bf16))
    h = cheb_bn_act(l2_ref[...], h.astype(bf16), w30_ref[...], w31_ref[...], b3_ref[...])

    # global_mean_pool (1/count folded into bmat) -> fc -> log_softmax(dim=1)
    pooled = jnp.dot(bmat_ref[...], h.astype(bf16), preferred_element_type=f32)
    logits = (jnp.dot(pooled.astype(bf16), wf_ref[...], preferred_element_type=f32)
              + bf_ref[...])
    m = jnp.max(logits, axis=-1, keepdims=True)
    s = logits - m
    o_ref[...] = s - jnp.log(jnp.sum(jnp.exp(s), axis=-1, keepdims=True))


# ---------------------- host-side precompute (graph glue) --------------------

def _pad8(n):
    return max(8, ((n + 7) // 8) * 8)


def _scaled_laplacian(adj):
    # PyG ChebConv normalization with lambda_max=2: 2L/lmax - I = -D^-1/2 A D^-1/2.
    # Isolated / padded nodes get all-zero rows & columns, matching PyG.
    deg = adj.sum(axis=1)
    dinv = np.where(deg > 0.0, 1.0 / np.sqrt(np.maximum(deg, 1e-12)), 0.0)
    return (-(dinv[:, None] * adj * dinv[None, :])).astype(np.float32)


def _greedy_matching(adj, batch, valid=None):
    # TODO(synk): torch_geometric.graclus is a *randomized* greedy matching with
    # no Pallas equivalent; replaced by a deterministic heavy-edge matching.
    n = adj.shape[0]
    if valid is None:
        valid = np.ones(n, dtype=bool)
    cluster = -np.ones(n, dtype=np.int64)
    cid = 0
    for i in range(n):
        if not valid[i] or cluster[i] >= 0:
            continue
        w = adj[i].copy()
        w[~valid] = 0.0
        w[cluster >= 0] = 0.0
        w[batch != batch[i]] = 0.0
        w[i] = 0.0
        j = int(np.argmax(w))
        cluster[i] = cid
        if w[j] > 0.0:
            cluster[j] = cid
        cid += 1
    return cluster, cid


def _pool_level(adj, batch, cluster, num_clusters, ncp):
    # Two (ncp, n) one-hot selectors (member 0 / member 1) for the cluster max
    # pool, and the coarsened adjacency M A M^T with self loops dropped.
    # Clusters are padded to `ncp` (multiple of 8); padded clusters are isolated
    # (zero Laplacian rows) and never referenced downstream.
    n = adj.shape[0]
    ga = np.zeros((ncp, n), dtype=np.float32)
    gb = np.zeros((ncp, n), dtype=np.float32)
    m = np.zeros((ncp, n), dtype=np.float32)
    pooled_batch = np.zeros((ncp,), dtype=np.int64)
    valid = np.zeros((ncp,), dtype=bool)
    for c in range(num_clusters):
        members = np.flatnonzero(cluster == c)
        assert 1 <= members.size <= 2
        ga[c, members[0]] = 1.0
        gb[c, members[-1]] = 1.0
        m[c, members] = 1.0
        pooled_batch[c] = batch[members[0]]
        valid[c] = True
    ca = m @ adj @ m.T
    np.fill_diagonal(ca, 0.0)
    return ga, gb, ca.astype(np.float32), pooled_batch, valid


def _fold_bn(w0, w1, b_conv, mean, var, gamma, beta, eps=1e-5):
    # Fold BatchNorm(eval) and the ChebConv bias into separate W0'/W1' weights
    # (no concatenation -> no lane-dim relayout in the kernel).
    s = gamma / np.sqrt(var + eps)                       # (1, Cout)
    return ((w0 * s).astype(np.float32),
            (w1 * s).astype(np.float32),
            ((b_conv - mean) * s + beta).astype(np.float32))


# ------------------------------------ model ----------------------------------

def init_params(key, in_ch, hidden, out_ch):
    ks = jax.random.split(key, 14)

    def lin(k, fi, fo):
        return jax.random.normal(k, (fi, fo), jnp.float32) * (1.0 / np.sqrt(fi))

    def bn(k, c):
        k1, k2, k3, k4 = jax.random.split(k, 4)
        gamma = 1.0 + 0.1 * jax.random.normal(k1, (1, c), jnp.float32)
        beta = 0.1 * jax.random.normal(k2, (1, c), jnp.float32)
        mean = 0.1 * jax.random.normal(k3, (1, c), jnp.float32)
        var = 1.0 + 0.1 * jax.random.uniform(k4, (1, c), jnp.float32)
        return (mean, var, gamma, beta)

    return {
        "conv1": (lin(ks[0], in_ch, hidden), lin(ks[1], in_ch, hidden),
                  0.05 * jax.random.normal(ks[2], (1, hidden), jnp.float32)),
        "bn1": bn(ks[3], hidden),
        "conv2": (lin(ks[4], hidden, hidden * 2), lin(ks[5], hidden, hidden * 2),
                  0.05 * jax.random.normal(ks[6], (1, hidden * 2), jnp.float32)),
        "bn2": bn(ks[7], hidden * 2),
        "conv3": (lin(ks[8], hidden * 2, hidden * 2), lin(ks[9], hidden * 2, hidden * 2),
                  0.05 * jax.random.normal(ks[10], (1, hidden * 2), jnp.float32)),
        "bn3": bn(ks[11], hidden * 2),
        "fc": (lin(ks[12], hidden * 2, out_ch),
               0.05 * jax.random.normal(ks[13], (1, out_ch), jnp.float32)),
    }


def _shard_spec(arr):
    n_rest = arr.ndim - 1
    return pl.BlockSpec((None,) + tuple(arr.shape[1:]),
                        lambda s: (s,) + (0,) * n_rest,
                        memory_space=pltpu.MemorySpace.VMEM)


def _shared_spec(arr):
    nd = arr.ndim
    return pl.BlockSpec(tuple(arr.shape),
                        lambda s: (0,) * nd,
                        memory_space=pltpu.MemorySpace.VMEM)


def gcns_net_forward(adj, x, batch, params, num_shards=1):
    adj = np.asarray(adj, dtype=np.float32)
    x_np = np.asarray(x, dtype=np.float32)
    batch = np.asarray(batch)

    num_graphs = int(batch.max()) + 1
    assert np.all(np.diff(batch) >= 0), "batch must be sorted (PyG batching)"
    assert num_graphs % num_shards == 0, "num_shards must divide num_graphs"
    gps = num_graphs // num_shards                      # graphs per shard

    # ---- split graphs into block-diagonal shards (contiguous graph groups) ----
    shard_of_node = batch // gps
    node_counts = [int(np.sum(shard_of_node == s)) for s in range(num_shards)]
    assert len(set(node_counts)) == 1, "equal node count per shard required"
    Nn = node_counts[0]
    for s in range(num_shards):                          # no cross-shard edges
        rows = shard_of_node == s
        assert not np.any(adj[np.ix_(rows, ~rows)]), "cross-shard edges found"

    shards = []
    for s in range(num_shards):
        idx = np.flatnonzero(shard_of_node == s)
        shards.append({"adj": adj[np.ix_(idx, idx)],
                       "x": x_np[idx],
                       "batch": batch[idx] - s * gps})

    # ---- host precompute: per-shard graph operators ----
    match1 = [_greedy_matching(sh["adj"], sh["batch"]) for sh in shards]
    Np1 = _pad8(max(nc for _, nc in match1))
    lev1 = [_pool_level(sh["adj"], sh["batch"], c, nc, Np1)
            for sh, (c, nc) in zip(shards, match1)]

    match2 = [_greedy_matching(a1, b1, v1) for (_, _, a1, b1, v1) in lev1]
    Np2 = _pad8(max(nc for _, nc in match2))
    lev2 = [_pool_level(a1, b1, c, nc, Np2)
            for (_, _, a1, b1, v1), (c, nc) in zip(lev1, match2)]

    l0 = np.stack([_scaled_laplacian(sh["adj"]) for sh in shards])
    l1 = np.stack([_scaled_laplacian(a1) for (_, _, a1, _, _) in lev1])
    l2 = np.stack([_scaled_laplacian(a2) for (_, _, a2, _, _) in lev2])
    g1a = np.stack([g for (g, _, _, _, _) in lev1])
    g1b = np.stack([g for (_, g, _, _, _) in lev1])
    g2a = np.stack([g for (g, _, _, _, _) in lev2])
    g2b = np.stack([g for (_, g, _, _, _) in lev2])
    x_st = np.stack([sh["x"] for sh in shards])

    bmats = []
    for (_, _, _, batch2, valid2) in lev2:
        bmat = np.zeros((gps, Np2), dtype=np.float32)
        vi = np.flatnonzero(valid2)
        bmat[batch2[vi], vi] = 1.0
        counts = bmat.sum(axis=1, keepdims=True)
        assert np.all(counts > 0.0), "graph with no level-2 clusters"
        bmats.append(bmat / counts)                      # mean pool, counts folded
    bmat_st = np.stack(bmats)

    # ---- host precompute: fold BatchNorm(eval) + bias into W0'/W1' ----
    to_np = lambda t: np.asarray(t, dtype=np.float32)
    w10, w11, b1 = _fold_bn(*(to_np(p) for p in params["conv1"]),
                            *(to_np(p) for p in params["bn1"]))
    w20, w21, b2 = _fold_bn(*(to_np(p) for p in params["conv2"]),
                            *(to_np(p) for p in params["bn2"]))
    w30, w31, b3 = _fold_bn(*(to_np(p) for p in params["conv3"]),
                            *(to_np(p) for p in params["bn3"]))
    wf, bf = to_np(params["fc"][0]), to_np(params["fc"][1])

    bf16, f32 = jnp.bfloat16, jnp.float32
    args = (
        jnp.asarray(x_st, bf16),
        jnp.asarray(l0, bf16), jnp.asarray(l1, bf16), jnp.asarray(l2, bf16),
        jnp.asarray(g1a, bf16), jnp.asarray(g1b, bf16),
        jnp.asarray(g2a, bf16), jnp.asarray(g2b, bf16),
        jnp.asarray(bmat_st, bf16),
        jnp.asarray(w10, bf16), jnp.asarray(w11, bf16), jnp.asarray(b1, f32),
        jnp.asarray(w20, bf16), jnp.asarray(w21, bf16), jnp.asarray(b2, f32),
        jnp.asarray(w30, bf16), jnp.asarray(w31, bf16), jnp.asarray(b3, f32),
        jnp.asarray(wf, bf16), jnp.asarray(bf, f32),
    )
    in_specs = [_shard_spec(a) for a in args[:9]] + [_shared_spec(a) for a in args[9:]]

    in_ch, h1, h2, out_ch = x_np.shape[1], w10.shape[1], w30.shape[1], wf.shape[1]
    mm = lambda m, k, n: 2 * m * k * n
    flops_shard = (mm(Nn, Nn, in_ch) + 2 * mm(Nn, in_ch, h1)
                   + 2 * mm(Np1, Nn, h1)
                   + mm(Np1, Np1, h1) + 2 * mm(Np1, h1, h2)
                   + 2 * mm(Np2, Np1, h2)
                   + mm(Np2, Np2, h2) + 2 * mm(Np2, h2, h2)
                   + mm(gps, Np2, h2) + mm(gps, h2, out_ch))
    trans_shard = 2 * (Nn * h1 + Np1 * h2 + Np2 * h2) + 2 * gps * out_ch
    bytes_acc = sum(int(a.size) * a.dtype.itemsize for a in args) \
        + num_shards * gps * out_ch * 4

    # Everything stays VMEM-resident per shard; intermediates never hit HBM.
    # TODO(synk): for real PLV sizes (N in the thousands) tile the (N,N)
    # Laplacians with a reduction grid axis, size tiles against v7x's 64 MiB
    # VMEM (vmem_limit_bytes), and replace one-hot pooling with index gathers.
    out = pl.pallas_call(
        _fused_forward_kernel,
        out_shape=jax.ShapeDtypeStruct((num_shards, gps, out_ch), jnp.float32),
        grid_spec=pltpu.PrefetchScalarGridSpec(
            num_scalar_prefetch=0,
            grid=(num_shards,),
            in_specs=in_specs,
            out_specs=pl.BlockSpec((None, gps, out_ch), lambda s: (s, 0, 0),
                                   memory_space=pltpu.MemorySpace.VMEM),
        ),
        compiler_params=pltpu.CompilerParams(dimension_semantics=("parallel",)),
        cost_estimate=pl.CostEstimate(flops=num_shards * flops_shard,
                                      transcendentals=num_shards * trans_shard,
                                      bytes_accessed=bytes_acc),
    )(*args)
    return out.reshape(num_graphs, out_ch)


# ------------------------------------ main ------------------------------------

if __name__ == "__main__":
    key = jax.random.PRNGKey(0)
    kx, kw, kp = jax.random.split(key, 3)

    G, NPG = 8, 32                 # 8 graphs x 32 nodes
    NUM_SHARDS = 2                 # -> 2 shards of 128 nodes (parallel grid axis)
    N = G * NPG
    IN_CH, HID, OUT = 8, 16, 4

    # node features
    x = jax.random.normal(kx, (N, IN_CH), jnp.float32)

    # PLV-style graph: per-graph ring + chord edges, symmetric, weights in (0.1, 1)
    src, dst = [], []
    for g in range(G):
        base = g * NPG
        for i in range(NPG):
            for off in (1, 3):
                u, v = base + i, base + (i + off) % NPG
                src += [u, v]
                dst += [v, u]
    edge_index = np.stack([np.asarray(src), np.asarray(dst)])
    n_und = edge_index.shape[1] // 2
    w_und = np.asarray(jax.random.uniform(kw, (n_und,), jnp.float32,
                                          minval=0.1, maxval=1.0))
    edge_weight = np.repeat(w_und, 2)

    adj = np.zeros((N, N), dtype=np.float32)
    adj[edge_index[0], edge_index[1]] = edge_weight
    batch = np.repeat(np.arange(G), NPG)

    params = init_params(kp, IN_CH, HID, OUT)

    out = gcns_net_forward(adj, x, batch, params, num_shards=NUM_SHARDS)
    out = jax.block_until_ready(out)
    assert out.shape == (G, OUT)
    assert bool(jnp.all(jnp.isfinite(out)))
    print("KERNEL_OK")
</pallas_src>

<mosaic_0001>
module attributes {stable_mosaic.version = 11 : i64} {
  func.func @_fused_forward_kernel(%arg0: i32, %arg1: memref<1x128x8xbf16, #tpu.memory_space<vmem>>, %arg2: memref<1x128x128xbf16, #tpu.memory_space<vmem>>, %arg3: memref<1x64x64xbf16, #tpu.memory_space<vmem>>, %arg4: memref<1x40x40xbf16, #tpu.memory_space<vmem>>, %arg5: memref<1x64x128xbf16, #tpu.memory_space<vmem>>, %arg6: memref<1x64x128xbf16, #tpu.memory_space<vmem>>, %arg7: memref<1x40x64xbf16, #tpu.memory_space<vmem>>, %arg8: memref<1x40x64xbf16, #tpu.memory_space<vmem>>, %arg9: memref<1x4x40xbf16, #tpu.memory_space<vmem>>, %arg10: memref<8x16xbf16, #tpu.memory_space<vmem>>, %arg11: memref<8x16xbf16, #tpu.memory_space<vmem>>, %arg12: memref<1x16xf32, #tpu.memory_space<vmem>>, %arg13: memref<16x32xbf16, #tpu.memory_space<vmem>>, %arg14: memref<16x32xbf16, #tpu.memory_space<vmem>>, %arg15: memref<1x32xf32, #tpu.memory_space<vmem>>, %arg16: memref<32x32xbf16, #tpu.memory_space<vmem>>, %arg17: memref<32x32xbf16, #tpu.memory_space<vmem>>, %arg18: memref<1x32xf32, #tpu.memory_space<vmem>>, %arg19: memref<32x4xbf16, #tpu.memory_space<vmem>>, %arg20: memref<1x4xf32, #tpu.memory_space<vmem>>, %arg21: memref<1x4x4xf32, #tpu.memory_space<vmem>>) attributes {dimension_semantics = [#tpu.dimension_semantics<parallel>], iteration_bounds = array<i64: 2>, scalar_prefetch = 0 : i64, scratch_operands = 0 : i64, tpu.core_type = #tpu.core_type<tc>, window_params = [{transform_indices = @transform_0, window_bounds = array<i64: 1, 128, 8>}, {transform_indices = @transform_1, window_bounds = array<i64: 1, 128, 128>}, {transform_indices = @transform_2, window_bounds = array<i64: 1, 64, 64>}, {transform_indices = @transform_3, window_bounds = array<i64: 1, 40, 40>}, {transform_indices = @transform_4, window_bounds = array<i64: 1, 64, 128>}, {transform_indices = @transform_5, window_bounds = array<i64: 1, 64, 128>}, {transform_indices = @transform_6, window_bounds = array<i64: 1, 40, 64>}, {transform_indices = @transform_7, window_bounds = array<i64: 1, 40, 64>}, {transform_indices = @transform_8, window_bounds = array<i64: 1, 4, 40>}, {pipeline_mode = #tpu.pipeline_mode<synchronous>, transform_indices = @transform_9, window_bounds = array<i64: 8, 16>}, {pipeline_mode = #tpu.pipeline_mode<synchronous>, transform_indices = @transform_10, window_bounds = array<i64: 8, 16>}, {pipeline_mode = #tpu.pipeline_mode<synchronous>, transform_indices = @transform_11, window_bounds = array<i64: 1, 16>}, {pipeline_mode = #tpu.pipeline_mode<synchronous>, transform_indices = @transform_12, window_bounds = array<i64: 16, 32>}, {pipeline_mode = #tpu.pipeline_mode<synchronous>, transform_indices = @transform_13, window_bounds = array<i64: 16, 32>}, {pipeline_mode = #tpu.pipeline_mode<synchronous>, transform_indices = @transform_14, window_bounds = array<i64: 1, 32>}, {pipeline_mode = #tpu.pipeline_mode<synchronous>, transform_indices = @transform_15, window_bounds = array<i64: 32, 32>}, {pipeline_mode = #tpu.pipeline_mode<synchronous>, transform_indices = @transform_16, window_bounds = array<i64: 32, 32>}, {pipeline_mode = #tpu.pipeline_mode<synchronous>, transform_indices = @transform_17, window_bounds = array<i64: 1, 32>}, {pipeline_mode = #tpu.pipeline_mode<synchronous>, transform_indices = @transform_18, window_bounds = array<i64: 32, 4>}, {pipeline_mode = #tpu.pipeline_mode<synchronous>, transform_indices = @transform_19, window_bounds = array<i64: 1, 4>}, {transform_indices = @transform_20, window_bounds = array<i64: 1, 4, 4>}]} {
    %c0 = arith.constant 0 : index
    %c0_0 = arith.constant 0 : index
    %c0_1 = arith.constant 0 : index
    %0 = vector.load %arg2[%c0, %c0_0, %c0_1] : memref<1x128x128xbf16, #tpu.memory_space<vmem>>, vector<1x128x128xbf16>
    %1 = vector.shape_cast %0 : vector<1x128x128xbf16> to vector<128x128xbf16>
    %c0_2 = arith.constant 0 : index
    %c0_3 = arith.constant 0 : index
    %c0_4 = arith.constant 0 : index
    %2 = vector.load %arg1[%c0_2, %c0_3, %c0_4] : memref<1x128x8xbf16, #tpu.memory_space<vmem>>, vector<1x128x8xbf16>
    %3 = vector.shape_cast %2 : vector<1x128x8xbf16> to vector<128x8xbf16>
    %c0_5 = arith.constant 0 : index
    %c0_6 = arith.constant 0 : index
    %4 = vector.load %arg10[%c0_5, %c0_6] : memref<8x16xbf16, #tpu.memory_space<vmem>>, vector<8x16xbf16>
    %c0_7 = arith.constant 0 : index
    %c0_8 = arith.constant 0 : index
    %5 = vector.load %arg11[%c0_7, %c0_8] : memref<8x16xbf16, #tpu.memory_space<vmem>>, vector<8x16xbf16>
    %c0_9 = arith.constant 0 : index
    %c0_10 = arith.constant 0 : index
    %6 = vector.load %arg12[%c0_9, %c0_10] : memref<1x16xf32, #tpu.memory_space<vmem>>, vector<1x16xf32>
    %cst = arith.constant dense<0.000000e+00> : vector<128x8xf32>
    %7 = tpu.matmul %1, %3, %cst {dimension_numbers = #tpu.dot_dimension_numbers<[1], [0], [0], [1], [0, 0, 1, 1], [], []>} : vector<128x128xbf16>, vector<128x8xbf16>, vector<128x8xf32> -> vector<128x8xf32>
    %cst_11 = arith.constant dense<0.000000e+00> : vector<128x16xf32>
    %8 = tpu.matmul %3, %4, %cst_11 {dimension_numbers = #tpu.dot_dimension_numbers<[1], [0], [0], [1], [0, 0, 1, 1], [], []>} : vector<128x8xbf16>, vector<8x16xbf16>, vector<128x16xf32> -> vector<128x16xf32>
    %9 = arith.truncf %7 : vector<128x8xf32> to vector<128x8xbf16>
    %cst_12 = arith.constant dense<0.000000e+00> : vector<128x16xf32>
    %10 = tpu.matmul %9, %5, %cst_12 {dimension_numbers = #tpu.dot_dimension_numbers<[1], [0], [0], [1], [0, 0, 1, 1], [], []>} : vector<128x8xbf16>, vector<8x16xbf16>, vector<128x16xf32> -> vector<128x16xf32>
    %11 = arith.addf %8, %10 : vector<128x16xf32>
    %12 = vector.broadcast %6 : vector<1x16xf32> to vector<128x16xf32>
    %13 = arith.addf %11, %12 : vector<128x16xf32>
    %cst_13 = arith.constant 0.000000e+00 : f32
    %14 = vector.broadcast %cst_13 : f32 to vector<128x16xf32>
    %15 = arith.maximumf %13, %14 : vector<128x16xf32>
    %16 = math.absf %13 : vector<128x16xf32>
    %cst_14 = arith.constant 0.000000e+00 : f32
    %17 = vector.broadcast %cst_14 : f32 to vector<128x16xf32>
    %18 = arith.subf %17, %16 : vector<128x16xf32>
    %19 = math.exp %18 : vector<128x16xf32>
    %cst_15 = arith.constant 1.000000e+00 : f32
    %20 = vector.broadcast %cst_15 : f32 to vector<128x16xf32>
    %21 = arith.addf %20, %19 : vector<128x16xf32>
    %22 = math.log %21 : vector<128x16xf32>
    %23 = arith.addf %15, %22 : vector<128x16xf32>
    %c0_16 = arith.constant 0 : index
    %c0_17 = arith.constant 0 : index
    %c0_18 = arith.constant 0 : index
    %24 = vector.load %arg5[%c0_16, %c0_17, %c0_18] : memref<1x64x128xbf16, #tpu.memory_space<vmem>>, vector<1x64x128xbf16>
    %25 = vector.shape_cast %24 : vector<1x64x128xbf16> to vector<64x128xbf16>
    %c0_19 = arith.constant 0 : index
    %c0_20 = arith.constant 0 : index
    %c0_21 = arith.constant 0 : index
    %26 = vector.load %arg6[%c0_19, %c0_20, %c0_21] : memref<1x64x128xbf16, #tpu.memory_space<vmem>>, vector<1x64x128xbf16>
    %27 = vector.shape_cast %26 : vector<1x64x128xbf16> to vector<64x128xbf16>
    %28 = arith.truncf %23 : vector<128x16xf32> to vector<128x16xbf16>
    %cst_22 = arith.constant dense<0.000000e+00> : vector<64x16xf32>
    %29 = tpu.matmul %25, %28, %cst_22 {dimension_numbers = #tpu.dot_dimension_numbers<[1], [0], [0], [1], [0, 0, 1, 1], [], []>} : vector<64x128xbf16>, vector<128x16xbf16>, vector<64x16xf32> -> vector<64x16xf32>
    %cst_23 = arith.constant dense<0.000000e+00> : vector<64x16xf32>
    %30 = tpu.matmul %27, %28, %cst_23 {dimension_numbers = #tpu.dot_dimension_numbers<[1], [0], [0], [1], [0, 0, 1, 1], [], []>} : vector<64x128xbf16>, vector<128x16xbf16>, vector<64x16xf32> -> vector<64x16xf32>
    %31 = arith.maximumf %29, %30 : vector<64x16xf32>
    %c0_24 = arith.constant 0 : index
    %c0_25 = arith.constant 0 : index
    %c0_26 = arith.constant 0 : index
    %32 = vector.load %arg3[%c0_24, %c0_25, %c0_26] : memref<1x64x64xbf16, #tpu.memory_space<vmem>>, vector<1x64x64xbf16>
    %33 = vector.shape_cast %32 : vector<1x64x64xbf16> to vector<64x64xbf16>
    %34 = arith.truncf %31 : vector<64x16xf32> to vector<64x16xbf16>
    %c0_27 = arith.constant 0 : index
    %c0_28 = arith.constant 0 : index
    %35 = vector.load %arg13[%c0_27, %c0_28] : memref<16x32xbf16, #tpu.memory_space<vmem>>, vector<16x32xbf16>
    %c0_29 = arith.constant 0 : index
    %c0_30 = arith.constant 0 : index
    %36 = vector.load %arg14[%c0_29, %c0_30] : memref<16x32xbf16, #tpu.memory_space<vmem>>, vector<16x32xbf16>
    %c0_31 = arith.constant 0 : index
    %c0_32 = arith.constant 0 : index
    %37 = vector.load %arg15[%c0_31, %c0_32] : memref<1x32xf32, #tpu.memory_space<vmem>>, vector<1x32xf32>
    %cst_33 = arith.constant dense<0.000000e+00> : vector<64x16xf32>
    %38 = tpu.matmul %33, %34, %cst_33 {dimension_numbers = #tpu.dot_dimension_numbers<[1], [0], [0], [1], [0, 0, 1, 1], [], []>} : vector<64x64xbf16>, vector<64x16xbf16>, vector<64x16xf32> -> vector<64x16xf32>
    %cst_34 = arith.constant dense<0.000000e+00> : vector<64x32xf32>
    %39 = tpu.matmul %34, %35, %cst_34 {dimension_numbers = #tpu.dot_dimension_numbers<[1], [0], [0], [1], [0, 0, 1, 1], [], []>} : vector<64x16xbf16>, vector<16x32xbf16>, vector<64x32xf32> -> vector<64x32xf32>
    %40 = arith.truncf %38 : vector<64x16xf32> to vector<64x16xbf16>
    %cst_35 = arith.constant dense<0.000000e+00> : vector<64x32xf32>
    %41 = tpu.matmul %40, %36, %cst_35 {dimension_numbers = #tpu.dot_dimension_numbers<[1], [0], [0], [1], [0, 0, 1, 1], [], []>} : vector<64x16xbf16>, vector<16x32xbf16>, vector<64x32xf32> -> vector<64x32xf32>
    %42 = arith.addf %39, %41 : vector<64x32xf32>
    %43 = vector.broadcast %37 : vector<1x32xf32> to vector<64x32xf32>
    %44 = arith.addf %42, %43 : vector<64x32xf32>
    %cst_36 = arith.constant 0.000000e+00 : f32
    %45 = vector.broadcast %cst_36 : f32 to vector<64x32xf32>
    %46 = arith.maximumf %44, %45 : vector<64x32xf32>
    %47 = math.absf %44 : vector<64x32xf32>
    %cst_37 = arith.constant 0.000000e+00 : f32
    %48 = vector.broadcast %cst_37 : f32 to vector<64x32xf32>
    %49 = arith.subf %48, %47 : vector<64x32xf32>
    %50 = math.exp %49 : vector<64x32xf32>
    %cst_38 = arith.constant 1.000000e+00 : f32
    %51 = vector.broadcast %cst_38 : f32 to vector<64x32xf32>
    %52 = arith.addf %51, %50 : vector<64x32xf32>
    %53 = math.log %52 : vector<64x32xf32>
    %54 = arith.addf %46, %53 : vector<64x32xf32>
    %c0_39 = arith.constant 0 : index
    %c0_40 = arith.constant 0 : index
    %c0_41 = arith.constant 0 : index
    %55 = vector.load %arg7[%c0_39, %c0_40, %c0_41] : memref<1x40x64xbf16, #tpu.memory_space<vmem>>, vector<1x40x64xbf16>
    %56 = vector.shape_cast %55 : vector<1x40x64xbf16> to vector<40x64xbf16>
    %c0_42 = arith.constant 0 : index
    %c0_43 = arith.constant 0 : index
    %c0_44 = arith.constant 0 : index
    %57 = vector.load %arg8[%c0_42, %c0_43, %c0_44] : memref<1x40x64xbf16, #tpu.memory_space<vmem>>, vector<1x40x64xbf16>
    %58 = vector.shape_cast %57 : vector<1x40x64xbf16> to vector<40x64xbf16>
    %59 = arith.truncf %54 : vector<64x32xf32> to vector<64x32xbf16>
    %cst_45 = arith.constant dense<0.000000e+00> : vector<40x32xf32>
    %60 = tpu.matmul %56, %59, %cst_45 {dimension_numbers = #tpu.dot_dimension_numbers<[1], [0], [0], [1], [0, 0, 1, 1], [], []>} : vector<40x64xbf16>, vector<64x32xbf16>, vector<40x32xf32> -> vector<40x32xf32>
    %cst_46 = arith.constant dense<0.000000e+00> : vector<40x32xf32>
    %61 = tpu.matmul %58, %59, %cst_46 {dimension_numbers = #tpu.dot_dimension_numbers<[1], [0], [0], [1], [0, 0, 1, 1], [], []>} : vector<40x64xbf16>, vector<64x32xbf16>, vector<40x32xf32> -> vector<40x32xf32>
    %62 = arith.maximumf %60, %61 : vector<40x32xf32>
    %c0_47 = arith.constant 0 : index
    %c0_48 = arith.constant 0 : index
    %c0_49 = arith.constant 0 : index
    %63 = vector.load %arg4[%c0_47, %c0_48, %c0_49] : memref<1x40x40xbf16, #tpu.memory_space<vmem>>, vector<1x40x40xbf16>
    %64 = vector.shape_cast %63 : vector<1x40x40xbf16> to vector<40x40xbf16>
    %65 = arith.truncf %62 : vector<40x32xf32> to vector<40x32xbf16>
    %c0_50 = arith.constant 0 : index
    %c0_51 = arith.constant 0 : index
    %66 = vector.load %arg16[%c0_50, %c0_51] : memref<32x32xbf16, #tpu.memory_space<vmem>>, vector<32x32xbf16>
    %c0_52 = arith.constant 0 : index
    %c0_53 = arith.constant 0 : index
    %67 = vector.load %arg17[%c0_52, %c0_53] : memref<32x32xbf16, #tpu.memory_space<vmem>>, vector<32x32xbf16>
    %c0_54 = arith.constant 0 : index
    %c0_55 = arith.constant 0 : index
    %68 = vector.load %arg18[%c0_54, %c0_55] : memref<1x32xf32, #tpu.memory_space<vmem>>, vector<1x32xf32>
    %cst_56 = arith.constant dense<0.000000e+00> : vector<40x32xf32>
    %69 = tpu.matmul %64, %65, %cst_56 {dimension_numbers = #tpu.dot_dimension_numbers<[1], [0], [0], [1], [0, 0, 1, 1], [], []>} : vector<40x40xbf16>, vector<40x32xbf16>, vector<40x32xf32> -> vector<40x32xf32>
    %cst_57 = arith.constant dense<0.000000e+00> : vector<40x32xf32>
    %70 = tpu.matmul %65, %66, %cst_57 {dimension_numbers = #tpu.dot_dimension_numbers<[1], [0], [0], [1], [0, 0, 1, 1], [], []>} : vector<40x32xbf16>, vector<32x32xbf16>, vector<40x32xf32> -> vector<40x32xf32>
    %71 = arith.truncf %69 : vector<40x32xf32> to vector<40x32xbf16>
    %cst_58 = arith.constant dense<0.000000e+00> : vector<40x32xf32>
    %72 = tpu.matmul %71, %67, %cst_58 {dimension_numbers = #tpu.dot_dimension_numbers<[1], [0], [0], [1], [0, 0, 1, 1], [], []>} : vector<40x32xbf16>, vector<32x32xbf16>, vector<40x32xf32> -> vector<40x32xf32>
    %73 = arith.addf %70, %72 : vector<40x32xf32>
    %74 = vector.broadcast %68 : vector<1x32xf32> to vector<40x32xf32>
    %75 = arith.addf %73, %74 : vector<40x32xf32>
    %cst_59 = arith.constant 0.000000e+00 : f32
    %76 = vector.broadcast %cst_59 : f32 to vector<40x32xf32>
    %77 = arith.maximumf %75, %76 : vector<40x32xf32>
    %78 = math.absf %75 : vector<40x32xf32>
    %cst_60 = arith.constant 0.000000e+00 : f32
    %79 = vector.broadcast %cst_60 : f32 to vector<40x32xf32>
    %80 = arith.subf %79, %78 : vector<40x32xf32>
    %81 = math.exp %80 : vector<40x32xf32>
    %cst_61 = arith.constant 1.000000e+00 : f32
    %82 = vector.broadcast %cst_61 : f32 to vector<40x32xf32>
    %83 = arith.addf %82, %81 : vector<40x32xf32>
    %84 = math.log %83 : vector<40x32xf32>
    %85 = arith.addf %77, %84 : vector<40x32xf32>
    %c0_62 = arith.constant 0 : index
    %c0_63 = arith.constant 0 : index
    %c0_64 = arith.constant 0 : index
    %86 = vector.load %arg9[%c0_62, %c0_63, %c0_64] : memref<1x4x40xbf16, #tpu.memory_space<vmem>>, vector<1x4x40xbf16>
    %87 = vector.shape_cast %86 : vector<1x4x40xbf16> to vector<4x40xbf16>
    %88 = arith.truncf %85 : vector<40x32xf32> to vector<40x32xbf16>
    %cst_65 = arith.constant dense<0.000000e+00> : vector<4x32xf32>
    %89 = tpu.matmul %87, %88, %cst_65 {dimension_numbers = #tpu.dot_dimension_numbers<[1], [0], [0], [1], [0, 0, 1, 1], [], []>} : vector<4x40xbf16>, vector<40x32xbf16>, vector<4x32xf32> -> vector<4x32xf32>
    %90 = arith.truncf %89 : vector<4x32xf32> to vector<4x32xbf16>
    %c0_66 = arith.constant 0 : index
    %c0_67 = arith.constant 0 : index
    %91 = vector.load %arg19[%c0_66, %c0_67] : memref<32x4xbf16, #tpu.memory_space<vmem>>, vector<32x4xbf16>
    %cst_68 = arith.constant dense<0.000000e+00> : vector<4x4xf32>
    %92 = tpu.matmul %90, %91, %cst_68 {dimension_numbers = #tpu.dot_dimension_numbers<[1], [0], [0], [1], [0, 0, 1, 1], [], []>} : vector<4x32xbf16>, vector<32x4xbf16>, vector<4x4xf32> -> vector<4x4xf32>
    %c0_69 = arith.constant 0 : index
    %c0_70 = arith.constant 0 : index
    %93 = vector.load %arg20[%c0_69, %c0_70] : memref<1x4xf32, #tpu.memory_space<vmem>>, vector<1x4xf32>
    %94 = vector.broadcast %93 : vector<1x4xf32> to vector<4x4xf32>
    %95 = arith.addf %92, %94 : vector<4x4xf32>
    %cst_71 = arith.constant dense<0xFF800000> : vector<4xf32>
    %96 = vector.multi_reduction <maximumf>, %95, %cst_71 [1] : vector<4x4xf32> to vector<4xf32>
    %97 = vector.shape_cast %96 : vector<4xf32> to vector<4x1xf32>
    %98 = vector.broadcast %97 : vector<4x1xf32> to vector<4x4xf32>
    %99 = arith.subf %95, %98 : vector<4x4xf32>
    %100 = math.exp %99 : vector<4x4xf32>
    %cst_72 = arith.constant dense<0.000000e+00> : vector<4xf32>
    %101 = vector.multi_reduction <add>, %100, %cst_72 [1] : vector<4x4xf32> to vector<4xf32>
    %102 = vector.shape_cast %101 : vector<4xf32> to vector<4x1xf32>
    %103 = math.log %102 : vector<4x1xf32>
    %104 = vector.broadcast %103 : vector<4x1xf32> to vector<4x4xf32>
    %105 = arith.subf %99, %104 : vector<4x4xf32>
    %c0_73 = arith.constant 0 : index
    %c0_74 = arith.constant 0 : index
    %c0_75 = arith.constant 0 : index
    %106 = vector.load %arg21[%c0_73, %c0_74, %c0_75] : memref<1x4x4xf32, #tpu.memory_space<vmem>>, vector<1x4x4xf32>
    %107 = vector.shape_cast %106 : vector<1x4x4xf32> to vector<4x4xf32>
    %108 = vector.shape_cast %105 : vector<4x4xf32> to vector<1x4x4xf32>
    tpu.vector_store %arg21[%c0_73, %c0_74, %c0_75], %108 {strides = array<i32>} : memref<1x4x4xf32, #tpu.memory_space<vmem>>, vector<1x4x4xf32>,
    return
  }
  func.func @transform_0(%arg0: i32) -> (i32, i32, i32) {
    %c0_i32 = arith.constant 0 : i32
    %c0_i32_0 = arith.constant 0 : i32
    %c0_i32_1 = arith.constant 0 : i32
    return %arg0, %c0_i32, %c0_i32_0 : i32, i32, i32
  }
  func.func @transform_1(%arg0: i32) -> (i32, i32, i32) {
    %c0_i32 = arith.constant 0 : i32
    %c0_i32_0 = arith.constant 0 : i32
    %c0_i32_1 = arith.constant 0 : i32
    return %arg0, %c0_i32, %c0_i32_0 : i32, i32, i32
  }
  func.func @transform_2(%arg0: i32) -> (i32, i32, i32) {
    %c0_i32 = arith.constant 0 : i32
    %c0_i32_0 = arith.constant 0 : i32
    %c0_i32_1 = arith.constant 0 : i32
    return %arg0, %c0_i32, %c0_i32_0 : i32, i32, i32
  }
  func.func @transform_3(%arg0: i32) -> (i32, i32, i32) {
    %c0_i32 = arith.constant 0 : i32
    %c0_i32_0 = arith.constant 0 : i32
    %c0_i32_1 = arith.constant 0 : i32
    return %arg0, %c0_i32, %c0_i32_0 : i32, i32, i32
  }
  func.func @transform_4(%arg0: i32) -> (i32, i32, i32) {
    %c0_i32 = arith.constant 0 : i32
    %c0_i32_0 = arith.constant 0 : i32
    %c0_i32_1 = arith.constant 0 : i32
    return %arg0, %c0_i32, %c0_i32_0 : i32, i32, i32
  }
  func.func @transform_5(%arg0: i32) -> (i32, i32, i32) {
    %c0_i32 = arith.constant 0 : i32
    %c0_i32_0 = arith.constant 0 : i32
    %c0_i32_1 = arith.constant 0 : i32
    return %arg0, %c0_i32, %c0_i32_0 : i32, i32, i32
  }
  func.func @transform_6(%arg0: i32) -> (i32, i32, i32) {
    %c0_i32 = arith.constant 0 : i32
    %c0_i32_0 = arith.constant 0 : i32
    %c0_i32_1 = arith.constant 0 : i32
    return %arg0, %c0_i32, %c0_i32_0 : i32, i32, i32
  }
  func.func @transform_7(%arg0: i32) -> (i32, i32, i32) {
    %c0_i32 = arith.constant 0 : i32
    %c0_i32_0 = arith.constant 0 : i32
    %c0_i32_1 = arith.constant 0 : i32
    return %arg0, %c0_i32, %c0_i32_0 : i32, i32, i32
  }
  func.func @transform_8(%arg0: i32) -> (i32, i32, i32) {
    %c0_i32 = arith.constant 0 : i32
    %c0_i32_0 = arith.constant 0 : i32
    %c0_i32_1 = arith.constant 0 : i32
    return %arg0, %c0_i32, %c0_i32_0 : i32, i32, i32
  }
  func.func @transform_9(%arg0: i32) -> (i32, i32) {
    %c0_i32 = arith.constant 0 : i32
    %c0_i32_0 = arith.constant 0 : i32
    %c0_i32_1 = arith.constant 0 : i32
    return %c0_i32, %c0_i32_0 : i32, i32
  }
  func.func @transform_10(%arg0: i32) -> (i32, i32) {
    %c0_i32 = arith.constant 0 : i32
    %c0_i32_0 = arith.constant 0 : i32
    %c0_i32_1 = arith.constant 0 : i32
    return %c0_i32, %c0_i32_0 : i32, i32
  }
  func.func @transform_11(%arg0: i32) -> (i32, i32) {
    %c0_i32 = arith.constant 0 : i32
    %c0_i32_0 = arith.constant 0 : i32
    %c0_i32_1 = arith.constant 0 : i32
    return %c0_i32, %c0_i32_0 : i32, i32
  }
  func.func @transform_12(%arg0: i32) -> (i32, i32) {
    %c0_i32 = arith.constant 0 : i32
    %c0_i32_0 = arith.constant 0 : i32
    %c0_i32_1 = arith.constant 0 : i32
    return %c0_i32, %c0_i32_0 : i32, i32
  }
  func.func @transform_13(%arg0: i32) -> (i32, i32) {
    %c0_i32 = arith.constant 0 : i32
    %c0_i32_0 = arith.constant 0 : i32
    %c0_i32_1 = arith.constant 0 : i32
    return %c0_i32, %c0_i32_0 : i32, i32
  }
  func.func @transform_14(%arg0: i32) -> (i32, i32) {
    %c0_i32 = arith.constant 0 : i32
    %c0_i32_0 = arith.constant 0 : i32
    %c0_i32_1 = arith.constant 0 : i32
    return %c0_i32, %c0_i32_0 : i32, i32
  }
  func.func @transform_15(%arg0: i32) -> (i32, i32) {
    %c0_i32 = arith.constant 0 : i32
    %c0_i32_0 = arith.constant 0 : i32
    %c0_i32_1 = arith.constant 0 : i32
    return %c0_i32, %c0_i32_0 : i32, i32
  }
  func.func @transform_16(%arg0: i32) -> (i32, i32) {
    %c0_i32 = arith.constant 0 : i32
    %c0_i32_0 = arith.constant 0 : i32
    %c0_i32_1 = arith.constant 0 : i32
    return %c0_i32, %c0_i32_0 : i32, i32
  }
  func.func @transform_17(%arg0: i32) -> (i32, i32) {
    %c0_i32 = arith.constant 0 : i32
    %c0_i32_0 = arith.constant 0 : i32
    %c0_i32_1 = arith.constant 0 : i32
    return %c0_i32, %c0_i32_0 : i32, i32
  }
  func.func @transform_18(%arg0: i32) -> (i32, i32) {
    %c0_i32 = arith.constant 0 : i32
    %c0_i32_0 = arith.constant 0 : i32
    %c0_i32_1 = arith.constant 0 : i32
    return %c0_i32, %c0_i32_0 : i32, i32
  }
  func.func @transform_19(%arg0: i32) -> (i32, i32) {
    %c0_i32 = arith.constant 0 : i32
    %c0_i32_0 = arith.constant 0 : i32
    %c0_i32_1 = arith.constant 0 : i32
    return %c0_i32, %c0_i32_0 : i32, i32
  }
  func.func @transform_20(%arg0: i32) -> (i32, i32, i32) {
    %c0_i32 = arith.constant 0 : i32
    %c0_i32_0 = arith.constant 0 : i32
    %c0_i32_1 = arith.constant 0 : i32
    return %arg0, %c0_i32, %c0_i32_0 : i32, i32, i32
  }
}

</mosaic_0001>

<llo_original>
// kernel: tpu_custom_call.1
$region0: #{tpu_custom_call.1}
  #allocation0 [shape = 'u32[]', space=smem, size = 0x4, offset = 0x4, fixed_abs, tag = 'smem constant byte address 0x4 - core index']
  #allocation1 [shape = 'u32[144,128]{1,0:T(1,128)}', space=vmem, size = 0x12000, scoped, tag = 'internal scratch']
  %s0 = inlined_call_operand.vmem [shape: bf16[2,128,8], index: 0, kind: input, shape index: {}]
  %s1 = inlined_call_operand.vmem [shape: bf16[2,128,128], index: 1, kind: input, shape index: {}]
  %s2 = inlined_call_operand.hbm [shape: bf16[2,64,64], index: 2, kind: input, shape index: {}]
  %s3 = inlined_call_operand.hbm [shape: bf16[2,40,40], index: 3, kind: input, shape index: {}]
  %s4 = inlined_call_operand.hbm [shape: bf16[2,64,128], index: 4, kind: input, shape index: {}]
  %s5 = inlined_call_operand.hbm [shape: bf16[2,64,128], index: 5, kind: input, shape index: {}]
  %s6 = inlined_call_operand.hbm [shape: bf16[2,40,64], index: 6, kind: input, shape index: {}]
  %s7 = inlined_call_operand.hbm [shape: bf16[2,40,64], index: 7, kind: input, shape index: {}]
  %s8 = inlined_call_operand.hbm [shape: bf16[2,4,40], index: 8, kind: input, shape index: {}]
  %s9 = inlined_call_operand.hbm [shape: bf16[8,16], index: 9, kind: input, shape index: {}]
  %s10 = inlined_call_operand.hbm [shape: bf16[8,16], index: 10, kind: input, shape index: {}]
  %s11 = inlined_call_operand.vmem [shape: f32[1,16], index: 11, kind: input, shape index: {}]
  %s12 = inlined_call_operand.vmem [shape: bf16[16,32], index: 12, kind: input, shape index: {}]
  %s13 = inlined_call_operand.vmem [shape: bf16[16,32], index: 13, kind: input, shape index: {}]
  %s14 = inlined_call_operand.hbm [shape: f32[1,32], index: 14, kind: input, shape index: {}]
  %s15 = inlined_call_operand.vmem [shape: bf16[32,32], index: 15, kind: input, shape index: {}]
  %s16 = inlined_call_operand.vmem [shape: bf16[32,32], index: 16, kind: input, shape index: {}]
  %s17 = inlined_call_operand.vmem [shape: f32[1,32], index: 17, kind: input, shape index: {}]
  %s18 = inlined_call_operand.vmem [shape: bf16[32,4], index: 18, kind: input, shape index: {}]
  %s19 = inlined_call_operand.vmem [shape: f32[1,4], index: 19, kind: input, shape index: {}]
  %s20 = inlined_call_operand.hbm [shape: f32[2,4,4], index: 20, kind: output, shape index: {}]
  %s21 = sld [smem:[#allocation0]]
  $region153: #{tpu_custom_call.1} parent=0
    _
  %s23 = ssub.s32 1, %s21
  %s24 = scalar_select 0, %s23, %s21
  $region1: #{tpu_custom_call.1} parent=0
    #allocation2 [shape = 'u8[32768]{0}', space=vmem, size = 0x8000, scoped, tag = 'input window, operand 2']
    #allocation3 [shape = 's32[2]{0}', space=sflag, size = 0x8, scoped, tag = 'scoped memory for tpu_custom_call.1']
    #allocation4 [shape = 's32[2]{0}', space=sflag, size = 0x8, scoped, tag = 'scoped memory for tpu_custom_call.1']
    #allocation5 [shape = 'u8[20480]{0}', space=vmem, size = 0x5000, scoped, tag = 'input window, operand 3']
    #allocation6 [shape = 's32[2]{0}', space=sflag, size = 0x8, scoped, tag = 'scoped memory for tpu_custom_call.1']
    #allocation7 [shape = 'u8[32768]{0}', space=vmem, size = 0x8000, scoped, tag = 'input window, operand 4']
    #allocation8 [shape = 'u8[32768]{0}', space=vmem, size = 0x8000, scoped, tag = 'input window, operand 5']
    #allocation9 [shape = 's32[2]{0}', space=sflag, size = 0x8, scoped, tag = 'scoped memory for tpu_custom_call.1']
    #allocation10 [shape = 'u8[20480]{0}', space=vmem, size = 0x5000, scoped, tag = 'input window, operand 6']
    #allocation11 [shape = 'u8[20480]{0}', space=vmem, size = 0x5000, scoped, tag = 'input window, operand 7']
    #allocation12 [shape = 's32[2]{0}', space=sflag, size = 0x8, scoped, tag = 'scoped memory for tpu_custom_call.1']
    #allocation13 [shape = 'u8[2048]{0}', space=vmem, size = 0x800, scoped, tag = 'input window, operand 8']
    #allocation14 [shape = 'u8[2048]{0}', space=vmem, size = 0x800, scoped, tag = 'input window, operand 9, single buffered']
    #allocation15 [shape = 's32[1]{0}', space=sflag, size = 0x4, scoped, tag = 'scoped memory for tpu_custom_call.1']
    #allocation16 [shape = 'u8[2048]{0}', space=vmem, size = 0x800, scoped, tag = 'input window, operand 10, single buffered']
    #allocation17 [shape = 'u8[512]{0}', space=vmem, size = 0x400, scoped, tag = 'input window, operand 14, single buffered']
    #allocation18 [shape = 's32[1]{0}', space=sflag, size = 0x4, scoped, tag = 'scoped memory for tpu_custom_call.1']
    #allocation19 [shape = 'u8[4096]{0}', space=vmem, size = 0x1000, scoped, tag = 'output window, operand 0']
    %25 = vsyncpa [#allocation3], 0
    %s26 = scalar_lea.sflag [#allocation3], 1
    %27 = vsyncpa %s26, 0
    %28 = vsyncpa [#allocation6], 0
    %s29 = scalar_lea.sflag [#allocation6], 1
    %30 = vsyncpa %s29, 0
    %31 = vsyncpa [#allocation9], 0
    %s32 = scalar_lea.sflag [#allocation9], 1
    %33 = vsyncpa %s32, 0
    %34 = vsyncpa [#allocation12], 0
    %s35 = scalar_lea.sflag [#allocation12], 1
    %36 = vsyncpa %s35, 0
    %37 = vsyncpa [#allocation15], 0
    %38 = vsyncpa [#allocation18], 0
    %39 = vsyncpa [#allocation4], 0
    %s40 = scalar_lea.sflag [#allocation4], 1
    %41 = vsyncpa %s40, 0
    loop: start=0, step=1, limit=4
    $region2: #{tpu_custom_call.1} parent=1 // loop_pre_header
      _
    $region3: #{tpu_custom_call.1} parent=1 // loop_header
      %s43 = sphi 0, %s47
      %p44 = scmp.ge.s32.totalorder %s43, 4
      %s53 = sphi 0, %s55
      %s56 = sphi 0, %s53
      %s57 = sphi 0, %s56
      %s73 = sphi 0, %s57
      %s79 = sphi 0, %s81
      %s82 = sphi 0, %s79
      %s83 = sphi 0, %s82
      %s99 = sphi 0, %s83
      %s105 = sphi 0, %s107
      %s108 = sphi 0, %s105
      %s109 = sphi 0, %s108
      %s125 = sphi 0, %s109
      %s131 = sphi 0, %s133
      %s134 = sphi 0, %s131
      %s135 = sphi 0, %s134
      %s151 = sphi 0, %s135
      %s157 = sphi 0, %s159
      %s160 = sphi 0, %s157
      %s161 = sphi 0, %s160
      %s177 = sphi 0, %s161
      %s183 = sphi 0, %s185
      %s186 = sphi 0, %s183
      %s187 = sphi 0, %s186
      %s203 = sphi 0, %s187
      %s209 = sphi 0, %s211
      %s212 = sphi 0, %s209
      %s213 = sphi 0, %s212
      %s229 = sphi 0, %s213
      %s235 = sphi 0, %s237
      %s238 = sphi 0, %s235
      %s239 = sphi 0, %s238
      %s255 = sphi 0, %s239
      %s261 = sphi 0, %s263
      %s264 = sphi 0, %s261
      %s265 = sphi 0, %s264
      %s281 = sphi 0, %s265
      %s285 = sphi 0, %s285
      %s287 = sphi 0, %s285
      %s288 = sphi 0, %s287
      %s302 = sphi 0, %s288
      %s306 = sphi 0, %s306
      %s308 = sphi 0, %s306
      %s309 = sphi 0, %s308
      %s323 = sphi 0, %s309
      %s327 = sphi 0, %s327
      %s329 = sphi 0, %s327
      %s330 = sphi 0, %s329
      %s344 = sphi 0, %s330
      %s348 = sphi 0, %s348
      %s350 = sphi 0, %s348
      %s351 = sphi 0, %s350
      %s365 = sphi 0, %s351
      %s369 = sphi 0, %s369
      %s371 = sphi 0, %s369
      %s372 = sphi 0, %s371
      %s386 = sphi 0, %s372
      %s390 = sphi 0, %s390
      %s392 = sphi 0, %s390
      %s393 = sphi 0, %s392
      %s407 = sphi 0, %s393
      %s411 = sphi 0, %s411
      %s413 = sphi 0, %s411
      %s414 = sphi 0, %s413
      %s428 = sphi 0, %s414
      %s432 = sphi 0, %s432
      %s434 = sphi 0, %s432
      %s435 = sphi 0, %s434
      %s449 = sphi 0, %s435
      %s453 = sphi 0, %s453
      %s455 = sphi 0, %s453
      %s456 = sphi 0, %s455
      %s470 = sphi 0, %s456
      %s474 = sphi 0, %s474
      %s476 = sphi 0, %s474
      %s477 = sphi 0, %s476
      %s491 = sphi 0, %s477
      %s495 = sphi 0, %s495
      %s497 = sphi 0, %s495
      %s498 = sphi 0, %s497
      %s512 = sphi 0, %s498
      %s518 = sphi 0, %s520
      %s521 = sphi 0, %s518
      %s522 = sphi 0, %s521
      %s538 = sphi 0, %s522
    $region4: #{tpu_custom_call.1} parent=1 // loop_header_branch
      %46 = sbr.rel (%p44) target = $region8
    $region5: #{tpu_custom_call.1} parent=1 // loop_body
      %s48 = ssub.s32 %s43, 1
      %s49 = ssub.s32 %s43, 2
      %s50 = sadd.s32 %s43, 1
      %s51 = ssub.s32 %s43, %s50
      %p52 = scmp.eq.s32.totalorder %s51, 0
      %s54 = sadd.s32 %s53, 1
      %s55 = scalar_select %p52, %s53, %s54
      %p58 = pneg %p52
      %p59 = scmp.eq.s32.totalorder %s43, 1
      %p60 = por %p58, %p59
      %p61 = scmp.ne.s32.totalorder %s53, %s56
      %p62 = scmp.eq.s32.totalorder %s43, 0
      %p63 = por %p61, %p62
      %p64 = scmp.ne.s32.totalorder %s53, %s56
      %p65 = scmp.eq.s32.totalorder %s48, 1
      %p66 = por %p64, %p65
      %p67 = scmp.ne.s32.totalorder %s56, %s57
      %p68 = scmp.eq.s32.totalorder %s48, 0
      %p69 = por %p67, %p68
      %p70 = scmp.ne.s32.totalorder %s56, %s57
      %p71 = scmp.eq.s32.totalorder %s49, 1
      %p72 = por %p70, %p71
      %p74 = scmp.ne.s32.totalorder %s57, %s73
      %p75 = scmp.eq.s32.totalorder %s49, 0
      %p76 = por %p74, %p75
      %s77 = ssub.s32 %s43, %s50
      %p78 = scmp.eq.s32.totalorder %s77, 0
      %s80 = sadd.s32 %s79, 1
      %s81 = scalar_select %p78, %s79, %s80
      %p84 = pneg %p78
      %p85 = scmp.eq.s32.totalorder %s43, 1
      %p86 = por %p84, %p85
      %p87 = scmp.ne.s32.totalorder %s79, %s82
      %p88 = scmp.eq.s32.totalorder %s43, 0
      %p89 = por %p87, %p88
      %p90 = scmp.ne.s32.totalorder %s79, %s82
      %p91 = scmp.eq.s32.totalorder %s48, 1
      %p92 = por %p90, %p91
      %p93 = scmp.ne.s32.totalorder %s82, %s83
      %p94 = scmp.eq.s32.totalorder %s48, 0
      %p95 = por %p93, %p94
      %p96 = scmp.ne.s32.totalorder %s82, %s83
      %p97 = scmp.eq.s32.totalorder %s49, 1
      %p98 = por %p96, %p97
      %p100 = scmp.ne.s32.totalorder %s83, %s99
      %p101 = scmp.eq.s32.totalorder %s49, 0
      %p102 = por %p100, %p101
      %s103 = ssub.s32 %s43, %s50
      %p104 = scmp.eq.s32.totalorder %s103, 0
      %s106 = sadd.s32 %s105, 1
      %s107 = scalar_select %p104, %s105, %s106
      %p110 = pneg %p104
      %p111 = scmp.eq.s32.totalorder %s43, 1
      %p112 = por %p110, %p111
      %p113 = scmp.ne.s32.totalorder %s105, %s108
      %p114 = scmp.eq.s32.totalorder %s43, 0
      %p115 = por %p113, %p114
      %p116 = scmp.ne.s32.totalorder %s105, %s108
      %p117 = scmp.eq.s32.totalorder %s48, 1
      %p118 = por %p116, %p117
      %p119 = scmp.ne.s32.totalorder %s108, %s109
      %p120 = scmp.eq.s32.totalorder %s48, 0
      %p121 = por %p119, %p120
      %p122 = scmp.ne.s32.totalorder %s108, %s109
      %p123 = scmp.eq.s32.totalorder %s49, 1
      %p124 = por %p122, %p123
      %p126 = scmp.ne.s32.totalorder %s109, %s125
      %p127 = scmp.eq.s32.totalorder %s49, 0
      %p128 = por %p126, %p127
      %s129 = ssub.s32 %s43, %s50
      %p130 = scmp.eq.s32.totalorder %s129, 0
      %s132 = sadd.s32 %s131, 1
      %s133 = scalar_select %p130, %s131, %s132
      %p136 = pneg %p130
      %p137 = scmp.eq.s32.totalorder %s43, 1
      %p138 = por %p136, %p137
      %p139 = scmp.ne.s32.totalorder %s131, %s134
      %p140 = scmp.eq.s32.totalorder %s43, 0
      %p141 = por %p139, %p140
      %p142 = scmp.ne.s32.totalorder %s131, %s134
      %p143 = scmp.eq.s32.totalorder %s48, 1
      %p144 = por %p142, %p143
      %p145 = scmp.ne.s32.totalorder %s134, %s135
      %p146 = scmp.eq.s32.totalorder %s48, 0
      %p147 = por %p145, %p146
      %p148 = scmp.ne.s32.totalorder %s134, %s135
      %p149 = scmp.eq.s32.totalorder %s49, 1
      %p150 = por %p148, %p149
      %p152 = scmp.ne.s32.totalorder %s135, %s151
      %p153 = scmp.eq.s32.totalorder %s49, 0
      %p154 = por %p152, %p153
      %s155 = ssub.s32 %s43, %s50
      %p156 = scmp.eq.s32.totalorder %s155, 0
      %s158 = sadd.s32 %s157, 1
      %s159 = scalar_select %p156, %s157, %s158
      %p162 = pneg %p156
      %p163 = scmp.eq.s32.totalorder %s43, 1
      %p164 = por %p162, %p163
      %p165 = scmp.ne.s32.totalorder %s157, %s160
      %p166 = scmp.eq.s32.totalorder %s43, 0
      %p167 = por %p165, %p166
      %p168 = scmp.ne.s32.totalorder %s157, %s160
      %p169 = scmp.eq.s32.totalorder %s48, 1
      %p170 = por %p168, %p169
      %p171 = scmp.ne.s32.totalorder %s160, %s161
      %p172 = scmp.eq.s32.totalorder %s48, 0
      %p173 = por %p171, %p172
      %p174 = scmp.ne.s32.totalorder %s160, %s161
      %p175 = scmp.eq.s32.totalorder %s49, 1
      %p176 = por %p174, %p175
      %p178 = scmp.ne.s32.totalorder %s161, %s177
      %p179 = scmp.eq.s32.totalorder %s49, 0
      %p180 = por %p178, %p179
      %s181 = ssub.s32 %s43, %s50
      %p182 = scmp.eq.s32.totalorder %s181, 0
      %s184 = sadd.s32 %s183, 1
      %s185 = scalar_select %p182, %s183, %s184
      %p188 = pneg %p182
      %p189 = scmp.eq.s32.totalorder %s43, 1
      %p190 = por %p188, %p189
      %p191 = scmp.ne.s32.totalorder %s183, %s186
      %p192 = scmp.eq.s32.totalorder %s43, 0
      %p193 = por %p191, %p192
      %p194 = scmp.ne.s32.totalorder %s183, %s186
      %p195 = scmp.eq.s32.totalorder %s48, 1
      %p196 = por %p194, %p195
      %p197 = scmp.ne.s32.totalorder %s186, %s187
      %p198 = scmp.eq.s32.totalorder %s48, 0
      %p199 = por %p197, %p198
      %p200 = scmp.ne.s32.totalorder %s186, %s187
      %p201 = scmp.eq.s32.totalorder %s49, 1
      %p202 = por %p200, %p201
      %p204 = scmp.ne.s32.totalorder %s187, %s203
      %p205 = scmp.eq.s32.totalorder %s49, 0
      %p206 = por %p204, %p205
      %s207 = ssub.s32 %s43, %s50
      %p208 = scmp.eq.s32.totalorder %s207, 0
      %s210 = sadd.s32 %s209, 1
      %s211 = scalar_select %p208, %s209, %s210
      %p214 = pneg %p208
      %p215 = scmp.eq.s32.totalorder %s43, 1
      %p216 = por %p214, %p215
      %p217 = scmp.ne.s32.totalorder %s209, %s212
      %p218 = scmp.eq.s32.totalorder %s43, 0
      %p219 = por %p217, %p218
      %p220 = scmp.ne.s32.totalorder %s209, %s212
      %p221 = scmp.eq.s32.totalorder %s48, 1
      %p222 = por %p220, %p221
      %p223 = scmp.ne.s32.totalorder %s212, %s213
      %p224 = scmp.eq.s32.totalorder %s48, 0
      %p225 = por %p223, %p224
      %p226 = scmp.ne.s32.totalorder %s212, %s213
      %p227 = scmp.eq.s32.totalorder %s49, 1
      %p228 = por %p226, %p227
      %p230 = scmp.ne.s32.totalorder %s213, %s229
      %p231 = scmp.eq.s32.totalorder %s49, 0
      %p232 = por %p230, %p231
      %s233 = ssub.s32 %s43, %s50
      %p234 = scmp.eq.s32.totalorder %s233, 0
      %s236 = sadd.s32 %s235, 1
      %s237 = scalar_select %p234, %s235, %s236
      %p240 = pneg %p234
      %p241 = scmp.eq.s32.totalorder %s43, 1
      %p242 = por %p240, %p241
      %p243 = scmp.ne.s32.totalorder %s235, %s238
      %p244 = scmp.eq.s32.totalorder %s43, 0
      %p245 = por %p243, %p244
      %p246 = scmp.ne.s32.totalorder %s235, %s238
      %p247 = scmp.eq.s32.totalorder %s48, 1
      %p248 = por %p246, %p247
      %p249 = scmp.ne.s32.totalorder %s238, %s239
      %p250 = scmp.eq.s32.totalorder %s48, 0
      %p251 = por %p249, %p250
      %p252 = scmp.ne.s32.totalorder %s238, %s239
      %p253 = scmp.eq.s32.totalorder %s49, 1
      %p254 = por %p252, %p253
      %p256 = scmp.ne.s32.totalorder %s239, %s255
      %p257 = scmp.eq.s32.totalorder %s49, 0
      %p258 = por %p256, %p257
      %s259 = ssub.s32 %s43, %s50
      %p260 = scmp.eq.s32.totalorder %s259, 0
      %s262 = sadd.s32 %s261, 1
      %s263 = scalar_select %p260, %s261, %s262
      %p266 = pneg %p260
      %p267 = scmp.eq.s32.totalorder %s43, 1
      %p268 = por %p266, %p267
      %p269 = scmp.ne.s32.totalorder %s261, %s264
      %p270 = scmp.eq.s32.totalorder %s43, 0
      %p271 = por %p269, %p270
      %p272 = scmp.ne.s32.totalorder %s261, %s264
      %p273 = scmp.eq.s32.totalorder %s48, 1
      %p274 = por %p272, %p273
      %p275 = scmp.ne.s32.totalorder %s264, %s265
      %p276 = scmp.eq.s32.totalorder %s48, 0
      %p277 = por %p275, %p276
      %p278 = scmp.ne.s32.totalorder %s264, %s265
      %p279 = scmp.eq.s32.totalorder %s49, 1
      %p280 = por %p278, %p279
      %p282 = scmp.ne.s32.totalorder %s265, %s281
      %p283 = scmp.eq.s32.totalorder %s49, 0
      %p284 = por %p282, %p283
      %s286 = sadd.s32 %s285, 1
      %p289 = scmp.eq.s32.totalorder %s43, 1
      %p290 = scmp.ne.s32.totalorder %s285, %s287
      %p291 = scmp.eq.s32.totalorder %s43, 0
      %p292 = por %p290, %p291
      %p293 = scmp.ne.s32.totalorder %s285, %s287
      %p294 = scmp.eq.s32.totalorder %s48, 1
      %p295 = por %p293, %p294
      %p296 = scmp.ne.s32.totalorder %s287, %s288
      %p297 = scmp.eq.s32.totalorder %s48, 0
      %p298 = por %p296, %p297
      %p299 = scmp.ne.s32.totalorder %s287, %s288
      %p300 = scmp.eq.s32.totalorder %s49, 1
      %p301 = por %p299, %p300
      %p303 = scmp.ne.s32.totalorder %s288, %s302
      %p304 = scmp.eq.s32.totalorder %s49, 0
      %p305 = por %p303, %p304
      %s307 = sadd.s32 %s306, 1
      %p310 = scmp.eq.s32.totalorder %s43, 1
      %p311 = scmp.ne.s32.totalorder %s306, %s308
      %p312 = scmp.eq.s32.totalorder %s43, 0
      %p313 = por %p311, %p312
      %p314 = scmp.ne.s32.totalorder %s306, %s308
      %p315 = scmp.eq.s32.totalorder %s48, 1
      %p316 = por %p314, %p315
      %p317 = scmp.ne.s32.totalorder %s308, %s309
      %p318 = scmp.eq.s32.totalorder %s48, 0
      %p319 = por %p317, %p318
      %p320 = scmp.ne.s32.totalorder %s308, %s309
      %p321 = scmp.eq.s32.totalorder %s49, 1
      %p322 = por %p320, %p321
      %p324 = scmp.ne.s32.totalorder %s309, %s323
      %p325 = scmp.eq.s32.totalorder %s49, 0
      %p326 = por %p324, %p325
      %s328 = sadd.s32 %s327, 1
      %p331 = scmp.eq.s32.totalorder %s43, 1
      %p332 = scmp.ne.s32.totalorder %s327, %s329
      %p333 = scmp.eq.s32.totalorder %s43, 0
      %p334 = por %p332, %p333
      %p335 = scmp.ne.s32.totalorder %s327, %s329
      %p336 = scmp.eq.s32.totalorder %s48, 1
      %p337 = por %p335, %p336
      %p338 = scmp.ne.s32.totalorder %s329, %s330
      %p339 = scmp.eq.s32.totalorder %s48, 0
      %p340 = por %p338, %p339
      %p341 = scmp.ne.s32.totalorder %s329, %s330
      %p342 = scmp.eq.s32.totalorder %s49, 1
      %p343 = por %p341, %p342
      %p345 = scmp.ne.s32.totalorder %s330, %s344
      %p346 = scmp.eq.s32.totalorder %s49, 0
      %p347 = por %p345, %p346
      %s349 = sadd.s32 %s348, 1
      %p352 = scmp.eq.s32.totalorder %s43, 1
      %p353 = scmp.ne.s32.totalorder %s348, %s350
      %p354 = scmp.eq.s32.totalorder %s43, 0
      %p355 = por %p353, %p354
      %p356 = scmp.ne.s32.totalorder %s348, %s350
      %p357 = scmp.eq.s32.totalorder %s48, 1
      %p358 = por %p356, %p357
      %p359 = scmp.ne.s32.totalorder %s350, %s351
      %p360 = scmp.eq.s32.totalorder %s48, 0
      %p361 = por %p359, %p360
      %p362 = scmp.ne.s32.totalorder %s350, %s351
      %p363 = scmp.eq.s32.totalorder %s49, 1
      %p364 = por %p362, %p363
      %p366 = scmp.ne.s32.totalorder %s351, %s365
      %p367 = scmp.eq.s32.totalorder %s49, 0
      %p368 = por %p366, %p367
      %s370 = sadd.s32 %s369, 1
      %p373 = scmp.eq.s32.totalorder %s43, 1
      %p374 = scmp.ne.s32.totalorder %s369, %s371
      %p375 = scmp.eq.s32.totalorder %s43, 0
      %p376 = por %p374, %p375
      %p377 = scmp.ne.s32.totalorder %s369, %s371
      %p378 = scmp.eq.s32.totalorder %s48, 1
      %p379 = por %p377, %p378
      %p380 = scmp.ne.s32.totalorder %s371, %s372
      %p381 = scmp.eq.s32.totalorder %s48, 0
      %p382 = por %p380, %p381
      %p383 = scmp.ne.s32.totalorder %s371, %s372
      %p384 = scmp.eq.s32.totalorder %s49, 1
      %p385 = por %p383, %p384
      %p387 = scmp.ne.s32.totalorder %s372, %s386
      %p388 = scmp.eq.s32.totalorder %s49, 0
      %p389 = por %p387, %p388
      %s391 = sadd.s32 %s390, 1
      %p394 = scmp.eq.s32.totalorder %s43, 1
      %p395 = scmp.ne.s32.totalorder %s390, %s392
      %p396 = scmp.eq.s32.totalorder %s43, 0
      %p397 = por %p395, %p396
      %p398 = scmp.ne.s32.totalorder %s390, %s392
      %p399 = scmp.eq.s32.totalorder %s48, 1
      %p400 = por %p398, %p399
      %p401 = scmp.ne.s32.totalorder %s392, %s393
      %p402 = scmp.eq.s32.totalorder %s48, 0
      %p403 = por %p401, %p402
      %p404 = scmp.ne.s32.totalorder %s392, %s393
      %p405 = scmp.eq.s32.totalorder %s49, 1
      %p406 = por %p404, %p405
      %p408 = scmp.ne.s32.totalorder %s393, %s407
      %p409 = scmp.eq.s32.totalorder %s49, 0
      %p410 = por %p408, %p409
      %s412 = sadd.s32 %s411, 1
      %p415 = scmp.eq.s32.totalorder %s43, 1
      %p416 = scmp.ne.s32.totalorder %s411, %s413
      %p417 = scmp.eq.s32.totalorder %s43, 0
      %p418 = por %p416, %p417
      %p419 = scmp.ne.s32.totalorder %s411, %s413
      %p420 = scmp.eq.s32.totalorder %s48, 1
      %p421 = por %p419, %p420
      %p422 = scmp.ne.s32.totalorder %s413, %s414
      %p423 = scmp.eq.s32.totalorder %s48, 0
      %p424 = por %p422, %p423
      %p425 = scmp.ne.s32.totalorder %s413, %s414
      %p426 = scmp.eq.s32.totalorder %s49, 1
      %p427 = por %p425, %p426
      %p429 = scmp.ne.s32.totalorder %s414, %s428
      %p430 = scmp.eq.s32.totalorder %s49, 0
      %p431 = por %p429, %p430
      %s433 = sadd.s32 %s432, 1
      %p436 = scmp.eq.s32.totalorder %s43, 1
      %p437 = scmp.ne.s32.totalorder %s432, %s434
      %p438 = scmp.eq.s32.totalorder %s43, 0
      %p439 = por %p437, %p438
      %p440 = scmp.ne.s32.totalorder %s432, %s434
      %p441 = scmp.eq.s32.totalorder %s48, 1
      %p442 = por %p440, %p441
      %p443 = scmp.ne.s32.totalorder %s434, %s435
      %p444 = scmp.eq.s32.totalorder %s48, 0
      %p445 = por %p443, %p444
      %p446 = scmp.ne.s32.totalorder %s434, %s435
      %p447 = scmp.eq.s32.totalorder %s49, 1
      %p448 = por %p446, %p447
      %p450 = scmp.ne.s32.totalorder %s435, %s449
      %p451 = scmp.eq.s32.totalorder %s49, 0
      %p452 = por %p450, %p451
      %s454 = sadd.s32 %s453, 1
      %p457 = scmp.eq.s32.totalorder %s43, 1
      %p458 = scmp.ne.s32.totalorder %s453, %s455
      %p459 = scmp.eq.s32.totalorder %s43, 0
      %p460 = por %p458, %p459
      %p461 = scmp.ne.s32.totalorder %s453, %s455
      %p462 = scmp.eq.s32.totalorder %s48, 1
      %p463 = por %p461, %p462
      %p464 = scmp.ne.s32.totalorder %s455, %s456
      %p465 = scmp.eq.s32.totalorder %s48, 0
      %p466 = por %p464, %p465
      %p467 = scmp.ne.s32.totalorder %s455, %s456
      %p468 = scmp.eq.s32.totalorder %s49, 1
      %p469 = por %p467, %p468
      %p471 = scmp.ne.s32.totalorder %s456, %s470
      %p472 = scmp.eq.s32.totalorder %s49, 0
      %p473 = por %p471, %p472
      %s475 = sadd.s32 %s474, 1
      %p478 = scmp.eq.s32.totalorder %s43, 1
      %p479 = scmp.ne.s32.totalorder %s474, %s476
      %p480 = scmp.eq.s32.totalorder %s43, 0
      %p481 = por %p479, %p480
      %p482 = scmp.ne.s32.totalorder %s474, %s476
      %p483 = scmp.eq.s32.totalorder %s48, 1
      %p484 = por %p482, %p483
      %p485 = scmp.ne.s32.totalorder %s476, %s477
      %p486 = scmp.eq.s32.totalorder %s48, 0
      %p487 = por %p485, %p486
      %p488 = scmp.ne.s32.totalorder %s476, %s477
      %p489 = scmp.eq.s32.totalorder %s49, 1
      %p490 = por %p488, %p489
      %p492 = scmp.ne.s32.totalorder %s477, %s491
      %p493 = scmp.eq.s32.totalorder %s49, 0
      %p494 = por %p492, %p493
      %s496 = sadd.s32 %s495, 1
      %p499 = scmp.eq.s32.totalorder %s43, 1
      %p500 = scmp.ne.s32.totalorder %s495, %s497
      %p501 = scmp.eq.s32.totalorder %s43, 0
      %p502 = por %p500, %p501
      %p503 = scmp.ne.s32.totalorder %s495, %s497
      %p504 = scmp.eq.s32.totalorder %s48, 1
      %p505 = por %p503, %p504
      %p506 = scmp.ne.s32.totalorder %s497, %s498
      %p507 = scmp.eq.s32.totalorder %s48, 0
      %p508 = por %p506, %p507
      %p509 = scmp.ne.s32.totalorder %s497, %s498
      %p510 = scmp.eq.s32.totalorder %s49, 1
      %p511 = por %p509, %p510
      %p513 = scmp.ne.s32.totalorder %s498, %s512
      %p514 = scmp.eq.s32.totalorder %s49, 0
      %p515 = por %p513, %p514
      %s516 = ssub.s32 %s43, %s50
      %p517 = scmp.eq.s32.totalorder %s516, 0
      %s519 = sadd.s32 %s518, 1
      %s520 = scalar_select %p517, %s518, %s519
      %p523 = pneg %p517
      %p524 = scmp.eq.s32.totalorder %s43, 1
      %p525 = por %p523, %p524
      %p526 = scmp.ne.s32.totalorder %s518, %s521
      %p527 = scmp.eq.s32.totalorder %s43, 0
      %p528 = por %p526, %p527
      %p529 = scmp.ne.s32.totalorder %s518, %s521
      %p530 = scmp.eq.s32.totalorder %s48, 1
      %p531 = por %p529, %p530
      %p532 = scmp.ne.s32.totalorder %s521, %s522
      %p533 = scmp.eq.s32.totalorder %s48, 0
      %p534 = por %p532, %p533
      %p535 = scmp.ne.s32.totalorder %s521, %s522
      %p536 = scmp.eq.s32.totalorder %s49, 1
      %p537 = por %p535, %p536
      %p539 = scmp.ne.s32.totalorder %s522, %s538
      %p540 = scmp.eq.s32.totalorder %s49, 0
      %p541 = por %p539, %p540
      %p542 = scmp.le.s32.totalorder 1, %s43
      %p543 = scmp.lt.s32.totalorder %s43, 3
      %p544 = pnand %p542, %p543
      %p545 = pneg %p544
      // Predicated region
      $region9: #{tpu_custom_call.1} parent=5 // pred_check
        _
      $region10: #{tpu_custom_call.1} parent=5 // pred_check_branch
        %547 = sbr.rel (%p544) target = $region12
      $region11: #{tpu_custom_call.1} parent=5 // pred_region
        %s548 = ssub.s32 %s43, 1
        // Predicated region
        $region13: #{tpu_custom_call.1} parent=11 // pred_check
          %p549 = pneg %p298
        $region14: #{tpu_custom_call.1} parent=11 // pred_check_branch
          %551 = sbr.rel (%p549) target = $region16
        $region15: #{tpu_custom_call.1} parent=11 // pred_region
          %s553 = ssub.s32 64, 64
          %554 = vsyncadd [#allocation15], %s553
          %s556 = sshll.u32 [#allocation14], 4
          %s557 = int_to_ptr.vmem [resolvable:$true] %s556
          %559 = dma.hbm_to_vmem [thread:$0]  %s9, 64, %s557, [#allocation15]
        $region16: #{tpu_custom_call.1} parent=11 // pred_fallthru
          _
        // Predicated region
        $region17: #{tpu_custom_call.1} parent=11 // pred_check
          %p560 = pneg %p319
        $region18: #{tpu_custom_call.1} parent=11 // pred_check_branch
          %562 = sbr.rel (%p560) target = $region20
        $region19: #{tpu_custom_call.1} parent=11 // pred_region
          %s564 = ssub.s32 64, 64
          %565 = vsyncadd [#allocation15], %s564
          %s567 = sshll.u32 [#allocation16], 4
          %s568 = int_to_ptr.vmem [resolvable:$true] %s567
          %570 = dma.hbm_to_vmem [thread:$0]  %s10, 64, %s568, [#allocation15]
        $region20: #{tpu_custom_call.1} parent=11 // pred_fallthru
          _
        // Predicated region
        $region21: #{tpu_custom_call.1} parent=11 // pred_check
          %p571 = pneg %p340
        $region22: #{tpu_custom_call.1} parent=11 // pred_check_branch
          %573 = sbr.rel (%p571) target = $region24
        $region23: #{tpu_custom_call.1} parent=11 // pred_region
          _
        $region24: #{tpu_custom_call.1} parent=11 // pred_fallthru
          _
        // Predicated region
        $region25: #{tpu_custom_call.1} parent=11 // pred_check
          %p574 = pneg %p361
        $region26: #{tpu_custom_call.1} parent=11 // pred_check_branch
          %576 = sbr.rel (%p574) target = $region28
        $region27: #{tpu_custom_call.1} parent=11 // pred_region
          _
        $region28: #{tpu_custom_call.1} parent=11 // pred_fallthru
          _
        // Predicated region
        $region29: #{tpu_custom_call.1} parent=11 // pred_check
          %p577 = pneg %p382
        $region30: #{tpu_custom_call.1} parent=11 // pred_check_branch
          %579 = sbr.rel (%p577) target = $region32
        $region31: #{tpu_custom_call.1} parent=11 // pred_region
          _
        $region32: #{tpu_custom_call.1} parent=11 // pred_fallthru
          _
        // Predicated region
        $region33: #{tpu_custom_call.1} parent=11 // pred_check
          %p580 = pneg %p403
        $region34: #{tpu_custom_call.1} parent=11 // pred_check_branch
          %582 = sbr.rel (%p580) target = $region36
        $region35: #{tpu_custom_call.1} parent=11 // pred_region
          %s584 = ssub.s32 16, 16
          %585 = vsyncadd [#allocation18], %s584
          %s587 = sshll.u32 [#allocation17], 4
          %s588 = int_to_ptr.vmem [resolvable:$true] %s587
          %590 = dma.hbm_to_vmem [thread:$0]  %s14, 16, %s588, [#allocation18]
        $region36: #{tpu_custom_call.1} parent=11 // pred_fallthru
          _
        // Predicated region
        $region37: #{tpu_custom_call.1} parent=11 // pred_check
          %p591 = pneg %p424
        $region38: #{tpu_custom_call.1} parent=11 // pred_check_branch
          %593 = sbr.rel (%p591) target = $region40
        $region39: #{tpu_custom_call.1} parent=11 // pred_region
          _
        $region40: #{tpu_custom_call.1} parent=11 // pred_fallthru
          _
        // Predicated region
        $region41: #{tpu_custom_call.1} parent=11 // pred_check
          %p594 = pneg %p445
        $region42: #{tpu_custom_call.1} parent=11 // pred_check_branch
          %596 = sbr.rel (%p594) target = $region44
        $region43: #{tpu_custom_call.1} parent=11 // pred_region
          _
        $region44: #{tpu_custom_call.1} parent=11 // pred_fallthru
          _
        // Predicated region
        $region45: #{tpu_custom_call.1} parent=11 // pred_check
          %p597 = pneg %p466
        $region46: #{tpu_custom_call.1} parent=11 // pred_check_branch
          %599 = sbr.rel (%p597) target = $region48
        $region47: #{tpu_custom_call.1} parent=11 // pred_region
          _
        $region48: #{tpu_custom_call.1} parent=11 // pred_fallthru
          _
        // Predicated region
        $region49: #{tpu_custom_call.1} parent=11 // pred_check
          %p600 = pneg %p487
        $region50: #{tpu_custom_call.1} parent=11 // pred_check_branch
          %602 = sbr.rel (%p600) target = $region52
        $region51: #{tpu_custom_call.1} parent=11 // pred_region
          _
        $region52: #{tpu_custom_call.1} parent=11 // pred_fallthru
          _
        // Predicated region
        $region53: #{tpu_custom_call.1} parent=11 // pred_check
          %p603 = pneg %p508
        $region54: #{tpu_custom_call.1} parent=11 // pred_check_branch
          %605 = sbr.rel (%p603) target = $region56
        $region55: #{tpu_custom_call.1} parent=11 // pred_region
          _
        $region56: #{tpu_custom_call.1} parent=11 // pred_fallthru
          _
      $region12: #{tpu_custom_call.1} parent=5 // pred_fallthru
        _
      %p606 = scmp.lt.s32.totalorder %s43, 2
      // Predicated region
      $region57: #{tpu_custom_call.1} parent=5 // pred_check
        %p607 = pneg %p606
      $region58: #{tpu_custom_call.1} parent=5 // pred_check_branch
        %609 = sbr.rel (%p607) target = $region60
      $region59: #{tpu_custom_call.1} parent=5 // pred_region
        // Predicated region
        $region61: #{tpu_custom_call.1} parent=59 // pred_check
          %p610 = pneg %p63
        $region62: #{tpu_custom_call.1} parent=59 // pred_check_branch
          %612 = sbr.rel (%p610) target = $region64
        $region63: #{tpu_custom_call.1} parent=59 // pred_region
          %p613 = scmp.lt.s32.totalorder %s43, 1
          %s614 = scalar_select %p613, %s43, 1
          %s615 = smul.addr %s614, 16
          %s616 = smul.addr %s615, 4
          %s617 = scalar_lea.vmem %s0, %s616
        $region64: #{tpu_custom_call.1} parent=59 // pred_fallthru
          _
        // Predicated region
        $region65: #{tpu_custom_call.1} parent=59 // pred_check
          %p618 = pneg %p89
        $region66: #{tpu_custom_call.1} parent=59 // pred_check_branch
          %620 = sbr.rel (%p618) target = $region68
        $region67: #{tpu_custom_call.1} parent=59 // pred_region
          %p621 = scmp.lt.s32.totalorder %s43, 1
          %s622 = scalar_select %p621, %s43, 1
          %s623 = smul.addr %s622, 16
          %s624 = smul.addr %s623, 4
          %s625 = scalar_lea.vmem %s1, %s624
        $region68: #{tpu_custom_call.1} parent=59 // pred_fallthru
          _
        // Predicated region
        $region69: #{tpu_custom_call.1} parent=59 // pred_check
          %p626 = pneg %p115
        $region70: #{tpu_custom_call.1} parent=59 // pred_check_branch
          %628 = sbr.rel (%p626) target = $region72
        $region71: #{tpu_custom_call.1} parent=59 // pred_region
          %s629 = sand.u32 %s105, 1
          %s630 = scalar_lea.sflag [#allocation3], %s629
          %s631 = sand.u32 %s105, 1
          %s632 = smul.addr %s631, 32
          %s633 = scalar_lea.vmem [#allocation2], %s632
          %s635 = ssub.s32 512, 512
          %636 = vsyncadd %s630, %s635
          %s637 = smul.addr %s43, 8
          %s638 = smul.addr %s637, 64
          %s639 = scalar_lea.hbm %s2, %s638
          %s640 = sshll.u32 %s633, 4
          %s641 = int_to_ptr.vmem [resolvable:$true] %s640
          %646 = dma.hbm_to_vmem [thread:$0]  %s639, 512, %s641, %s630, 64, 64, 4
        $region72: #{tpu_custom_call.1} parent=59 // pred_fallthru
          _
        // Predicated region
        $region73: #{tpu_custom_call.1} parent=59 // pred_check
          %p647 = pneg %p141
        $region74: #{tpu_custom_call.1} parent=59 // pred_check_branch
          %649 = sbr.rel (%p647) target = $region76
        $region75: #{tpu_custom_call.1} parent=59 // pred_region
          %s650 = sand.u32 %s43, 1
          %s651 = scalar_lea.sflag [#allocation6], %s650
          %s652 = sand.u32 %s131, 1
          %s653 = smul.addr %s652, 20
          %s654 = scalar_lea.vmem [#allocation5], %s653
          %s656 = ssub.s32 320, 320
          %657 = vsyncadd %s651, %s656
          %s658 = smul.addr %s43, 5
          %s659 = smul.addr %s658, 64
          %s660 = scalar_lea.hbm %s3, %s659
          %s661 = sshll.u32 %s654, 4
          %s662 = int_to_ptr.vmem [resolvable:$true] %s661
          %667 = dma.hbm_to_vmem [thread:$0]  %s660, 320, %s662, %s651, 64, 64, 4
        $region76: #{tpu_custom_call.1} parent=59 // pred_fallthru
          _
        // Predicated region
        $region77: #{tpu_custom_call.1} parent=59 // pred_check
          %p668 = pneg %p167
        $region78: #{tpu_custom_call.1} parent=59 // pred_check_branch
          %670 = sbr.rel (%p668) target = $region80
        $region79: #{tpu_custom_call.1} parent=59 // pred_region
          %s671 = sand.u32 %s43, 1
          %s672 = scalar_lea.sflag [#allocation6], %s671
          %s673 = sand.u32 %s157, 1
          %s674 = smul.addr %s673, 32
          %s675 = scalar_lea.vmem [#allocation7], %s674
          %s677 = ssub.s32 512, 512
          %678 = vsyncadd %s672, %s677
          %s679 = smul.addr %s43, 8
          %s680 = smul.addr %s679, 64
          %s681 = scalar_lea.hbm %s4, %s680
          %s682 = sshll.u32 %s675, 4
          %s683 = int_to_ptr.vmem [resolvable:$true] %s682
          %688 = dma.hbm_to_vmem [thread:$0]  %s681, 512, %s683, %s672, 64, 64, 4
        $region80: #{tpu_custom_call.1} parent=59 // pred_fallthru
          _
        // Predicated region
        $region81: #{tpu_custom_call.1} parent=59 // pred_check
          %p689 = pneg %p193
        $region82: #{tpu_custom_call.1} parent=59 // pred_check_branch
          %691 = sbr.rel (%p689) target = $region84
        $region83: #{tpu_custom_call.1} parent=59 // pred_region
          %s692 = sand.u32 %s43, 1
          %s693 = scalar_lea.sflag [#allocation9], %s692
          %s694 = sand.u32 %s183, 1
          %s695 = smul.addr %s694, 32
          %s696 = scalar_lea.vmem [#allocation8], %s695
          %s698 = ssub.s32 512, 512
          %699 = vsyncadd %s693, %s698
          %s700 = smul.addr %s43, 8
          %s701 = smul.addr %s700, 64
          %s702 = scalar_lea.hbm %s5, %s701
          %s703 = sshll.u32 %s696, 4
          %s704 = int_to_ptr.vmem [resolvable:$true] %s703
          %709 = dma.hbm_to_vmem [thread:$0]  %s702, 512, %s704, %s693, 64, 64, 4
        $region84: #{tpu_custom_call.1} parent=59 // pred_fallthru
          _
        // Predicated region
        $region85: #{tpu_custom_call.1} parent=59 // pred_check
          %p710 = pneg %p219
        $region86: #{tpu_custom_call.1} parent=59 // pred_check_branch
          %712 = sbr.rel (%p710) target = $region88
        $region87: #{tpu_custom_call.1} parent=59 // pred_region
          %s713 = sand.u32 %s43, 1
          %s714 = scalar_lea.sflag [#allocation9], %s713
          %s715 = sand.u32 %s209, 1
          %s716 = smul.addr %s715, 20
          %s717 = scalar_lea.vmem [#allocation10], %s716
          %s719 = ssub.s32 320, 320
          %720 = vsyncadd %s714, %s719
          %s721 = smul.addr %s43, 5
          %s722 = smul.addr %s721, 64
          %s723 = scalar_lea.hbm %s6, %s722
          %s724 = sshll.u32 %s717, 4
          %s725 = int_to_ptr.vmem [resolvable:$true] %s724
          %730 = dma.hbm_to_vmem [thread:$0]  %s723, 320, %s725, %s714, 64, 64, 4
        $region88: #{tpu_custom_call.1} parent=59 // pred_fallthru
          _
        // Predicated region
        $region89: #{tpu_custom_call.1} parent=59 // pred_check
          %p731 = pneg %p245
        $region90: #{tpu_custom_call.1} parent=59 // pred_check_branch
          %733 = sbr.rel (%p731) target = $region92
        $region91: #{tpu_custom_call.1} parent=59 // pred_region
          %s734 = sand.u32 %s43, 1
          %s735 = scalar_lea.sflag [#allocation12], %s734
          %s736 = sand.u32 %s235, 1
          %s737 = smul.addr %s736, 20
          %s738 = scalar_lea.vmem [#allocation11], %s737
          %s740 = ssub.s32 320, 320
          %741 = vsyncadd %s735, %s740
          %s742 = smul.addr %s43, 5
          %s743 = smul.addr %s742, 64
          %s744 = scalar_lea.hbm %s7, %s743
          %s745 = sshll.u32 %s738, 4
          %s746 = int_to_ptr.vmem [resolvable:$true] %s745
          %751 = dma.hbm_to_vmem [thread:$0]  %s744, 320, %s746, %s735, 64, 64, 4
        $region92: #{tpu_custom_call.1} parent=59 // pred_fallthru
          _
        // Predicated region
        $region93: #{tpu_custom_call.1} parent=59 // pred_check
          %p752 = pneg %p271
        $region94: #{tpu_custom_call.1} parent=59 // pred_check_branch
          %754 = sbr.rel (%p752) target = $region96
        $region95: #{tpu_custom_call.1} parent=59 // pred_region
          %s755 = sand.u32 %s43, 1
          %s756 = scalar_lea.sflag [#allocation12], %s755
          %s757 = sand.u32 %s261, 1
          %s758 = smul.addr %s757, 2
          %s759 = scalar_lea.vmem [#allocation13], %s758
          %s761 = ssub.s32 32, 32
          %762 = vsyncadd %s756, %s761
          %s763 = smul.addr %s43, 32
          %s764 = scalar_lea.hbm %s8, %s763
          %s766 = sshll.u32 %s759, 4
          %s767 = int_to_ptr.vmem [resolvable:$true] %s766
          %769 = dma.hbm_to_vmem [thread:$0]  %s764, 32, %s767, %s756
        $region96: #{tpu_custom_call.1} parent=59 // pred_fallthru
          _
      $region60: #{tpu_custom_call.1} parent=5 // pred_fallthru
        _
      %p770 = scmp.le.s32.totalorder 1, %s43
      %p771 = scmp.lt.s32.totalorder %s43, 3
      %p772 = pnand %p770, %p771
      %p773 = pneg %p772
      // Predicated region
      $region97: #{tpu_custom_call.1} parent=5 // pred_check
        _
      $region98: #{tpu_custom_call.1} parent=5 // pred_check_branch
        %775 = sbr.rel (%p772) target = $region100
      $region99: #{tpu_custom_call.1} parent=5 // pred_region
        %s776 = ssub.s32 %s43, 1
        %s777 = sand.u32 %s108, 1
        %s778 = scalar_lea.sflag [#allocation3], %s777
        %s779 = sand.u32 %s108, 1
        %s780 = smul.addr %s779, 32
        %s781 = scalar_lea.vmem [#allocation2], %s780
        // Predicated region
        $region101: #{tpu_custom_call.1} parent=99 // pred_check
          %p782 = pneg %p121
        $region102: #{tpu_custom_call.1} parent=99 // pred_check_branch
          %784 = sbr.rel (%p782) target = $region104
        $region103: #{tpu_custom_call.1} parent=99 // pred_region
          %785 = dma.done %s778, 512
        $region104: #{tpu_custom_call.1} parent=99 // pred_fallthru
          _
        %s786 = sand.u32 %s48, 1
        %s787 = scalar_lea.sflag [#allocation6], %s786
        %s788 = sand.u32 %s134, 1
        %s789 = smul.addr %s788, 20
        %s790 = scalar_lea.vmem [#allocation5], %s789
        // Predicated region
        $region105: #{tpu_custom_call.1} parent=99 // pred_check
          %p791 = pneg %p147
        $region106: #{tpu_custom_call.1} parent=99 // pred_check_branch
          %793 = sbr.rel (%p791) target = $region108
        $region107: #{tpu_custom_call.1} parent=99 // pred_region
          %794 = dma.done %s787, 320
        $region108: #{tpu_custom_call.1} parent=99 // pred_fallthru
          _
        %s795 = sand.u32 %s48, 1
        %s796 = scalar_lea.sflag [#allocation6], %s795
        %s797 = sand.u32 %s160, 1
        %s798 = smul.addr %s797, 32
        %s799 = scalar_lea.vmem [#allocation7], %s798
        // Predicated region
        $region109: #{tpu_custom_call.1} parent=99 // pred_check
          %p800 = pneg %p173
        $region110: #{tpu_custom_call.1} parent=99 // pred_check_branch
          %802 = sbr.rel (%p800) target = $region112
        $region111: #{tpu_custom_call.1} parent=99 // pred_region
          %803 = dma.done %s796, 512
        $region112: #{tpu_custom_call.1} parent=99 // pred_fallthru
          _
        %s804 = sand.u32 %s48, 1
        %s805 = scalar_lea.sflag [#allocation9], %s804
        %s806 = sand.u32 %s186, 1
        %s807 = smul.addr %s806, 32
        %s808 = scalar_lea.vmem [#allocation8], %s807
        // Predicated region
        $region113: #{tpu_custom_call.1} parent=99 // pred_check
          %p809 = pneg %p199
        $region114: #{tpu_custom_call.1} parent=99 // pred_check_branch
          %811 = sbr.rel (%p809) target = $region116
        $region115: #{tpu_custom_call.1} parent=99 // pred_region
          %812 = dma.done %s805, 512
        $region116: #{tpu_custom_call.1} parent=99 // pred_fallthru
          _
        %s813 = sand.u32 %s48, 1
        %s814 = scalar_lea.sflag [#allocation9], %s813
        %s815 = sand.u32 %s212, 1
        %s816 = smul.addr %s815, 20
        %s817 = scalar_lea.vmem [#allocation10], %s816
        // Predicated region
        $region117: #{tpu_custom_call.1} parent=99 // pred_check
          %p818 = pneg %p225
        $region118: #{tpu_custom_call.1} parent=99 // pred_check_branch
          %820 = sbr.rel (%p818) target = $region120
        $region119: #{tpu_custom_call.1} parent=99 // pred_region
          %821 = dma.done %s814, 320
        $region120: #{tpu_custom_call.1} parent=99 // pred_fallthru
          _
        %s822 = sand.u32 %s48, 1
        %s823 = scalar_lea.sflag [#allocation12], %s822
        %s824 = sand.u32 %s238, 1
        %s825 = smul.addr %s824, 20
        %s826 = scalar_lea.vmem [#allocation11], %s825
        // Predicated region
        $region121: #{tpu_custom_call.1} parent=99 // pred_check
          %p827 = pneg %p251
        $region122: #{tpu_custom_call.1} parent=99 // pred_check_branch
          %829 = sbr.rel (%p827) target = $region124
        $region123: #{tpu_custom_call.1} parent=99 // pred_region
          %830 = dma.done %s823, 320
        $region124: #{tpu_custom_call.1} parent=99 // pred_fallthru
          _
        %s831 = sand.u32 %s48, 1
        %s832 = scalar_lea.sflag [#allocation12], %s831
        %s833 = sand.u32 %s264, 1
        %s834 = smul.addr %s833, 2
        %s835 = scalar_lea.vmem [#allocation13], %s834
        // Predicated region
        $region125: #{tpu_custom_call.1} parent=99 // pred_check
          %p836 = pneg %p277
        $region126: #{tpu_custom_call.1} parent=99 // pred_check_branch
          %838 = sbr.rel (%p836) target = $region128
        $region127: #{tpu_custom_call.1} parent=99 // pred_region
          %839 = dma.done %s832, 32
        $region128: #{tpu_custom_call.1} parent=99 // pred_fallthru
          _
        // Predicated region
        $region129: #{tpu_custom_call.1} parent=99 // pred_check
          %p840 = pneg %p298
        $region130: #{tpu_custom_call.1} parent=99 // pred_check_branch
          %842 = sbr.rel (%p840) target = $region132
        $region131: #{tpu_custom_call.1} parent=99 // pred_region
          %843 = dma.done [#allocation15], 64
        $region132: #{tpu_custom_call.1} parent=99 // pred_fallthru
          _
        // Predicated region
        $region133: #{tpu_custom_call.1} parent=99 // pred_check
          %p844 = pneg %p319
        $region134: #{tpu_custom_call.1} parent=99 // pred_check_branch
          %846 = sbr.rel (%p844) target = $region136
        $region135: #{tpu_custom_call.1} parent=99 // pred_region
          %847 = dma.done [#allocation15], 64
        $region136: #{tpu_custom_call.1} parent=99 // pred_fallthru
          _
        // Predicated region
        $region137: #{tpu_custom_call.1} parent=99 // pred_check
          %p848 = pneg %p403
        $region138: #{tpu_custom_call.1} parent=99 // pred_check_branch
          %850 = sbr.rel (%p848) target = $region140
        $region139: #{tpu_custom_call.1} parent=99 // pred_region
          %851 = dma.done [#allocation18], 16
        $region140: #{tpu_custom_call.1} parent=99 // pred_fallthru
          _
        %p852 = scmp.lt.s32.totalorder %s48, 1
        %s853 = scalar_select %p852, %s48, 1
        %s854 = smul.addr %s853, 16
        %s855 = smul.addr %s854, 4
        %s856 = scalar_lea.vmem %s0, %s855
        %p857 = pneg %p69
        %p858 = pneg %p66
        %p859 = scmp.lt.s32.totalorder %s48, 1
        %s860 = scalar_select %p859, %s48, 1
        %s861 = smul.addr %s860, 16
        %s862 = smul.addr %s861, 4
        %s863 = scalar_lea.vmem %s1, %s862
        %p864 = pneg %p95
        %p865 = pneg %p92
        %s866 = sand.u32 %s108, 1
        %s867 = scalar_lea.sflag [#allocation3], %s866
        %s868 = sand.u32 %s108, 1
        %s869 = smul.addr %s868, 32
        %s870 = scalar_lea.vmem [#allocation2], %s869
        %p871 = pneg %p121
        %p872 = pneg %p118
        %s873 = sand.u32 %s48, 1
        %s874 = scalar_lea.sflag [#allocation6], %s873
        %s875 = sand.u32 %s134, 1
        %s876 = smul.addr %s875, 20
        %s877 = scalar_lea.vmem [#allocation5], %s876
        %p878 = pneg %p147
        %p879 = pneg %p144
        %s880 = sand.u32 %s48, 1
        %s881 = scalar_lea.sflag [#allocation6], %s880
        %s882 = sand.u32 %s160, 1
        %s883 = smul.addr %s882, 32
        %s884 = scalar_lea.vmem [#allocation7], %s883
        %p885 = pneg %p173
        %p886 = pneg %p170
        %s887 = sand.u32 %s48, 1
        %s888 = scalar_lea.sflag [#allocation9], %s887
        %s889 = sand.u32 %s186, 1
        %s890 = smul.addr %s889, 32
        %s891 = scalar_lea.vmem [#allocation8], %s890
        %p892 = pneg %p199
        %p893 = pneg %p196
        %s894 = sand.u32 %s48, 1
        %s895 = scalar_lea.sflag [#allocation9], %s894
        %s896 = sand.u32 %s212, 1
        %s897 = smul.addr %s896, 20
        %s898 = scalar_lea.vmem [#allocation10], %s897
        %p899 = pneg %p225
        %p900 = pneg %p222
        %s901 = sand.u32 %s48, 1
        %s902 = scalar_lea.sflag [#allocation12], %s901
        %s903 = sand.u32 %s238, 1
        %s904 = smul.addr %s903, 20
        %s905 = scalar_lea.vmem [#allocation11], %s904
        %p906 = pneg %p251
        %p907 = pneg %p248
        %s908 = sand.u32 %s48, 1
        %s909 = scalar_lea.sflag [#allocation12], %s908
        %s910 = sand.u32 %s264, 1
        %s911 = smul.addr %s910, 2
        %s912 = scalar_lea.vmem [#allocation13], %s911
        %p913 = pneg %p277
        %p914 = pneg %p274
        %p915 = pneg %p298
        %p916 = pneg %p295
        %p917 = pneg %p319
        %p918 = pneg %p316
        %p919 = pneg %p340
        %p920 = pneg %p337
        %p921 = pneg %p361
        %p922 = pneg %p358
        %p923 = pneg %p382
        %p924 = pneg %p379
        %p925 = pneg %p403
        %p926 = pneg %p400
        %p927 = pneg %p424
        %p928 = pneg %p421
        %p929 = pneg %p445
        %p930 = pneg %p442
        %p931 = pneg %p466
        %p932 = pneg %p463
        %p933 = pneg %p487
        %p934 = pneg %p484
        %p935 = pneg %p508
        %p936 = pneg %p505
        %p937 = pneg %p534
        %p938 = pneg %p531
        %s939 = sand.u32 %s521, 1
        %s940 = scalar_lea.sflag [#allocation4], %s939
        %s941 = sand.u32 %s521, 1
        %s942 = smul.addr %s941, 4
        %s943 = scalar_lea.vmem [#allocation19], %s942
        %p944 = scmp.lt.s32.totalorder %s48, 1
        %s945 = scalar_select %p944, %s48, 1
        %s946 = smul.addr %s945, 16
        %s947 = smul.addr %s946, 4
        %s948 = scalar_lea.vmem %s0, %s947
        %p949 = scmp.lt.s32.totalorder %s48, 1
        %s950 = scalar_select %p949, %s48, 1
        %s951 = smul.addr %s950, 16
        %s952 = smul.addr %s951, 4
        %s953 = scalar_lea.vmem %s1, %s952
        %v955 = vld [vmem:[%s953] sm:$0xf]
        %v956 = vld [vmem:[%s953 + $0x4] sm:$0xf]
        %v957 = vld [vmem:[%s953 + $0x8] sm:$0xf]
        %v958 = vld [vmem:[%s953 + $0xc] sm:$0xf]
        %v959 = vld [vmem:[%s953 + $0x10] sm:$0xf]
        %v960 = vld [vmem:[%s953 + $0x14] sm:$0xf]
        %v961 = vld [vmem:[%s953 + $0x18] sm:$0xf]
        %v962 = vld [vmem:[%s953 + $0x1c] sm:$0xf]
        %v963 = vld [vmem:[%s953 + $0x20] sm:$0xf]
        %v964 = vld [vmem:[%s953 + $0x24] sm:$0xf]
        %v965 = vld [vmem:[%s953 + $0x28] sm:$0xf]
        %v966 = vld [vmem:[%s953 + $0x2c] sm:$0xf]
        %v967 = vld [vmem:[%s953 + $0x30] sm:$0xf]
        %v968 = vld [vmem:[%s953 + $0x34] sm:$0xf]
        %v969 = vld [vmem:[%s953 + $0x38] sm:$0xf]
        %v970 = vld [vmem:[%s953 + $0x3c] sm:$0xf]
        %v971 = vld [vmem:[%s948] sm:$0xf]
        %v972 = vld [vmem:[%s948 + $0x4] sm:$0xf]
        %v973 = vld [vmem:[%s948 + $0x8] sm:$0xf]
        %v974 = vld [vmem:[%s948 + $0xc] sm:$0xf]
        %v975 = vld [vmem:[%s948 + $0x10] sm:$0xf]
        %v976 = vld [vmem:[%s948 + $0x14] sm:$0xf]
        %v977 = vld [vmem:[%s948 + $0x18] sm:$0xf]
        %v978 = vld [vmem:[%s948 + $0x1c] sm:$0xf]
        %v979 = vld [vmem:[%s948 + $0x20] sm:$0xf]
        %v980 = vld [vmem:[%s948 + $0x24] sm:$0xf]
        %v981 = vld [vmem:[%s948 + $0x28] sm:$0xf]
        %v982 = vld [vmem:[%s948 + $0x2c] sm:$0xf]
        %v983 = vld [vmem:[%s948 + $0x30] sm:$0xf]
        %v984 = vld [vmem:[%s948 + $0x34] sm:$0xf]
        %v985 = vld [vmem:[%s948 + $0x38] sm:$0xf]
        %v986 = vld [vmem:[%s948 + $0x3c] sm:$0xf]
        %v987 = vld [vmem:[#allocation14] sm:$0xf]
        %v988 = vld [vmem:[#allocation16] sm:$0xf]
        %v989 = vld [vmem:[%s11] sm:$0x1]
        %v1006 = vunpack.c.l.b16 %v955
        %v1007 = vunpack.c.l.b16 %v956
        %v1008 = vunpack.c.l.b16 %v957
        %v1009 = vunpack.c.l.b16 %v958
        %v1010 = vunpack.c.l.b16 %v959
        %v1011 = vunpack.c.l.b16 %v960
        %v1012 = vunpack.c.l.b16 %v961
        %v1013 = vunpack.c.l.b16 %v962
        %v1014 = vunpack.c.l.b16 %v963
        %v1015 = vunpack.c.l.b16 %v964
        %v1016 = vunpack.c.l.b16 %v965
        %v1017 = vunpack.c.l.b16 %v966
        %v1018 = vunpack.c.l.b16 %v967
        %v1019 = vunpack.c.l.b16 %v968
        %v1020 = vunpack.c.l.b16 %v969
        %v1021 = vunpack.c.l.b16 %v970
        %v1022 = vpack.c.b16 %v1007, %v1006
        %v1023 = vpack.c.b16 %v1009, %v1008
        %v1024 = vpack.c.b16 %v1011, %v1010
        %v1025 = vpack.c.b16 %v1013, %v1012
        %v1026 = vpack.c.b16 %v1015, %v1014
        %v1027 = vpack.c.b16 %v1017, %v1016
        %v1028 = vpack.c.b16 %v1019, %v1018
        %v1029 = vpack.c.b16 %v1021, %v1020
        %v1054 = vunpack.c.l.b16 %v971
        %v1055 = vunpack.c.l.b16 %v972
        %v1056 = vunpack.c.l.b16 %v973
        %v1057 = vunpack.c.l.b16 %v974
        %v1058 = vunpack.c.l.b16 %v975
        %v1059 = vunpack.c.l.b16 %v976
        %v1060 = vunpack.c.l.b16 %v977
        %v1061 = vunpack.c.l.b16 %v978
        %v1062 = vunpack.c.l.b16 %v979
        %v1063 = vunpack.c.l.b16 %v980
        %v1064 = vunpack.c.l.b16 %v981
        %v1065 = vunpack.c.l.b16 %v982
        %v1066 = vunpack.c.l.b16 %v983
        %v1067 = vunpack.c.l.b16 %v984
        %v1068 = vunpack.c.l.b16 %v985
        %v1069 = vunpack.c.l.b16 %v986
        %v1070 = vpack.c.b16 %v1055, %v1054
        %v1071 = vpack.c.b16 %v1057, %v1056
        %v1072 = vpack.c.b16 %v1059, %v1058
        %v1073 = vpack.c.b16 %v1061, %v1060
        %v1074 = vpack.c.b16 %v1063, %v1062
        %v1075 = vpack.c.b16 %v1065, %v1064
        %v1076 = vpack.c.b16 %v1067, %v1066
        %v1077 = vpack.c.b16 %v1069, %v1068
        %1086 = vmatprep.subr.bf16.mxu0 0
        %1087 = vmatpush1.bf16.msra.mxu0 %v1077
        %1088 = vmatprep.subr.bf16.mxu0 0
        %1089 = vmatpush1.bf16.msra.mxu0 %v1076
        %1090 = vmatprep.subr.bf16.mxu0 0
        %1091 = vmatpush1.bf16.msra.mxu0 %v1075
        %1092 = vmatprep.subr.bf16.mxu0 0
        %1093 = vmatpush1.bf16.msra.mxu0 %v1074
        %1094 = vmatprep.subr.bf16.mxu0 0
        %1095 = vmatpush1.bf16.msra.mxu0 %v1073
        %1096 = vmatprep.subr.bf16.mxu0 0
        %1097 = vmatpush1.bf16.msra.mxu0 %v1072
        %1098 = vmatprep.subr.bf16.mxu0 0
        %1099 = vmatpush1.bf16.msra.mxu0 %v1071
        %1100 = vmatprep.subr.bf16.mxu0 0
        %1101 = vmatpush1.bf16.msra.mxu0 %v1070
        %1102 = vmatprep.subr.bf16.mxu0 0
        %1103 = vmatpush2.bf16.msra.mxu0 0
        %1104 = vmatprep.subr.bf16.mxu0 0
        %1105 = vmatpush2.bf16.msra.mxu0 0
        %1106 = vmatprep.subr.bf16.mxu0 0
        %1107 = vmatpush2.bf16.msra.mxu0 0
        %1108 = vmatprep.subr.bf16.mxu0 0
        %1109 = vmatpush2.bf16.msra.mxu0 0
        %1110 = vmatprep.subr.bf16.mxu0 0
        %1111 = vmatpush2.bf16.msra.mxu0 0
        %1112 = vmatprep.subr.bf16.mxu0 0
        %1113 = vmatpush2.bf16.msra.mxu0 0
        %1114 = vmatprep.subr.bf16.mxu0 0
        %1115 = vmatpush2.bf16.msra.mxu0 0
        %1116 = vmatprep.subr.bf16.mxu0 0
        %1117 = vmatpush2.bf16.msra.mxu0 0
        %1118 = vmatprep.mubr.bf16.mxu0 0
        %1119 = vmatmul.mubr.bf16.gmra.mxu0 %v1022
        %v1120 = vpop.f32.mrf.mxu0
        %v1121 = vadd.f32 0.0, %v1120
        %v1122 = vpop.f32.mrf.mxu0
        %v1123 = vpop.f32.mrf.mxu0
        %v1124 = vadd.f32 0.0, %v1123
        %v1125 = vpop.f32.mrf.mxu0
        %1126 = vmatprep.mubr.bf16.mxu0 0
        %1127 = vmatmul.mubr.bf16.gmra.mxu0 %v1023
        %v1128 = vpop.f32.mrf.mxu0
        %v1129 = vadd.f32 0.0, %v1128
        %v1130 = vpop.f32.mrf.mxu0
        %v1131 = vpop.f32.mrf.mxu0
        %v1132 = vadd.f32 0.0, %v1131
        %v1133 = vpop.f32.mrf.mxu0
        %1134 = vmatprep.mubr.bf16.mxu0 0
        %1135 = vmatmul.mubr.bf16.gmra.mxu0 %v1024
        %v1136 = vpop.f32.mrf.mxu0
        %v1137 = vadd.f32 0.0, %v1136
        %v1138 = vpop.f32.mrf.mxu0
        %v1139 = vpop.f32.mrf.mxu0
        %v1140 = vadd.f32 0.0, %v1139
        %v1141 = vpop.f32.mrf.mxu0
        %1142 = vmatprep.mubr.bf16.mxu0 0
        %1143 = vmatmul.mubr.bf16.gmra.mxu0 %v1025
        %v1144 = vpop.f32.mrf.mxu0
        %v1145 = vadd.f32 0.0, %v1144
        %v1146 = vpop.f32.mrf.mxu0
        %v1147 = vpop.f32.mrf.mxu0
        %v1148 = vadd.f32 0.0, %v1147
        %v1149 = vpop.f32.mrf.mxu0
        %1150 = vmatprep.mubr.bf16.mxu0 0
        %1151 = vmatmul.mubr.bf16.gmra.mxu0 %v1026
        %v1152 = vpop.f32.mrf.mxu0
        %v1153 = vadd.f32 0.0, %v1152
        %v1154 = vpop.f32.mrf.mxu0
        %v1155 = vpop.f32.mrf.mxu0
        %v1156 = vadd.f32 0.0, %v1155
        %v1157 = vpop.f32.mrf.mxu0
        %1158 = vmatprep.mubr.bf16.mxu0 0
        %1159 = vmatmul.mubr.bf16.gmra.mxu0 %v1027
        %v1160 = vpop.f32.mrf.mxu0
        %v1161 = vadd.f32 0.0, %v1160
        %v1162 = vpop.f32.mrf.mxu0
        %v1163 = vpop.f32.mrf.mxu0
        %v1164 = vadd.f32 0.0, %v1163
        %v1165 = vpop.f32.mrf.mxu0
        %1166 = vmatprep.mubr.bf16.mxu0 0
        %1167 = vmatmul.mubr.bf16.gmra.mxu0 %v1028
        %v1168 = vpop.f32.mrf.mxu0
        %v1169 = vadd.f32 0.0, %v1168
        %v1170 = vpop.f32.mrf.mxu0
        %v1171 = vpop.f32.mrf.mxu0
        %v1172 = vadd.f32 0.0, %v1171
        %v1173 = vpop.f32.mrf.mxu0
        %1174 = vmatprep.mubr.bf16.mxu0 0
        %1175 = vmatmul.mubr.bf16.gmra.mxu0 %v1029
        %v1176 = vpop.f32.mrf.mxu0
        %v1177 = vadd.f32 0.0, %v1176
        %v1178 = vpop.f32.mrf.mxu0
        %v1179 = vpop.f32.mrf.mxu0
        %v1180 = vadd.f32 0.0, %v1179
        %v1181 = vpop.f32.mrf.mxu0
        %1182 = vdwg.mxu0
        %v1183 = vpack.c.bf16 %v1124, %v1121
        %v1184 = vpack.c.bf16 %v1132, %v1129
        %v1185 = vpack.c.bf16 %v1140, %v1137
        %v1186 = vpack.c.bf16 %v1148, %v1145
        %v1187 = vpack.c.bf16 %v1156, %v1153
        %v1188 = vpack.c.bf16 %v1164, %v1161
        %v1189 = vpack.c.bf16 %v1172, %v1169
        %v1190 = vpack.c.bf16 %v1180, %v1177
        %vm1191 = vcmask 64512
        %v1193 = vsel %vm1191, %v1183, 0
        %v1196 = vsel %vm1191, %v1184, 0
        %v1199 = vsel %vm1191, %v1185, 0
        %v1202 = vsel %vm1191, %v1186, 0
        %v1205 = vsel %vm1191, %v1187, 0
        %v1208 = vsel %vm1191, %v1188, 0
        %v1211 = vsel %vm1191, %v1189, 0
        %v1214 = vsel %vm1191, %v1190, 0
        %vm1216 = vcmask 1043456
        %v1218 = vsel %vm1216, %v988, 0
        %1220 = vmatprep.subr.bf16.mxu0 0
        %1221 = vmatpush1.bf16.msra.mxu0 0
        %1222 = vmatprep.subr.bf16.mxu0 0
        %1223 = vmatpush1.bf16.msra.mxu0 0
        %1224 = vmatprep.subr.bf16.mxu0 0
        %1225 = vmatpush1.bf16.msra.mxu0 0
        %1226 = vmatprep.subr.bf16.mxu0 0
        %1227 = vmatpush1.bf16.msra.mxu0 0
        %1228 = vmatprep.subr.bf16.mxu0 0
        %1229 = vmatpush1.bf16.msra.mxu0 0
        %1230 = vmatprep.subr.bf16.mxu0 0
        %1231 = vmatpush1.bf16.msra.mxu0 0
        %1232 = vmatprep.subr.bf16.mxu0 0
        %1233 = vmatpush1.bf16.msra.mxu0 0
        %1234 = vmatprep.subr.bf16.mxu0 0
        %1235 = vmatpush1.bf16.msra.mxu0 %v1218
        %1236 = vmatprep.subr.bf16.mxu0 0
        %1237 = vmatpush2.bf16.msra.mxu0 0
        %1238 = vmatprep.subr.bf16.mxu0 0
        %1239 = vmatpush2.bf16.msra.mxu0 0
        %1240 = vmatprep.subr.bf16.mxu0 0
        %1241 = vmatpush2.bf16.msra.mxu0 0
        %1242 = vmatprep.subr.bf16.mxu0 0
        %1243 = vmatpush2.bf16.msra.mxu0 0
        %1244 = vmatprep.subr.bf16.mxu0 0
        %1245 = vmatpush2.bf16.msra.mxu0 0
        %1246 = vmatprep.subr.bf16.mxu0 0
        %1247 = vmatpush2.bf16.msra.mxu0 0
        %1248 = vmatprep.subr.bf16.mxu0 0
        %1249 = vmatpush2.bf16.msra.mxu0 0
        %1250 = vmatprep.subr.bf16.mxu0 0
        %1251 = vmatpush2.bf16.msra.mxu0 0
        %1252 = vmatprep.mubr.bf16.mxu0 0
        %1253 = vmatmul.mubr.bf16.gmra.mxu0 %v1193
        %v1254 = vpop.f32.mrf.mxu0
        %v1255 = vadd.f32 0.0, %v1254
        %v1256 = vpop.f32.mrf.mxu0
        %v1257 = vpop.f32.mrf.mxu0
        %v1258 = vadd.f32 0.0, %v1257
        %v1259 = vpop.f32.mrf.mxu0
        %1260 = vmatprep.mubr.bf16.mxu0 0
        %1261 = vmatmul.mubr.bf16.gmra.mxu0 %v1196
        %v1262 = vpop.f32.mrf.mxu0
        %v1263 = vadd.f32 0.0, %v1262
        %v1264 = vpop.f32.mrf.mxu0
        %v1265 = vpop.f32.mrf.mxu0
        %v1266 = vadd.f32 0.0, %v1265
        %v1267 = vpop.f32.mrf.mxu0
        %1268 = vmatprep.mubr.bf16.mxu0 0
        %1269 = vmatmul.mubr.bf16.gmra.mxu0 %v1199
        %v1270 = vpop.f32.mrf.mxu0
        %v1271 = vadd.f32 0.0, %v1270
        %v1272 = vpop.f32.mrf.mxu0
        %v1273 = vpop.f32.mrf.mxu0
        %v1274 = vadd.f32 0.0, %v1273
        %v1275 = vpop.f32.mrf.mxu0
        %1276 = vmatprep.mubr.bf16.mxu0 0
        %1277 = vmatmul.mubr.bf16.gmra.mxu0 %v1202
        %v1278 = vpop.f32.mrf.mxu0
        %v1279 = vadd.f32 0.0, %v1278
        %v1280 = vpop.f32.mrf.mxu0
        %v1281 = vpop.f32.mrf.mxu0
        %v1282 = vadd.f32 0.0, %v1281
        %v1283 = vpop.f32.mrf.mxu0
        %1284 = vmatprep.mubr.bf16.mxu0 0
        %1285 = vmatmul.mubr.bf16.gmra.mxu0 %v1205
        %v1286 = vpop.f32.mrf.mxu0
        %v1287 = vadd.f32 0.0, %v1286
        %v1288 = vpop.f32.mrf.mxu0
        %v1289 = vpop.f32.mrf.mxu0
        %v1290 = vadd.f32 0.0, %v1289
        %v1291 = vpop.f32.mrf.mxu0
        %1292 = vmatprep.mubr.bf16.mxu0 0
        %1293 = vmatmul.mubr.bf16.gmra.mxu0 %v1208
        %v1294 = vpop.f32.mrf.mxu0
        %v1295 = vadd.f32 0.0, %v1294
        %v1296 = vpop.f32.mrf.mxu0
        %v1297 = vpop.f32.mrf.mxu0
        %v1298 = vadd.f32 0.0, %v1297
        %v1299 = vpop.f32.mrf.mxu0
        %1300 = vmatprep.mubr.bf16.mxu0 0
        %1301 = vmatmul.mubr.bf16.gmra.mxu0 %v1211
        %v1302 = vpop.f32.mrf.mxu0
        %v1303 = vadd.f32 0.0, %v1302
        %v1304 = vpop.f32.mrf.mxu0
        %v1305 = vpop.f32.mrf.mxu0
        %v1306 = vadd.f32 0.0, %v1305
        %v1307 = vpop.f32.mrf.mxu0
        %1308 = vmatprep.mubr.bf16.mxu0 0
        %1309 = vmatmul.mubr.bf16.gmra.mxu0 %v1214
        %v1310 = vpop.f32.mrf.mxu0
        %v1311 = vadd.f32 0.0, %v1310
        %v1312 = vpop.f32.mrf.mxu0
        %v1313 = vpop.f32.mrf.mxu0
        %v1314 = vadd.f32 0.0, %v1313
        %v1315 = vpop.f32.mrf.mxu0
        %1316 = vdwg.mxu0
        %v1318 = vsel %vm1191, %v1070, 0
        %v1321 = vsel %vm1191, %v1071, 0
        %v1324 = vsel %vm1191, %v1072, 0
        %v1327 = vsel %vm1191, %v1073, 0
        %v1330 = vsel %vm1191, %v1074, 0
        %v1333 = vsel %vm1191, %v1075, 0
        %v1336 = vsel %vm1191, %v1076, 0
        %v1339 = vsel %vm1191, %v1077, 0
        %v1342 = vsel %vm1216, %v987, 0
        %1344 = vmatprep.subr.bf16.mxu0 0
        %1345 = vmatpush1.bf16.msra.mxu0 0
        %1346 = vmatprep.subr.bf16.mxu0 0
        %1347 = vmatpush1.bf16.msra.mxu0 0
        %1348 = vmatprep.subr.bf16.mxu0 0
        %1349 = vmatpush1.bf16.msra.mxu0 0
        %1350 = vmatprep.subr.bf16.mxu0 0
        %1351 = vmatpush1.bf16.msra.mxu0 0
        %1352 = vmatprep.subr.bf16.mxu0 0
        %1353 = vmatpush1.bf16.msra.mxu0 0
        %1354 = vmatprep.subr.bf16.mxu0 0
        %1355 = vmatpush1.bf16.msra.mxu0 0
        %1356 = vmatprep.subr.bf16.mxu0 0
        %1357 = vmatpush1.bf16.msra.mxu0 0
        %1358 = vmatprep.subr.bf16.mxu0 0
        %1359 = vmatpush1.bf16.msra.mxu0 %v1342
        %1360 = vmatprep.subr.bf16.mxu0 0
        %1361 = vmatpush2.bf16.msra.mxu0 0
        %1362 = vmatprep.subr.bf16.mxu0 0
        %1363 = vmatpush2.bf16.msra.mxu0 0
        %1364 = vmatprep.subr.bf16.mxu0 0
        %1365 = vmatpush2.bf16.msra.mxu0 0
        %1366 = vmatprep.subr.bf16.mxu0 0
        %1367 = vmatpush2.bf16.msra.mxu0 0
        %1368 = vmatprep.subr.bf16.mxu0 0
        %1369 = vmatpush2.bf16.msra.mxu0 0
        %1370 = vmatprep.subr.bf16.mxu0 0
        %1371 = vmatpush2.bf16.msra.mxu0 0
        %1372 = vmatprep.subr.bf16.mxu0 0
        %1373 = vmatpush2.bf16.msra.mxu0 0
        %1374 = vmatprep.subr.bf16.mxu0 0
        %1375 = vmatpush2.bf16.msra.mxu0 0
        %1376 = vmatprep.mubr.bf16.mxu0 0
        %1377 = vmatmul.mubr.bf16.gmra.mxu0 %v1318
        %v1378 = vpop.f32.mrf.mxu0
        %v1379 = vadd.f32 %v1255, %v1378
        %v1380 = vpop.f32.mrf.mxu0
        %v1381 = vpop.f32.mrf.mxu0
        %v1382 = vadd.f32 %v1258, %v1381
        %v1383 = vpop.f32.mrf.mxu0
        %1384 = vmatprep.mubr.bf16.mxu0 0
        %1385 = vmatmul.mubr.bf16.gmra.mxu0 %v1321
        %v1386 = vpop.f32.mrf.mxu0
        %v1387 = vadd.f32 %v1263, %v1386
        %v1388 = vpop.f32.mrf.mxu0
        %v1389 = vpop.f32.mrf.mxu0
        %v1390 = vadd.f32 %v1266, %v1389
        %v1391 = vpop.f32.mrf.mxu0
        %1392 = vmatprep.mubr.bf16.mxu0 0
        %1393 = vmatmul.mubr.bf16.gmra.mxu0 %v1324
        %v1394 = vpop.f32.mrf.mxu0
        %v1395 = vadd.f32 %v1271, %v1394
        %v1396 = vpop.f32.mrf.mxu0
        %v1397 = vpop.f32.mrf.mxu0
        %v1398 = vadd.f32 %v1274, %v1397
        %v1399 = vpop.f32.mrf.mxu0
        %1400 = vmatprep.mubr.bf16.mxu0 0
        %1401 = vmatmul.mubr.bf16.gmra.mxu0 %v1327
        %v1402 = vpop.f32.mrf.mxu0
        %v1403 = vadd.f32 %v1279, %v1402
        %v1404 = vpop.f32.mrf.mxu0
        %v1405 = vpop.f32.mrf.mxu0
        %v1406 = vadd.f32 %v1282, %v1405
        %v1407 = vpop.f32.mrf.mxu0
        %1408 = vmatprep.mubr.bf16.mxu0 0
        %1409 = vmatmul.mubr.bf16.gmra.mxu0 %v1330
        %v1410 = vpop.f32.mrf.mxu0
        %v1411 = vadd.f32 %v1287, %v1410
        %v1412 = vpop.f32.mrf.mxu0
        %v1413 = vpop.f32.mrf.mxu0
        %v1414 = vadd.f32 %v1290, %v1413
        %v1415 = vpop.f32.mrf.mxu0
        %1416 = vmatprep.mubr.bf16.mxu0 0
        %1417 = vmatmul.mubr.bf16.gmra.mxu0 %v1333
        %v1418 = vpop.f32.mrf.mxu0
        %v1419 = vadd.f32 %v1295, %v1418
        %v1420 = vpop.f32.mrf.mxu0
        %v1421 = vpop.f32.mrf.mxu0
        %v1422 = vadd.f32 %v1298, %v1421
        %v1423 = vpop.f32.mrf.mxu0
        %1424 = vmatprep.mubr.bf16.mxu0 0
        %1425 = vmatmul.mubr.bf16.gmra.mxu0 %v1336
        %v1426 = vpop.f32.mrf.mxu0
        %v1427 = vadd.f32 %v1303, %v1426
        %v1428 = vpop.f32.mrf.mxu0
        %v1429 = vpop.f32.mrf.mxu0
        %v1430 = vadd.f32 %v1306, %v1429
        %v1431 = vpop.f32.mrf.mxu0
        %1432 = vmatprep.mubr.bf16.mxu0 0
        %1433 = vmatmul.mubr.bf16.gmra.mxu0 %v1339
        %v1434 = vpop.f32.mrf.mxu0
        %v1435 = vadd.f32 %v1311, %v1434
        %v1436 = vpop.f32.mrf.mxu0
        %v1437 = vpop.f32.mrf.mxu0
        %v1438 = vadd.f32 %v1314, %v1437
        %v1439 = vpop.f32.mrf.mxu0
        %1440 = vdwg.mxu0
        %v1442 = vlaneseq
        %v1443 = vshrl.u32 %v1442, 7
        %v1444 = vsub.s32 0, %v1443
        %v1445 = vrot.slane %v989, %v1444
        %v1447 = vadd.f32 %v1379, %v1445
        %v1448 = vadd.f32 %v1382, %v1445
        %v1449 = vadd.f32 %v1387, %v1445
        %v1450 = vadd.f32 %v1390, %v1445
        %v1451 = vadd.f32 %v1395, %v1445
        %v1452 = vadd.f32 %v1398, %v1445
        %v1453 = vadd.f32 %v1403, %v1445
        %v1454 = vadd.f32 %v1406, %v1445
        %v1455 = vadd.f32 %v1411, %v1445
        %v1456 = vadd.f32 %v1414, %v1445
        %v1457 = vadd.f32 %v1419, %v1445
        %v1458 = vadd.f32 %v1422, %v1445
        %v1459 = vadd.f32 %v1427, %v1445
        %v1460 = vadd.f32 %v1430, %v1445
        %v1461 = vadd.f32 %v1435, %v1445
        %v1462 = vadd.f32 %v1438, %v1445
        %v1463 = vmax.f32 %v1447, 0.0
        %v1464 = vmax.f32 %v1448, 0.0
        %v1465 = vmax.f32 %v1449, 0.0
        %v1466 = vmax.f32 %v1450, 0.0
        %v1467 = vmax.f32 %v1451, 0.0
        %v1468 = vmax.f32 %v1452, 0.0
        %v1469 = vmax.f32 %v1453, 0.0
        %v1470 = vmax.f32 %v1454, 0.0
        %v1471 = vmax.f32 %v1455, 0.0
        %v1472 = vmax.f32 %v1456, 0.0
        %v1473 = vmax.f32 %v1457, 0.0
        %v1474 = vmax.f32 %v1458, 0.0
        %v1475 = vmax.f32 %v1459, 0.0
        %v1476 = vmax.f32 %v1460, 0.0
        %v1477 = vmax.f32 %v1461, 0.0
        %v1478 = vmax.f32 %v1462, 0.0
        %v1479 = vand.u32 2147483647, %v1447
        %v1480 = vand.u32 2147483647, %v1448
        %v1481 = vand.u32 2147483647, %v1449
        %v1482 = vand.u32 2147483647, %v1450
        %v1483 = vand.u32 2147483647, %v1451
        %v1484 = vand.u32 2147483647, %v1452
        %v1485 = vand.u32 2147483647, %v1453
        %v1486 = vand.u32 2147483647, %v1454
        %v1487 = vand.u32 2147483647, %v1455
        %v1488 = vand.u32 2147483647, %v1456
        %v1489 = vand.u32 2147483647, %v1457
        %v1490 = vand.u32 2147483647, %v1458
        %v1491 = vand.u32 2147483647, %v1459
        %v1492 = vand.u32 2147483647, %v1460
        %v1493 = vand.u32 2147483647, %v1461
        %v1494 = vand.u32 2147483647, %v1462
        %v1495 = vsub.f32 0.0, %v1479
        %v1496 = vsub.f32 0.0, %v1480
        %v1497 = vsub.f32 0.0, %v1481
        %v1498 = vsub.f32 0.0, %v1482
        %v1499 = vsub.f32 0.0, %v1483
        %v1500 = vsub.f32 0.0, %v1484
        %v1501 = vsub.f32 0.0, %v1485
        %v1502 = vsub.f32 0.0, %v1486
        %v1503 = vsub.f32 0.0, %v1487
        %v1504 = vsub.f32 0.0, %v1488
        %v1505 = vsub.f32 0.0, %v1489
        %v1506 = vsub.f32 0.0, %v1490
        %v1507 = vsub.f32 0.0, %v1491
        %v1508 = vsub.f32 0.0, %v1492
        %v1509 = vsub.f32 0.0, %v1493
        %v1510 = vsub.f32 0.0, %v1494
        %v1511 = vmul.f32 %v1495, 1.442695
        %v1512 = vpow.pop %v1511
        %v1513 = vmul.f32 %v1496, 1.442695
        %v1514 = vpow.pop %v1513
        %v1515 = vmul.f32 %v1497, 1.442695
        %v1516 = vpow.pop %v1515
        %v1517 = vmul.f32 %v1498, 1.442695
        %v1518 = vpow.pop %v1517
        %v1519 = vmul.f32 %v1499, 1.442695
        %v1520 = vpow.pop %v1519
        %v1521 = vmul.f32 %v1500, 1.442695
        %v1522 = vpow.pop %v1521
        %v1523 = vmul.f32 %v1501, 1.442695
        %v1524 = vpow.pop %v1523
        %v1525 = vmul.f32 %v1502, 1.442695
        %v1526 = vpow.pop %v1525
        %v1527 = vmul.f32 %v1503, 1.442695
        %v1528 = vpow.pop %v1527
        %v1529 = vmul.f32 %v1504, 1.442695
        %v1530 = vpow.pop %v1529
        %v1531 = vmul.f32 %v1505, 1.442695
        %v1532 = vpow.pop %v1531
        %v1533 = vmul.f32 %v1506, 1.442695
        %v1534 = vpow.pop %v1533
        %v1535 = vmul.f32 %v1507, 1.442695
        %v1536 = vpow.pop %v1535
        %v1537 = vmul.f32 %v1508, 1.442695
        %v1538 = vpow.pop %v1537
        %v1539 = vmul.f32 %v1509, 1.442695
        %v1540 = vpow.pop %v1539
        %v1541 = vmul.f32 %v1510, 1.442695
        %v1542 = vpow.pop %v1541
        %v1543 = vadd.f32 %v1512, 1.0
        %v1544 = vadd.f32 %v1514, 1.0
        %v1545 = vadd.f32 %v1516, 1.0
        %v1546 = vadd.f32 %v1518, 1.0
        %v1547 = vadd.f32 %v1520, 1.0
        %v1548 = vadd.f32 %v1522, 1.0
        %v1549 = vadd.f32 %v1524, 1.0
        %v1550 = vadd.f32 %v1526, 1.0
        %v1551 = vadd.f32 %v1528, 1.0
        %v1552 = vadd.f32 %v1530, 1.0
        %v1553 = vadd.f32 %v1532, 1.0
        %v1554 = vadd.f32 %v1534, 1.0
        %v1555 = vadd.f32 %v1536, 1.0
        %v1556 = vadd.f32 %v1538, 1.0
        %v1557 = vadd.f32 %v1540, 1.0
        %v1558 = vadd.f32 %v1542, 1.0
        %v1559 = vlog2.pop %v1543
        %v1560 = vmul.f32 %v1559, 0.6931472
        %v1561 = vlog2.pop %v1544
        %v1562 = vmul.f32 %v1561, 0.6931472
        %v1563 = vlog2.pop %v1545
        %v1564 = vmul.f32 %v1563, 0.6931472
        %v1565 = vlog2.pop %v1546
        %v1566 = vmul.f32 %v1565, 0.6931472
        %v1567 = vlog2.pop %v1547
        %v1568 = vmul.f32 %v1567, 0.6931472
        %v1569 = vlog2.pop %v1548
        %v1570 = vmul.f32 %v1569, 0.6931472
        %v1571 = vlog2.pop %v1549
        %v1572 = vmul.f32 %v1571, 0.6931472
        %v1573 = vlog2.pop %v1550
        %v1574 = vmul.f32 %v1573, 0.6931472
        %v1575 = vlog2.pop %v1551
        %v1576 = vmul.f32 %v1575, 0.6931472
        %v1577 = vlog2.pop %v1552
        %v1578 = vmul.f32 %v1577, 0.6931472
        %v1579 = vlog2.pop %v1553
        %v1580 = vmul.f32 %v1579, 0.6931472
        %v1581 = vlog2.pop %v1554
        %v1582 = vmul.f32 %v1581, 0.6931472
        %v1583 = vlog2.pop %v1555
        %v1584 = vmul.f32 %v1583, 0.6931472
        %v1585 = vlog2.pop %v1556
        %v1586 = vmul.f32 %v1585, 0.6931472
        %v1587 = vlog2.pop %v1557
        %v1588 = vmul.f32 %v1587, 0.6931472
        %v1589 = vlog2.pop %v1558
        %v1590 = vmul.f32 %v1589, 0.6931472
        %v1591 = vadd.f32 %v1463, %v1560
        %v1592 = vadd.f32 %v1464, %v1562
        %v1593 = vadd.f32 %v1465, %v1564
        %v1594 = vadd.f32 %v1466, %v1566
        %v1595 = vadd.f32 %v1467, %v1568
        %v1596 = vadd.f32 %v1468, %v1570
        %v1597 = vadd.f32 %v1469, %v1572
        %v1598 = vadd.f32 %v1470, %v1574
        %v1599 = vadd.f32 %v1471, %v1576
        %v1600 = vadd.f32 %v1472, %v1578
        %v1601 = vadd.f32 %v1473, %v1580
        %v1602 = vadd.f32 %v1474, %v1582
        %v1603 = vadd.f32 %v1475, %v1584
        %v1604 = vadd.f32 %v1476, %v1586
        %v1605 = vadd.f32 %v1477, %v1588
        %v1606 = vadd.f32 %v1478, %v1590
        %v1607 = vld [vmem:[%s799] sm:$0xf]
        %v1608 = vld [vmem:[%s799 + $0x4] sm:$0xf]
        %v1609 = vld [vmem:[%s799 + $0x8] sm:$0xf]
        %v1610 = vld [vmem:[%s799 + $0xc] sm:$0xf]
        %v1611 = vld [vmem:[%s799 + $0x10] sm:$0xf]
        %v1612 = vld [vmem:[%s799 + $0x14] sm:$0xf]
        %v1613 = vld [vmem:[%s799 + $0x18] sm:$0xf]
        %v1614 = vld [vmem:[%s799 + $0x1c] sm:$0xf]
        %v1615 = vld [vmem:[%s808] sm:$0xf]
        %v1616 = vld [vmem:[%s808 + $0x4] sm:$0xf]
        %v1617 = vld [vmem:[%s808 + $0x8] sm:$0xf]
        %v1618 = vld [vmem:[%s808 + $0xc] sm:$0xf]
        %v1619 = vld [vmem:[%s808 + $0x10] sm:$0xf]
        %v1620 = vld [vmem:[%s808 + $0x14] sm:$0xf]
        %v1621 = vld [vmem:[%s808 + $0x18] sm:$0xf]
        %v1622 = vld [vmem:[%s808 + $0x1c] sm:$0xf]
        %v1623 = vpack.c.bf16 %v1592, %v1591
        %v1624 = vpack.c.bf16 %v1594, %v1593
        %v1625 = vpack.c.bf16 %v1596, %v1595
        %v1626 = vpack.c.bf16 %v1598, %v1597
        %v1627 = vpack.c.bf16 %v1600, %v1599
        %v1628 = vpack.c.bf16 %v1602, %v1601
        %v1629 = vpack.c.bf16 %v1604, %v1603
        %v1630 = vpack.c.bf16 %v1606, %v1605
        %v1639 = vunpack.c.l.b16 %v1607
        %v1640 = vunpack.c.l.b16 %v1608
        %v1641 = vunpack.c.l.b16 %v1609
        %v1642 = vunpack.c.l.b16 %v1610
        %v1643 = vunpack.c.l.b16 %v1611
        %v1644 = vunpack.c.l.b16 %v1612
        %v1645 = vunpack.c.l.b16 %v1613
        %v1646 = vunpack.c.l.b16 %v1614
        %v1647 = vpack.c.b16 %v1640, %v1639
        %v1648 = vpack.c.b16 %v1642, %v1641
        %v1649 = vpack.c.b16 %v1644, %v1643
        %v1650 = vpack.c.b16 %v1646, %v1645
        %1655 = vmatprep.subr.bf16.mxu0 0
        %1656 = vmatpush1.bf16.msra.mxu0 %v1630
        %1657 = vmatprep.subr.bf16.mxu0 0
        %1658 = vmatpush1.bf16.msra.mxu0 %v1629
        %1659 = vmatprep.subr.bf16.mxu0 0
        %1660 = vmatpush1.bf16.msra.mxu0 %v1628
        %1661 = vmatprep.subr.bf16.mxu0 0
        %1662 = vmatpush1.bf16.msra.mxu0 %v1627
        %1663 = vmatprep.subr.bf16.mxu0 0
        %1664 = vmatpush1.bf16.msra.mxu0 %v1626
        %1665 = vmatprep.subr.bf16.mxu0 0
        %1666 = vmatpush1.bf16.msra.mxu0 %v1625
        %1667 = vmatprep.subr.bf16.mxu0 0
        %1668 = vmatpush1.bf16.msra.mxu0 %v1624
        %1669 = vmatprep.subr.bf16.mxu0 0
        %1670 = vmatpush1.bf16.msra.mxu0 %v1623
        %1671 = vmatprep.subr.bf16.mxu0 0
        %1672 = vmatpush2.bf16.msra.mxu0 0
        %1673 = vmatprep.subr.bf16.mxu0 0
        %1674 = vmatpush2.bf16.msra.mxu0 0
        %1675 = vmatprep.subr.bf16.mxu0 0
        %1676 = vmatpush2.bf16.msra.mxu0 0
        %1677 = vmatprep.subr.bf16.mxu0 0
        %1678 = vmatpush2.bf16.msra.mxu0 0
        %1679 = vmatprep.subr.bf16.mxu0 0
        %1680 = vmatpush2.bf16.msra.mxu0 0
        %1681 = vmatprep.subr.bf16.mxu0 0
        %1682 = vmatpush2.bf16.msra.mxu0 0
        %1683 = vmatprep.subr.bf16.mxu0 0
        %1684 = vmatpush2.bf16.msra.mxu0 0
        %1685 = vmatprep.subr.bf16.mxu0 0
        %1686 = vmatpush2.bf16.msra.mxu0 0
        %1687 = vmatprep.mubr.bf16.mxu0 0
        %1688 = vmatmul.mubr.bf16.gmra.mxu0 %v1647
        %v1689 = vpop.f32.mrf.mxu0
        %v1690 = vadd.f32 0.0, %v1689
        %v1691 = vpop.f32.mrf.mxu0
        %v1692 = vpop.f32.mrf.mxu0
        %v1693 = vadd.f32 0.0, %v1692
        %v1694 = vpop.f32.mrf.mxu0
        %1695 = vmatprep.mubr.bf16.mxu0 0
        %1696 = vmatmul.mubr.bf16.gmra.mxu0 %v1648
        %v1697 = vpop.f32.mrf.mxu0
        %v1698 = vadd.f32 0.0, %v1697
        %v1699 = vpop.f32.mrf.mxu0
        %v1700 = vpop.f32.mrf.mxu0
        %v1701 = vadd.f32 0.0, %v1700
        %v1702 = vpop.f32.mrf.mxu0
        %1703 = vmatprep.mubr.bf16.mxu0 0
        %1704 = vmatmul.mubr.bf16.gmra.mxu0 %v1649
        %v1705 = vpop.f32.mrf.mxu0
        %v1706 = vadd.f32 0.0, %v1705
        %v1707 = vpop.f32.mrf.mxu0
        %v1708 = vpop.f32.mrf.mxu0
        %v1709 = vadd.f32 0.0, %v1708
        %v1710 = vpop.f32.mrf.mxu0
        %1711 = vmatprep.mubr.bf16.mxu0 0
        %1712 = vmatmul.mubr.bf16.gmra.mxu0 %v1650
        %v1713 = vpop.f32.mrf.mxu0
        %v1714 = vadd.f32 0.0, %v1713
        %v1715 = vpop.f32.mrf.mxu0
        %v1716 = vpop.f32.mrf.mxu0
        %v1717 = vadd.f32 0.0, %v1716
        %v1718 = vpop.f32.mrf.mxu0
        %1719 = vdwg.mxu0
        %v1728 = vunpack.c.l.b16 %v1615
        %v1729 = vunpack.c.l.b16 %v1616
        %v1730 = vunpack.c.l.b16 %v1617
        %v1731 = vunpack.c.l.b16 %v1618
        %v1732 = vunpack.c.l.b16 %v1619
        %v1733 = vunpack.c.l.b16 %v1620
        %v1734 = vunpack.c.l.b16 %v1621
        %v1735 = vunpack.c.l.b16 %v1622
        %v1736 = vpack.c.b16 %v1729, %v1728
        %v1737 = vpack.c.b16 %v1731, %v1730
        %v1738 = vpack.c.b16 %v1733, %v1732
        %v1739 = vpack.c.b16 %v1735, %v1734
        %1744 = vmatprep.subr.bf16.mxu0 0
        %1745 = vmatpush1.bf16.msra.mxu0 %v1630
        %1746 = vmatprep.subr.bf16.mxu0 0
        %1747 = vmatpush1.bf16.msra.mxu0 %v1629
        %1748 = vmatprep.subr.bf16.mxu0 0
        %1749 = vmatpush1.bf16.msra.mxu0 %v1628
        %1750 = vmatprep.subr.bf16.mxu0 0
        %1751 = vmatpush1.bf16.msra.mxu0 %v1627
        %1752 = vmatprep.subr.bf16.mxu0 0
        %1753 = vmatpush1.bf16.msra.mxu0 %v1626
        %1754 = vmatprep.subr.bf16.mxu0 0
        %1755 = vmatpush1.bf16.msra.mxu0 %v1625
        %1756 = vmatprep.subr.bf16.mxu0 0
        %1757 = vmatpush1.bf16.msra.mxu0 %v1624
        %1758 = vmatprep.subr.bf16.mxu0 0
        %1759 = vmatpush1.bf16.msra.mxu0 %v1623
        %1760 = vmatprep.subr.bf16.mxu0 0
        %1761 = vmatpush2.bf16.msra.mxu0 0
        %1762 = vmatprep.subr.bf16.mxu0 0
        %1763 = vmatpush2.bf16.msra.mxu0 0
        %1764 = vmatprep.subr.bf16.mxu0 0
        %1765 = vmatpush2.bf16.msra.mxu0 0
        %1766 = vmatprep.subr.bf16.mxu0 0
        %1767 = vmatpush2.bf16.msra.mxu0 0
        %1768 = vmatprep.subr.bf16.mxu0 0
        %1769 = vmatpush2.bf16.msra.mxu0 0
        %1770 = vmatprep.subr.bf16.mxu0 0
        %1771 = vmatpush2.bf16.msra.mxu0 0
        %1772 = vmatprep.subr.bf16.mxu0 0
        %1773 = vmatpush2.bf16.msra.mxu0 0
        %1774 = vmatprep.subr.bf16.mxu0 0
        %1775 = vmatpush2.bf16.msra.mxu0 0
        %1776 = vmatprep.mubr.bf16.mxu0 0
        %1777 = vmatmul.mubr.bf16.gmra.mxu0 %v1736
        %v1778 = vpop.f32.mrf.mxu0
        %v1779 = vadd.f32 0.0, %v1778
        %v1780 = vpop.f32.mrf.mxu0
        %v1781 = vpop.f32.mrf.mxu0
        %v1782 = vadd.f32 0.0, %v1781
        %v1783 = vpop.f32.mrf.mxu0
        %1784 = vmatprep.mubr.bf16.mxu0 0
        %1785 = vmatmul.mubr.bf16.gmra.mxu0 %v1737
        %v1786 = vpop.f32.mrf.mxu0
        %v1787 = vadd.f32 0.0, %v1786
        %v1788 = vpop.f32.mrf.mxu0
        %v1789 = vpop.f32.mrf.mxu0
        %v1790 = vadd.f32 0.0, %v1789
        %v1791 = vpop.f32.mrf.mxu0
        %1792 = vmatprep.mubr.bf16.mxu0 0
        %1793 = vmatmul.mubr.bf16.gmra.mxu0 %v1738
        %v1794 = vpop.f32.mrf.mxu0
        %v1795 = vadd.f32 0.0, %v1794
        %v1796 = vpop.f32.mrf.mxu0
        %v1797 = vpop.f32.mrf.mxu0
        %v1798 = vadd.f32 0.0, %v1797
        %v1799 = vpop.f32.mrf.mxu0
        %1800 = vmatprep.mubr.bf16.mxu0 0
        %1801 = vmatmul.mubr.bf16.gmra.mxu0 %v1739
        %v1802 = vpop.f32.mrf.mxu0
        %v1803 = vadd.f32 0.0, %v1802
        %v1804 = vpop.f32.mrf.mxu0
        %v1805 = vpop.f32.mrf.mxu0
        %v1806 = vadd.f32 0.0, %v1805
        %v1807 = vpop.f32.mrf.mxu0
        %1808 = vdwg.mxu0
        %v1809 = vmax.f32 %v1690, %v1779
        %v1810 = vmax.f32 %v1693, %v1782
        %v1811 = vmax.f32 %v1698, %v1787
        %v1812 = vmax.f32 %v1701, %v1790
        %v1813 = vmax.f32 %v1706, %v1795
        %v1814 = vmax.f32 %v1709, %v1798
        %v1815 = vmax.f32 %v1714, %v1803
        %v1816 = vmax.f32 %v1717, %v1806
        %v1817 = vld [vmem:[%s781] sm:$0xf]
        %v1818 = vld [vmem:[%s781 + $0x4] sm:$0xf]
        %v1819 = vld [vmem:[%s781 + $0x8] sm:$0xf]
        %v1820 = vld [vmem:[%s781 + $0xc] sm:$0xf]
        %v1821 = vld [vmem:[%s781 + $0x10] sm:$0xf]
        %v1822 = vld [vmem:[%s781 + $0x14] sm:$0xf]
        %v1823 = vld [vmem:[%s781 + $0x18] sm:$0xf]
        %v1824 = vld [vmem:[%s781 + $0x1c] sm:$0xf]
        %v1825 = vpack.c.bf16 %v1810, %v1809
        %v1826 = vpack.c.bf16 %v1812, %v1811
        %v1827 = vpack.c.bf16 %v1814, %v1813
        %v1828 = vpack.c.bf16 %v1816, %v1815
        %v1829 = vld [vmem:[%s12] sm:$0xf]
        %v1830 = vld [vmem:[%s12 + $0x4] sm:$0xf]
        %v1831 = vld [vmem:[%s13] sm:$0xf]
        %v1832 = vld [vmem:[%s13 + $0x4] sm:$0xf]
        %v1833 = vld [vmem:[#allocation17] sm:$0x1]
        %v1842 = vunpack.c.l.b16 %v1817
        %v1843 = vunpack.c.l.b16 %v1818
        %v1844 = vunpack.c.l.b16 %v1819
        %v1845 = vunpack.c.l.b16 %v1820
        %v1846 = vunpack.c.l.b16 %v1821
        %v1847 = vunpack.c.l.b16 %v1822
        %v1848 = vunpack.c.l.b16 %v1823
        %v1849 = vunpack.c.l.b16 %v1824
        %v1850 = vpack.c.b16 %v1843, %v1842
        %v1851 = vpack.c.b16 %v1845, %v1844
        %v1852 = vpack.c.b16 %v1847, %v1846
        %v1853 = vpack.c.b16 %v1849, %v1848
        %vm1854 = vcmask 523264
        %v1856 = vsel %vm1854, %v1850, 0
        %v1859 = vsel %vm1854, %v1851, 0
        %v1862 = vsel %vm1854, %v1852, 0
        %v1865 = vsel %vm1854, %v1853, 0
        %1867 = vmatprep.subr.bf16.mxu0 0
        %1868 = vmatpush1.bf16.msra.mxu0 0
        %1869 = vmatprep.subr.bf16.mxu0 0
        %1870 = vmatpush1.bf16.msra.mxu0 0
        %1871 = vmatprep.subr.bf16.mxu0 0
        %1872 = vmatpush1.bf16.msra.mxu0 0
        %1873 = vmatprep.subr.bf16.mxu0 0
        %1874 = vmatpush1.bf16.msra.mxu0 0
        %1875 = vmatprep.subr.bf16.mxu0 0
        %1876 = vmatpush1.bf16.msra.mxu0 %v1828
        %1877 = vmatprep.subr.bf16.mxu0 0
        %1878 = vmatpush1.bf16.msra.mxu0 %v1827
        %1879 = vmatprep.subr.bf16.mxu0 0
        %1880 = vmatpush1.bf16.msra.mxu0 %v1826
        %1881 = vmatprep.subr.bf16.mxu0 0
        %1882 = vmatpush1.bf16.msra.mxu0 %v1825
        %1883 = vmatprep.subr.bf16.mxu0 0
        %1884 = vmatpush2.bf16.msra.mxu0 0
        %1885 = vmatprep.subr.bf16.mxu0 0
        %1886 = vmatpush2.bf16.msra.mxu0 0
        %1887 = vmatprep.subr.bf16.mxu0 0
        %1888 = vmatpush2.bf16.msra.mxu0 0
        %1889 = vmatprep.subr.bf16.mxu0 0
        %1890 = vmatpush2.bf16.msra.mxu0 0
        %1891 = vmatprep.subr.bf16.mxu0 0
        %1892 = vmatpush2.bf16.msra.mxu0 0
        %1893 = vmatprep.subr.bf16.mxu0 0
        %1894 = vmatpush2.bf16.msra.mxu0 0
        %1895 = vmatprep.subr.bf16.mxu0 0
        %1896 = vmatpush2.bf16.msra.mxu0 0
        %1897 = vmatprep.subr.bf16.mxu0 0
        %1898 = vmatpush2.bf16.msra.mxu0 0
        %1899 = vmatprep.mubr.bf16.mxu0 0
        %1900 = vmatmul.mubr.bf16.gmra.mxu0 %v1856
        %v1901 = vpop.f32.mrf.mxu0
        %v1902 = vadd.f32 0.0, %v1901
        %v1903 = vpop.f32.mrf.mxu0
        %v1904 = vpop.f32.mrf.mxu0
        %v1905 = vadd.f32 0.0, %v1904
        %v1906 = vpop.f32.mrf.mxu0
        %1907 = vmatprep.mubr.bf16.mxu0 0
        %1908 = vmatmul.mubr.bf16.gmra.mxu0 %v1859
        %v1909 = vpop.f32.mrf.mxu0
        %v1910 = vadd.f32 0.0, %v1909
        %v1911 = vpop.f32.mrf.mxu0
        %v1912 = vpop.f32.mrf.mxu0
        %v1913 = vadd.f32 0.0, %v1912
        %v1914 = vpop.f32.mrf.mxu0
        %1915 = vmatprep.mubr.bf16.mxu0 0
        %1916 = vmatmul.mubr.bf16.gmra.mxu0 %v1862
        %v1917 = vpop.f32.mrf.mxu0
        %v1918 = vadd.f32 0.0, %v1917
        %v1919 = vpop.f32.mrf.mxu0
        %v1920 = vpop.f32.mrf.mxu0
        %v1921 = vadd.f32 0.0, %v1920
        %v1922 = vpop.f32.mrf.mxu0
        %1923 = vmatprep.mubr.bf16.mxu0 0
        %1924 = vmatmul.mubr.bf16.gmra.mxu0 %v1865
        %v1925 = vpop.f32.mrf.mxu0
        %v1926 = vadd.f32 0.0, %v1925
        %v1927 = vpop.f32.mrf.mxu0
        %v1928 = vpop.f32.mrf.mxu0
        %v1929 = vadd.f32 0.0, %v1928
        %v1930 = vpop.f32.mrf.mxu0
        %1931 = vdwg.mxu0
        %v1932 = vpack.c.bf16 %v1905, %v1902
        %v1933 = vpack.c.bf16 %v1913, %v1910
        %v1934 = vpack.c.bf16 %v1921, %v1918
        %v1935 = vpack.c.bf16 %v1929, %v1926
        %v1938 = vunpack.c.l.b16 %v1831
        %v1939 = vunpack.c.l.b16 %v1832
        %v1940 = vpack.c.b16 %v1939, %v1938
        %vm1942 = vcmask 130048
        %v1944 = vsel %vm1942, %v1932, 0
        %v1947 = vsel %vm1942, %v1933, 0
        %v1950 = vsel %vm1942, %v1934, 0
        %v1953 = vsel %vm1942, %v1935, 0
        %1955 = vmatprep.subr.bf16.mxu0 0
        %1956 = vmatpush1.bf16.msra.mxu0 0
        %1957 = vmatprep.subr.bf16.mxu0 0
        %1958 = vmatpush1.bf16.msra.mxu0 0
        %1959 = vmatprep.subr.bf16.mxu0 0
        %1960 = vmatpush1.bf16.msra.mxu0 0
        %1961 = vmatprep.subr.bf16.mxu0 0
        %1962 = vmatpush1.bf16.msra.mxu0 0
        %1963 = vmatprep.subr.bf16.mxu0 0
        %1964 = vmatpush1.bf16.msra.mxu0 0
        %1965 = vmatprep.subr.bf16.mxu0 0
        %1966 = vmatpush1.bf16.msra.mxu0 0
        %1967 = vmatprep.subr.bf16.mxu0 0
        %1968 = vmatpush1.bf16.msra.mxu0 0
        %1969 = vmatprep.subr.bf16.mxu0 0
        %1970 = vmatpush1.bf16.msra.mxu0 %v1940
        %1971 = vmatprep.subr.bf16.mxu0 0
        %1972 = vmatpush2.bf16.msra.mxu0 0
        %1973 = vmatprep.subr.bf16.mxu0 0
        %1974 = vmatpush2.bf16.msra.mxu0 0
        %1975 = vmatprep.subr.bf16.mxu0 0
        %1976 = vmatpush2.bf16.msra.mxu0 0
        %1977 = vmatprep.subr.bf16.mxu0 0
        %1978 = vmatpush2.bf16.msra.mxu0 0
        %1979 = vmatprep.subr.bf16.mxu0 0
        %1980 = vmatpush2.bf16.msra.mxu0 0
        %1981 = vmatprep.subr.bf16.mxu0 0
        %1982 = vmatpush2.bf16.msra.mxu0 0
        %1983 = vmatprep.subr.bf16.mxu0 0
        %1984 = vmatpush2.bf16.msra.mxu0 0
        %1985 = vmatprep.subr.bf16.mxu0 0
        %1986 = vmatpush2.bf16.msra.mxu0 0
        %1987 = vmatprep.mubr.bf16.mxu0 0
        %1988 = vmatmul.mubr.bf16.gmra.mxu0 %v1944
        %v1989 = vpop.f32.mrf.mxu0
        %v1990 = vadd.f32 0.0, %v1989
        %v1991 = vpop.f32.mrf.mxu0
        %v1992 = vpop.f32.mrf.mxu0
        %v1993 = vadd.f32 0.0, %v1992
        %v1994 = vpop.f32.mrf.mxu0
        %1995 = vmatprep.mubr.bf16.mxu0 0
        %1996 = vmatmul.mubr.bf16.gmra.mxu0 %v1947
        %v1997 = vpop.f32.mrf.mxu0
        %v1998 = vadd.f32 0.0, %v1997
        %v1999 = vpop.f32.mrf.mxu0
        %v2000 = vpop.f32.mrf.mxu0
        %v2001 = vadd.f32 0.0, %v2000
        %v2002 = vpop.f32.mrf.mxu0
        %2003 = vmatprep.mubr.bf16.mxu0 0
        %2004 = vmatmul.mubr.bf16.gmra.mxu0 %v1950
        %v2005 = vpop.f32.mrf.mxu0
        %v2006 = vadd.f32 0.0, %v2005
        %v2007 = vpop.f32.mrf.mxu0
        %v2008 = vpop.f32.mrf.mxu0
        %v2009 = vadd.f32 0.0, %v2008
        %v2010 = vpop.f32.mrf.mxu0
        %2011 = vmatprep.mubr.bf16.mxu0 0
        %2012 = vmatmul.mubr.bf16.gmra.mxu0 %v1953
        %v2013 = vpop.f32.mrf.mxu0
        %v2014 = vadd.f32 0.0, %v2013
        %v2015 = vpop.f32.mrf.mxu0
        %v2016 = vpop.f32.mrf.mxu0
        %v2017 = vadd.f32 0.0, %v2016
        %v2018 = vpop.f32.mrf.mxu0
        %2019 = vdwg.mxu0
        %v2022 = vunpack.c.l.b16 %v1829
        %v2023 = vunpack.c.l.b16 %v1830
        %v2024 = vpack.c.b16 %v2023, %v2022
        %v2027 = vsel %vm1942, %v1825, 0
        %v2030 = vsel %vm1942, %v1826, 0
        %v2033 = vsel %vm1942, %v1827, 0
        %v2036 = vsel %vm1942, %v1828, 0
        %2038 = vmatprep.subr.bf16.mxu0 0
        %2039 = vmatpush1.bf16.msra.mxu0 0
        %2040 = vmatprep.subr.bf16.mxu0 0
        %2041 = vmatpush1.bf16.msra.mxu0 0
        %2042 = vmatprep.subr.bf16.mxu0 0
        %2043 = vmatpush1.bf16.msra.mxu0 0
        %2044 = vmatprep.subr.bf16.mxu0 0
        %2045 = vmatpush1.bf16.msra.mxu0 0
        %2046 = vmatprep.subr.bf16.mxu0 0
        %2047 = vmatpush1.bf16.msra.mxu0 0
        %2048 = vmatprep.subr.bf16.mxu0 0
        %2049 = vmatpush1.bf16.msra.mxu0 0
        %2050 = vmatprep.subr.bf16.mxu0 0
        %2051 = vmatpush1.bf16.msra.mxu0 0
        %2052 = vmatprep.subr.bf16.mxu0 0
        %2053 = vmatpush1.bf16.msra.mxu0 %v2024
        %2054 = vmatprep.subr.bf16.mxu0 0
        %2055 = vmatpush2.bf16.msra.mxu0 0
        %2056 = vmatprep.subr.bf16.mxu0 0
        %2057 = vmatpush2.bf16.msra.mxu0 0
        %2058 = vmatprep.subr.bf16.mxu0 0
        %2059 = vmatpush2.bf16.msra.mxu0 0
        %2060 = vmatprep.subr.bf16.mxu0 0
        %2061 = vmatpush2.bf16.msra.mxu0 0
        %2062 = vmatprep.subr.bf16.mxu0 0
        %2063 = vmatpush2.bf16.msra.mxu0 0
        %2064 = vmatprep.subr.bf16.mxu0 0
        %2065 = vmatpush2.bf16.msra.mxu0 0
        %2066 = vmatprep.subr.bf16.mxu0 0
        %2067 = vmatpush2.bf16.msra.mxu0 0
        %2068 = vmatprep.subr.bf16.mxu0 0
        %2069 = vmatpush2.bf16.msra.mxu0 0
        %2070 = vmatprep.mubr.bf16.mxu0 0
        %2071 = vmatmul.mubr.bf16.gmra.mxu0 %v2027
        %v2072 = vpop.f32.mrf.mxu0
        %v2073 = vadd.f32 %v1990, %v2072
        %v2074 = vpop.f32.mrf.mxu0
        %v2075 = vpop.f32.mrf.mxu0
        %v2076 = vadd.f32 %v1993, %v2075
        %v2077 = vpop.f32.mrf.mxu0
        %2078 = vmatprep.mubr.bf16.mxu0 0
        %2079 = vmatmul.mubr.bf16.gmra.mxu0 %v2030
        %v2080 = vpop.f32.mrf.mxu0
        %v2081 = vadd.f32 %v1998, %v2080
        %v2082 = vpop.f32.mrf.mxu0
        %v2083 = vpop.f32.mrf.mxu0
        %v2084 = vadd.f32 %v2001, %v2083
        %v2085 = vpop.f32.mrf.mxu0
        %2086 = vmatprep.mubr.bf16.mxu0 0
        %2087 = vmatmul.mubr.bf16.gmra.mxu0 %v2033
        %v2088 = vpop.f32.mrf.mxu0
        %v2089 = vadd.f32 %v2006, %v2088
        %v2090 = vpop.f32.mrf.mxu0
        %v2091 = vpop.f32.mrf.mxu0
        %v2092 = vadd.f32 %v2009, %v2091
        %v2093 = vpop.f32.mrf.mxu0
        %2094 = vmatprep.mubr.bf16.mxu0 0
        %2095 = vmatmul.mubr.bf16.gmra.mxu0 %v2036
        %v2096 = vpop.f32.mrf.mxu0
        %v2097 = vadd.f32 %v2014, %v2096
        %v2098 = vpop.f32.mrf.mxu0
        %v2099 = vpop.f32.mrf.mxu0
        %v2100 = vadd.f32 %v2017, %v2099
        %v2101 = vpop.f32.mrf.mxu0
        %2102 = vdwg.mxu0
        %v2104 = vlaneseq
        %v2105 = vshrl.u32 %v2104, 7
        %v2106 = vsub.s32 0, %v2105
        %v2107 = vrot.slane %v1833, %v2106
        %v2109 = vadd.f32 %v2073, %v2107
        %v2110 = vadd.f32 %v2076, %v2107
        %v2111 = vadd.f32 %v2081, %v2107
        %v2112 = vadd.f32 %v2084, %v2107
        %v2113 = vadd.f32 %v2089, %v2107
        %v2114 = vadd.f32 %v2092, %v2107
        %v2115 = vadd.f32 %v2097, %v2107
        %v2116 = vadd.f32 %v2100, %v2107
        %v2117 = vmax.f32 %v2109, 0.0
        %v2118 = vmax.f32 %v2110, 0.0
        %v2119 = vmax.f32 %v2111, 0.0
        %v2120 = vmax.f32 %v2112, 0.0
        %v2121 = vmax.f32 %v2113, 0.0
        %v2122 = vmax.f32 %v2114, 0.0
        %v2123 = vmax.f32 %v2115, 0.0
        %v2124 = vmax.f32 %v2116, 0.0
        %v2125 = vand.u32 2147483647, %v2109
        %v2126 = vand.u32 2147483647, %v2110
        %v2127 = vand.u32 2147483647, %v2111
        %v2128 = vand.u32 2147483647, %v2112
        %v2129 = vand.u32 2147483647, %v2113
        %v2130 = vand.u32 2147483647, %v2114
        %v2131 = vand.u32 2147483647, %v2115
        %v2132 = vand.u32 2147483647, %v2116
        %v2133 = vsub.f32 0.0, %v2125
        %v2134 = vsub.f32 0.0, %v2126
        %v2135 = vsub.f32 0.0, %v2127
        %v2136 = vsub.f32 0.0, %v2128
        %v2137 = vsub.f32 0.0, %v2129
        %v2138 = vsub.f32 0.0, %v2130
        %v2139 = vsub.f32 0.0, %v2131
        %v2140 = vsub.f32 0.0, %v2132
        %v2141 = vmul.f32 %v2133, 1.442695
        %v2142 = vpow.pop %v2141
        %v2143 = vmul.f32 %v2134, 1.442695
        %v2144 = vpow.pop %v2143
        %v2145 = vmul.f32 %v2135, 1.442695
        %v2146 = vpow.pop %v2145
        %v2147 = vmul.f32 %v2136, 1.442695
        %v2148 = vpow.pop %v2147
        %v2149 = vmul.f32 %v2137, 1.442695
        %v2150 = vpow.pop %v2149
        %v2151 = vmul.f32 %v2138, 1.442695
        %v2152 = vpow.pop %v2151
        %v2153 = vmul.f32 %v2139, 1.442695
        %v2154 = vpow.pop %v2153
        %v2155 = vmul.f32 %v2140, 1.442695
        %v2156 = vpow.pop %v2155
        %v2157 = vadd.f32 %v2142, 1.0
        %v2158 = vadd.f32 %v2144, 1.0
        %v2159 = vadd.f32 %v2146, 1.0
        %v2160 = vadd.f32 %v2148, 1.0
        %v2161 = vadd.f32 %v2150, 1.0
        %v2162 = vadd.f32 %v2152, 1.0
        %v2163 = vadd.f32 %v2154, 1.0
        %v2164 = vadd.f32 %v2156, 1.0
        %v2165 = vlog2.pop %v2157
        %v2166 = vmul.f32 %v2165, 0.6931472
        %v2167 = vlog2.pop %v2158
        %v2168 = vmul.f32 %v2167, 0.6931472
        %v2169 = vlog2.pop %v2159
        %v2170 = vmul.f32 %v2169, 0.6931472
        %v2171 = vlog2.pop %v2160
        %v2172 = vmul.f32 %v2171, 0.6931472
        %v2173 = vlog2.pop %v2161
        %v2174 = vmul.f32 %v2173, 0.6931472
        %v2175 = vlog2.pop %v2162
        %v2176 = vmul.f32 %v2175, 0.6931472
        %v2177 = vlog2.pop %v2163
        %v2178 = vmul.f32 %v2177, 0.6931472
        %v2179 = vlog2.pop %v2164
        %v2180 = vmul.f32 %v2179, 0.6931472
        %v2181 = vadd.f32 %v2117, %v2166
        %v2182 = vadd.f32 %v2118, %v2168
        %v2183 = vadd.f32 %v2119, %v2170
        %v2184 = vadd.f32 %v2120, %v2172
        %v2185 = vadd.f32 %v2121, %v2174
        %v2186 = vadd.f32 %v2122, %v2176
        %v2187 = vadd.f32 %v2123, %v2178
        %v2188 = vadd.f32 %v2124, %v2180
        %v2189 = vld [vmem:[%s817] sm:$0xf]
        %v2190 = vld [vmem:[%s817 + $0x4] sm:$0xf]
        %v2191 = vld [vmem:[%s817 + $0x8] sm:$0xf]
        %v2192 = vld [vmem:[%s817 + $0xc] sm:$0xf]
        %v2193 = vld [vmem:[%s817 + $0x10] sm:$0xf]
        %v2194 = vld [vmem:[%s826] sm:$0xf]
        %v2195 = vld [vmem:[%s826 + $0x4] sm:$0xf]
        %v2196 = vld [vmem:[%s826 + $0x8] sm:$0xf]
        %v2197 = vld [vmem:[%s826 + $0xc] sm:$0xf]
        %v2198 = vld [vmem:[%s826 + $0x10] sm:$0xf]
        %v2199 = vpack.c.bf16 %v2182, %v2181
        %v2200 = vpack.c.bf16 %v2184, %v2183
        %v2201 = vpack.c.bf16 %v2186, %v2185
        %v2202 = vpack.c.bf16 %v2188, %v2187
        %v2208 = vunpack.c.l.b16 %v2189
        %v2209 = vunpack.c.l.b16 %v2190
        %v2210 = vunpack.c.l.b16 %v2191
        %v2211 = vunpack.c.l.b16 %v2192
        %v2212 = vunpack.c.l.b16 %v2193
        %v2213 = vpack.c.b16 %v2209, %v2208
        %v2214 = vpack.c.b16 %v2211, %v2210
        %v2215 = vpack.c.b16 %v2212, %v2212
        %v2217 = vsel %vm1854, %v2213, 0
        %v2220 = vsel %vm1854, %v2214, 0
        %v2223 = vsel %vm1854, %v2215, 0
        %2225 = vmatprep.subr.bf16.mxu0 0
        %2226 = vmatpush1.bf16.msra.mxu0 0
        %2227 = vmatprep.subr.bf16.mxu0 0
        %2228 = vmatpush1.bf16.msra.mxu0 0
        %2229 = vmatprep.subr.bf16.mxu0 0
        %2230 = vmatpush1.bf16.msra.mxu0 0
        %2231 = vmatprep.subr.bf16.mxu0 0
        %2232 = vmatpush1.bf16.msra.mxu0 0
        %2233 = vmatprep.subr.bf16.mxu0 0
        %2234 = vmatpush1.bf16.msra.mxu0 %v2202
        %2235 = vmatprep.subr.bf16.mxu0 0
        %2236 = vmatpush1.bf16.msra.mxu0 %v2201
        %2237 = vmatprep.subr.bf16.mxu0 0
        %2238 = vmatpush1.bf16.msra.mxu0 %v2200
        %2239 = vmatprep.subr.bf16.mxu0 0
        %2240 = vmatpush1.bf16.msra.mxu0 %v2199
        %2241 = vmatprep.subr.bf16.mxu0 0
        %2242 = vmatpush2.bf16.msra.mxu0 0
        %2243 = vmatprep.subr.bf16.mxu0 0
        %2244 = vmatpush2.bf16.msra.mxu0 0
        %2245 = vmatprep.subr.bf16.mxu0 0
        %2246 = vmatpush2.bf16.msra.mxu0 0
        %2247 = vmatprep.subr.bf16.mxu0 0
        %2248 = vmatpush2.bf16.msra.mxu0 0
        %2249 = vmatprep.subr.bf16.mxu0 0
        %2250 = vmatpush2.bf16.msra.mxu0 0
        %2251 = vmatprep.subr.bf16.mxu0 0
        %2252 = vmatpush2.bf16.msra.mxu0 0
        %2253 = vmatprep.subr.bf16.mxu0 0
        %2254 = vmatpush2.bf16.msra.mxu0 0
        %2255 = vmatprep.subr.bf16.mxu0 0
        %2256 = vmatpush2.bf16.msra.mxu0 0
        %2257 = vmatprep.mubr.bf16.mxu0 0
        %2258 = vmatmul.mubr.bf16.gmra.mxu0 %v2217
        %v2259 = vpop.f32.mrf.mxu0
        %v2260 = vadd.f32 0.0, %v2259
        %v2261 = vpop.f32.mrf.mxu0
        %v2262 = vpop.f32.mrf.mxu0
        %v2263 = vadd.f32 0.0, %v2262
        %v2264 = vpop.f32.mrf.mxu0
        %2265 = vmatprep.mubr.bf16.mxu0 0
        %2266 = vmatmul.mubr.bf16.gmra.mxu0 %v2220
        %v2267 = vpop.f32.mrf.mxu0
        %v2268 = vadd.f32 0.0, %v2267
        %v2269 = vpop.f32.mrf.mxu0
        %v2270 = vpop.f32.mrf.mxu0
        %v2271 = vadd.f32 0.0, %v2270
        %v2272 = vpop.f32.mrf.mxu0
        %2273 = vmatprep.mubr.bf16.mxu0 0
        %2274 = vmatmul.mubr.bf16.gmra.mxu0 %v2223
        %v2275 = vpop.f32.mrf.mxu0
        %v2276 = vadd.f32 0.0, %v2275
        %v2277 = vpop.f32.mrf.mxu0
        %v2278 = vpop.f32.mrf.mxu0
        %v2279 = vpop.f32.mrf.mxu0
        %2280 = vdwg.mxu0
        %v2286 = vunpack.c.l.b16 %v2194
        %v2287 = vunpack.c.l.b16 %v2195
        %v2288 = vunpack.c.l.b16 %v2196
        %v2289 = vunpack.c.l.b16 %v2197
        %v2290 = vunpack.c.l.b16 %v2198
        %v2291 = vpack.c.b16 %v2287, %v2286
        %v2292 = vpack.c.b16 %v2289, %v2288
        %v2293 = vpack.c.b16 %v2290, %v2290
        %v2295 = vsel %vm1854, %v2291, 0
        %v2298 = vsel %vm1854, %v2292, 0
        %v2301 = vsel %vm1854, %v2293, 0
        %2303 = vmatprep.subr.bf16.mxu0 0
        %2304 = vmatpush1.bf16.msra.mxu0 0
        %2305 = vmatprep.subr.bf16.mxu0 0
        %2306 = vmatpush1.bf16.msra.mxu0 0
        %2307 = vmatprep.subr.bf16.mxu0 0
        %2308 = vmatpush1.bf16.msra.mxu0 0
        %2309 = vmatprep.subr.bf16.mxu0 0
        %2310 = vmatpush1.bf16.msra.mxu0 0
        %2311 = vmatprep.subr.bf16.mxu0 0
        %2312 = vmatpush1.bf16.msra.mxu0 %v2202
        %2313 = vmatprep.subr.bf16.mxu0 0
        %2314 = vmatpush1.bf16.msra.mxu0 %v2201
        %2315 = vmatprep.subr.bf16.mxu0 0
        %2316 = vmatpush1.bf16.msra.mxu0 %v2200
        %2317 = vmatprep.subr.bf16.mxu0 0
        %2318 = vmatpush1.bf16.msra.mxu0 %v2199
        %2319 = vmatprep.subr.bf16.mxu0 0
        %2320 = vmatpush2.bf16.msra.mxu0 0
        %2321 = vmatprep.subr.bf16.mxu0 0
        %2322 = vmatpush2.bf16.msra.mxu0 0
        %2323 = vmatprep.subr.bf16.mxu0 0
        %2324 = vmatpush2.bf16.msra.mxu0 0
        %2325 = vmatprep.subr.bf16.mxu0 0
        %2326 = vmatpush2.bf16.msra.mxu0 0
        %2327 = vmatprep.subr.bf16.mxu0 0
        %2328 = vmatpush2.bf16.msra.mxu0 0
        %2329 = vmatprep.subr.bf16.mxu0 0
        %2330 = vmatpush2.bf16.msra.mxu0 0
        %2331 = vmatprep.subr.bf16.mxu0 0
        %2332 = vmatpush2.bf16.msra.mxu0 0
        %2333 = vmatprep.subr.bf16.mxu0 0
        %2334 = vmatpush2.bf16.msra.mxu0 0
        %2335 = vmatprep.mubr.bf16.mxu0 0
        %2336 = vmatmul.mubr.bf16.gmra.mxu0 %v2295
        %v2337 = vpop.f32.mrf.mxu0
        %v2338 = vadd.f32 0.0, %v2337
        %v2339 = vpop.f32.mrf.mxu0
        %v2340 = vpop.f32.mrf.mxu0
        %v2341 = vadd.f32 0.0, %v2340
        %v2342 = vpop.f32.mrf.mxu0
        %2343 = vmatprep.mubr.bf16.mxu0 0
        %2344 = vmatmul.mubr.bf16.gmra.mxu0 %v2298
        %v2345 = vpop.f32.mrf.mxu0
        %v2346 = vadd.f32 0.0, %v2345
        %v2347 = vpop.f32.mrf.mxu0
        %v2348 = vpop.f32.mrf.mxu0
        %v2349 = vadd.f32 0.0, %v2348
        %v2350 = vpop.f32.mrf.mxu0
        %2351 = vmatprep.mubr.bf16.mxu0 0
        %2352 = vmatmul.mubr.bf16.gmra.mxu0 %v2301
        %v2353 = vpop.f32.mrf.mxu0
        %v2354 = vadd.f32 0.0, %v2353
        %v2355 = vpop.f32.mrf.mxu0
        %v2356 = vpop.f32.mrf.mxu0
        %v2357 = vpop.f32.mrf.mxu0
        %2358 = vdwg.mxu0
        %v2359 = vmax.f32 %v2260, %v2338
        %v2360 = vmax.f32 %v2263, %v2341
        %v2361 = vmax.f32 %v2268, %v2346
        %v2362 = vmax.f32 %v2271, %v2349
        %v2363 = vmax.f32 %v2276, %v2354
        %v2364 = vld [vmem:[%s790] sm:$0xf]
        %v2365 = vld [vmem:[%s790 + $0x4] sm:$0xf]
        %v2366 = vld [vmem:[%s790 + $0x8] sm:$0xf]
        %v2367 = vld [vmem:[%s790 + $0xc] sm:$0xf]
        %v2368 = vld [vmem:[%s790 + $0x10] sm:$0xf]
        %v2369 = vpack.c.bf16 %v2360, %v2359
        %v2370 = vpack.c.bf16 %v2362, %v2361
        %v2371 = vpack.c.bf16 %v2363, %v2363
        %v2372 = vld [vmem:[%s15] sm:$0xf]
        %v2373 = vld [vmem:[%s15 + $0x4] sm:$0xf]
        %v2374 = vld [vmem:[%s15 + $0x8] sm:$0xf]
        %v2375 = vld [vmem:[%s15 + $0xc] sm:$0xf]
        %v2376 = vld [vmem:[%s16] sm:$0xf]
        %v2377 = vld [vmem:[%s16 + $0x4] sm:$0xf]
        %v2378 = vld [vmem:[%s16 + $0x8] sm:$0xf]
        %v2379 = vld [vmem:[%s16 + $0xc] sm:$0xf]
        %v2380 = vld [vmem:[%s17] sm:$0x1]
        %v2386 = vunpack.c.l.b16 %v2364
        %v2387 = vunpack.c.l.b16 %v2365
        %v2388 = vunpack.c.l.b16 %v2366
        %v2389 = vunpack.c.l.b16 %v2367
        %v2390 = vunpack.c.l.b16 %v2368
        %v2391 = vpack.c.b16 %v2387, %v2386
        %v2392 = vpack.c.b16 %v2389, %v2388
        %v2393 = vpack.c.b16 %v2390, %v2390
        %vm2394 = vcmask 326656
        %v2396 = vsel %vm2394, %v2391, 0
        %v2399 = vsel %vm2394, %v2392, 0
        %v2402 = vsel %vm2394, %v2393, 0
        %v2405 = vsel %vm1216, %v2371, 0
        %2407 = vmatprep.subr.bf16.mxu0 0
        %2408 = vmatpush1.bf16.msra.mxu0 0
        %2409 = vmatprep.subr.bf16.mxu0 0
        %2410 = vmatpush1.bf16.msra.mxu0 0
        %2411 = vmatprep.subr.bf16.mxu0 0
        %2412 = vmatpush1.bf16.msra.mxu0 0
        %2413 = vmatprep.subr.bf16.mxu0 0
        %2414 = vmatpush1.bf16.msra.mxu0 0
        %2415 = vmatprep.subr.bf16.mxu0 0
        %2416 = vmatpush1.bf16.msra.mxu0 0
        %2417 = vmatprep.subr.bf16.mxu0 0
        %2418 = vmatpush1.bf16.msra.mxu0 %v2405
        %2419 = vmatprep.subr.bf16.mxu0 0
        %2420 = vmatpush1.bf16.msra.mxu0 %v2370
        %2421 = vmatprep.subr.bf16.mxu0 0
        %2422 = vmatpush1.bf16.msra.mxu0 %v2369
        %2423 = vmatprep.subr.bf16.mxu0 0
        %2424 = vmatpush2.bf16.msra.mxu0 0
        %2425 = vmatprep.subr.bf16.mxu0 0
        %2426 = vmatpush2.bf16.msra.mxu0 0
        %2427 = vmatprep.subr.bf16.mxu0 0
        %2428 = vmatpush2.bf16.msra.mxu0 0
        %2429 = vmatprep.subr.bf16.mxu0 0
        %2430 = vmatpush2.bf16.msra.mxu0 0
        %2431 = vmatprep.subr.bf16.mxu0 0
        %2432 = vmatpush2.bf16.msra.mxu0 0
        %2433 = vmatprep.subr.bf16.mxu0 0
        %2434 = vmatpush2.bf16.msra.mxu0 0
        %2435 = vmatprep.subr.bf16.mxu0 0
        %2436 = vmatpush2.bf16.msra.mxu0 0
        %2437 = vmatprep.subr.bf16.mxu0 0
        %2438 = vmatpush2.bf16.msra.mxu0 0
        %2439 = vmatprep.mubr.bf16.mxu0 0
        %2440 = vmatmul.mubr.bf16.gmra.mxu0 %v2396
        %v2441 = vpop.f32.mrf.mxu0
        %v2442 = vadd.f32 0.0, %v2441
        %v2443 = vpop.f32.mrf.mxu0
        %v2444 = vpop.f32.mrf.mxu0
        %v2445 = vadd.f32 0.0, %v2444
        %v2446 = vpop.f32.mrf.mxu0
        %2447 = vmatprep.mubr.bf16.mxu0 0
        %2448 = vmatmul.mubr.bf16.gmra.mxu0 %v2399
        %v2449 = vpop.f32.mrf.mxu0
        %v2450 = vadd.f32 0.0, %v2449
        %v2451 = vpop.f32.mrf.mxu0
        %v2452 = vpop.f32.mrf.mxu0
        %v2453 = vadd.f32 0.0, %v2452
        %v2454 = vpop.f32.mrf.mxu0
        %2455 = vmatprep.mubr.bf16.mxu0 0
        %2456 = vmatmul.mubr.bf16.gmra.mxu0 %v2402
        %v2457 = vpop.f32.mrf.mxu0
        %v2458 = vadd.f32 0.0, %v2457
        %v2459 = vpop.f32.mrf.mxu0
        %v2460 = vpop.f32.mrf.mxu0
        %v2461 = vpop.f32.mrf.mxu0
        %2462 = vdwg.mxu0
        %v2463 = vpack.c.bf16 %v2445, %v2442
        %v2464 = vpack.c.bf16 %v2453, %v2450
        %v2465 = vpack.c.bf16 %v2458, %v2458
        %v2470 = vunpack.c.l.b16 %v2376
        %v2471 = vunpack.c.l.b16 %v2377
        %v2472 = vunpack.c.l.b16 %v2378
        %v2473 = vunpack.c.l.b16 %v2379
        %v2474 = vpack.c.b16 %v2471, %v2470
        %v2475 = vpack.c.b16 %v2473, %v2472
        %vm2478 = vcmask 261120
        %v2480 = vsel %vm2478, %v2463, 0
        %v2483 = vsel %vm2478, %v2464, 0
        %v2486 = vsel %vm2478, %v2465, 0
        %2488 = vmatprep.subr.bf16.mxu0 0
        %2489 = vmatpush1.bf16.msra.mxu0 0
        %2490 = vmatprep.subr.bf16.mxu0 0
        %2491 = vmatpush1.bf16.msra.mxu0 0
        %2492 = vmatprep.subr.bf16.mxu0 0
        %2493 = vmatpush1.bf16.msra.mxu0 0
        %2494 = vmatprep.subr.bf16.mxu0 0
        %2495 = vmatpush1.bf16.msra.mxu0 0
        %2496 = vmatprep.subr.bf16.mxu0 0
        %2497 = vmatpush1.bf16.msra.mxu0 0
        %2498 = vmatprep.subr.bf16.mxu0 0
        %2499 = vmatpush1.bf16.msra.mxu0 0
        %2500 = vmatprep.subr.bf16.mxu0 0
        %2501 = vmatpush1.bf16.msra.mxu0 %v2475
        %2502 = vmatprep.subr.bf16.mxu0 0
        %2503 = vmatpush1.bf16.msra.mxu0 %v2474
        %2504 = vmatprep.subr.bf16.mxu0 0
        %2505 = vmatpush2.bf16.msra.mxu0 0
        %2506 = vmatprep.subr.bf16.mxu0 0
        %2507 = vmatpush2.bf16.msra.mxu0 0
        %2508 = vmatprep.subr.bf16.mxu0 0
        %2509 = vmatpush2.bf16.msra.mxu0 0
        %2510 = vmatprep.subr.bf16.mxu0 0
        %2511 = vmatpush2.bf16.msra.mxu0 0
        %2512 = vmatprep.subr.bf16.mxu0 0
        %2513 = vmatpush2.bf16.msra.mxu0 0
        %2514 = vmatprep.subr.bf16.mxu0 0
        %2515 = vmatpush2.bf16.msra.mxu0 0
        %2516 = vmatprep.subr.bf16.mxu0 0
        %2517 = vmatpush2.bf16.msra.mxu0 0
        %2518 = vmatprep.subr.bf16.mxu0 0
        %2519 = vmatpush2.bf16.msra.mxu0 0
        %2520 = vmatprep.mubr.bf16.mxu0 0
        %2521 = vmatmul.mubr.bf16.gmra.mxu0 %v2480
        %v2522 = vpop.f32.mrf.mxu0
        %v2523 = vadd.f32 0.0, %v2522
        %v2524 = vpop.f32.mrf.mxu0
        %v2525 = vpop.f32.mrf.mxu0
        %v2526 = vadd.f32 0.0, %v2525
        %v2527 = vpop.f32.mrf.mxu0
        %2528 = vmatprep.mubr.bf16.mxu0 0
        %2529 = vmatmul.mubr.bf16.gmra.mxu0 %v2483
        %v2530 = vpop.f32.mrf.mxu0
        %v2531 = vadd.f32 0.0, %v2530
        %v2532 = vpop.f32.mrf.mxu0
        %v2533 = vpop.f32.mrf.mxu0
        %v2534 = vadd.f32 0.0, %v2533
        %v2535 = vpop.f32.mrf.mxu0
        %2536 = vmatprep.mubr.bf16.mxu0 0
        %2537 = vmatmul.mubr.bf16.gmra.mxu0 %v2486
        %v2538 = vpop.f32.mrf.mxu0
        %v2539 = vadd.f32 0.0, %v2538
        %v2540 = vpop.f32.mrf.mxu0
        %v2541 = vpop.f32.mrf.mxu0
        %v2542 = vpop.f32.mrf.mxu0
        %2543 = vdwg.mxu0
        %v2548 = vunpack.c.l.b16 %v2372
        %v2549 = vunpack.c.l.b16 %v2373
        %v2550 = vunpack.c.l.b16 %v2374
        %v2551 = vunpack.c.l.b16 %v2375
        %v2552 = vpack.c.b16 %v2549, %v2548
        %v2553 = vpack.c.b16 %v2551, %v2550
        %v2557 = vsel %vm2478, %v2369, 0
        %v2560 = vsel %vm2478, %v2370, 0
        %v2562 = vsel %vm2478, %v2371, 0
        %2564 = vmatprep.subr.bf16.mxu0 0
        %2565 = vmatpush1.bf16.msra.mxu0 0
        %2566 = vmatprep.subr.bf16.mxu0 0
        %2567 = vmatpush1.bf16.msra.mxu0 0
        %2568 = vmatprep.subr.bf16.mxu0 0
        %2569 = vmatpush1.bf16.msra.mxu0 0
        %2570 = vmatprep.subr.bf16.mxu0 0
        %2571 = vmatpush1.bf16.msra.mxu0 0
        %2572 = vmatprep.subr.bf16.mxu0 0
        %2573 = vmatpush1.bf16.msra.mxu0 0
        %2574 = vmatprep.subr.bf16.mxu0 0
        %2575 = vmatpush1.bf16.msra.mxu0 0
        %2576 = vmatprep.subr.bf16.mxu0 0
        %2577 = vmatpush1.bf16.msra.mxu0 %v2553
        %2578 = vmatprep.subr.bf16.mxu0 0
        %2579 = vmatpush1.bf16.msra.mxu0 %v2552
        %2580 = vmatprep.subr.bf16.mxu0 0
        %2581 = vmatpush2.bf16.msra.mxu0 0
        %2582 = vmatprep.subr.bf16.mxu0 0
        %2583 = vmatpush2.bf16.msra.mxu0 0
        %2584 = vmatprep.subr.bf16.mxu0 0
        %2585 = vmatpush2.bf16.msra.mxu0 0
        %2586 = vmatprep.subr.bf16.mxu0 0
        %2587 = vmatpush2.bf16.msra.mxu0 0
        %2588 = vmatprep.subr.bf16.mxu0 0
        %2589 = vmatpush2.bf16.msra.mxu0 0
        %2590 = vmatprep.subr.bf16.mxu0 0
        %2591 = vmatpush2.bf16.msra.mxu0 0
        %2592 = vmatprep.subr.bf16.mxu0 0
        %2593 = vmatpush2.bf16.msra.mxu0 0
        %2594 = vmatprep.subr.bf16.mxu0 0
        %2595 = vmatpush2.bf16.msra.mxu0 0
        %2596 = vmatprep.mubr.bf16.mxu0 0
        %2597 = vmatmul.mubr.bf16.gmra.mxu0 %v2557
        %v2598 = vpop.f32.mrf.mxu0
        %v2599 = vadd.f32 %v2523, %v2598
        %v2600 = vpop.f32.mrf.mxu0
        %v2601 = vpop.f32.mrf.mxu0
        %v2602 = vadd.f32 %v2526, %v2601
        %v2603 = vpop.f32.mrf.mxu0
        %2604 = vmatprep.mubr.bf16.mxu0 0
        %2605 = vmatmul.mubr.bf16.gmra.mxu0 %v2560
        %v2606 = vpop.f32.mrf.mxu0
        %v2607 = vadd.f32 %v2531, %v2606
        %v2608 = vpop.f32.mrf.mxu0
        %v2609 = vpop.f32.mrf.mxu0
        %v2610 = vadd.f32 %v2534, %v2609
        %v2611 = vpop.f32.mrf.mxu0
        %2612 = vmatprep.mubr.bf16.mxu0 0
        %2613 = vmatmul.mubr.bf16.gmra.mxu0 %v2562
        %v2614 = vpop.f32.mrf.mxu0
        %v2615 = vadd.f32 %v2539, %v2614
        %v2616 = vpop.f32.mrf.mxu0
        %v2617 = vpop.f32.mrf.mxu0
        %v2618 = vpop.f32.mrf.mxu0
        %2619 = vdwg.mxu0
        %v2621 = vlaneseq
        %v2622 = vshrl.u32 %v2621, 7
        %v2623 = vsub.s32 0, %v2622
        %v2624 = vrot.slane %v2380, %v2623
        %v2626 = vadd.f32 %v2599, %v2624
        %v2627 = vadd.f32 %v2602, %v2624
        %v2628 = vadd.f32 %v2607, %v2624
        %v2629 = vadd.f32 %v2610, %v2624
        %v2630 = vadd.f32 %v2615, %v2624
        %v2631 = vmax.f32 %v2626, 0.0
        %v2632 = vmax.f32 %v2627, 0.0
        %v2633 = vmax.f32 %v2628, 0.0
        %v2634 = vmax.f32 %v2629, 0.0
        %v2635 = vmax.f32 %v2630, 0.0
        %v2636 = vand.u32 2147483647, %v2626
        %v2637 = vand.u32 2147483647, %v2627
        %v2638 = vand.u32 2147483647, %v2628
        %v2639 = vand.u32 2147483647, %v2629
        %v2640 = vand.u32 2147483647, %v2630
        %v2641 = vsub.f32 0.0, %v2636
        %v2642 = vsub.f32 0.0, %v2637
        %v2643 = vsub.f32 0.0, %v2638
        %v2644 = vsub.f32 0.0, %v2639
        %v2645 = vsub.f32 0.0, %v2640
        %v2646 = vmul.f32 %v2641, 1.442695
        %v2647 = vpow.pop %v2646
        %v2648 = vmul.f32 %v2642, 1.442695
        %v2649 = vpow.pop %v2648
        %v2650 = vmul.f32 %v2643, 1.442695
        %v2651 = vpow.pop %v2650
        %v2652 = vmul.f32 %v2644, 1.442695
        %v2653 = vpow.pop %v2652
        %v2654 = vmul.f32 %v2645, 1.442695
        %v2655 = vpow.pop %v2654
        %v2656 = vadd.f32 %v2647, 1.0
        %v2657 = vadd.f32 %v2649, 1.0
        %v2658 = vadd.f32 %v2651, 1.0
        %v2659 = vadd.f32 %v2653, 1.0
        %v2660 = vadd.f32 %v2655, 1.0
        %v2661 = vlog2.pop %v2656
        %v2662 = vmul.f32 %v2661, 0.6931472
        %v2663 = vlog2.pop %v2657
        %v2664 = vmul.f32 %v2663, 0.6931472
        %v2665 = vlog2.pop %v2658
        %v2666 = vmul.f32 %v2665, 0.6931472
        %v2667 = vlog2.pop %v2659
        %v2668 = vmul.f32 %v2667, 0.6931472
        %v2669 = vlog2.pop %v2660
        %v2670 = vmul.f32 %v2669, 0.6931472
        %v2671 = vadd.f32 %v2631, %v2662
        %v2672 = vadd.f32 %v2632, %v2664
        %v2673 = vadd.f32 %v2633, %v2666
        %v2674 = vadd.f32 %v2634, %v2668
        %v2675 = vadd.f32 %v2635, %v2670
        %v2676 = vld [vmem:[%s835] sm:$0x3]
        %v2677 = vpack.c.bf16 %v2672, %v2671
        %v2678 = vpack.c.bf16 %v2674, %v2673
        %v2679 = vpack.c.bf16 %v2675, %v2675
        %v2681 = vsel %vm2394, %v2676, 0
        %v2684 = vsel %vm1216, %v2679, 0
        %2686 = vmatprep.subr.bf16.mxu0 0
        %2687 = vmatpush1.bf16.msra.mxu0 0
        %2688 = vmatprep.subr.bf16.mxu0 0
        %2689 = vmatpush1.bf16.msra.mxu0 0
        %2690 = vmatprep.subr.bf16.mxu0 0
        %2691 = vmatpush1.bf16.msra.mxu0 0
        %2692 = vmatprep.subr.bf16.mxu0 0
        %2693 = vmatpush1.bf16.msra.mxu0 0
        %2694 = vmatprep.subr.bf16.mxu0 0
        %2695 = vmatpush1.bf16.msra.mxu0 0
        %2696 = vmatprep.subr.bf16.mxu0 0
        %2697 = vmatpush1.bf16.msra.mxu0 %v2684
        %2698 = vmatprep.subr.bf16.mxu0 0
        %2699 = vmatpush1.bf16.msra.mxu0 %v2678
        %2700 = vmatprep.subr.bf16.mxu0 0
        %2701 = vmatpush1.bf16.msra.mxu0 %v2677
        %2702 = vmatprep.subr.bf16.mxu0 0
        %2703 = vmatpush2.bf16.msra.mxu0 0
        %2704 = vmatprep.subr.bf16.mxu0 0
        %2705 = vmatpush2.bf16.msra.mxu0 0
        %2706 = vmatprep.subr.bf16.mxu0 0
        %2707 = vmatpush2.bf16.msra.mxu0 0
        %2708 = vmatprep.subr.bf16.mxu0 0
        %2709 = vmatpush2.bf16.msra.mxu0 0
        %2710 = vmatprep.subr.bf16.mxu0 0
        %2711 = vmatpush2.bf16.msra.mxu0 0
        %2712 = vmatprep.subr.bf16.mxu0 0
        %2713 = vmatpush2.bf16.msra.mxu0 0
        %2714 = vmatprep.subr.bf16.mxu0 0
        %2715 = vmatpush2.bf16.msra.mxu0 0
        %2716 = vmatprep.subr.bf16.mxu0 0
        %2717 = vmatpush2.bf16.msra.mxu0 0
        %2718 = vmatprep.mubr.bf16.mxu0 0
        %2719 = vmatmul.mubr.bf16.gmra.mxu0 %v2681
        %v2720 = vpop.f32.mrf.mxu0
        %v2721 = vadd.f32 0.0, %v2720
        %v2722 = vpop.f32.mrf.mxu0
        %v2723 = vpop.f32.mrf.mxu0
        %v2724 = vpop.f32.mrf.mxu0
        %2725 = vdwg.mxu0
        %v2726 = vpack.c.bf16 %v2721, %v2721
        %v2727 = vld [vmem:[%s18] sm:$0xf]
        %v2728 = vld [vmem:[%s18 + $0x4] sm:$0xf]
        %v2729 = vld [vmem:[%s18 + $0x8] sm:$0xf]
        %v2730 = vld [vmem:[%s18 + $0xc] sm:$0xf]
        %v2731 = vld [vmem:[%s19] sm:$0x1]
        %v2733 = vlaneseq
        %v2734 = vshrl.u32 %v2733, 7
        %v2735 = vsub.s32 0, %v2734
        %v2736 = vrot.slane %v2731, %v2735
        %v2742 = vunpack.c.l.b16 %v2727
        %v2743 = vunpack.c.l.b16 %v2728
        %v2744 = vunpack.c.l.b16 %v2729
        %v2745 = vunpack.c.l.b16 %v2730
        %v2746 = vpack.c.b16 %v2743, %v2742
        %v2747 = vpack.c.b16 %v2745, %v2744
        %v2751 = vsel %vm2478, %v2726, 0
        %2753 = vmatprep.subr.bf16.mxu0 0
        %2754 = vmatpush1.bf16.msra.mxu0 0
        %2755 = vmatprep.subr.bf16.mxu0 0
        %2756 = vmatpush1.bf16.msra.mxu0 0
        %2757 = vmatprep.subr.bf16.mxu0 0
        %2758 = vmatpush1.bf16.msra.mxu0 0
        %2759 = vmatprep.subr.bf16.mxu0 0
        %2760 = vmatpush1.bf16.msra.mxu0 0
        %2761 = vmatprep.subr.bf16.mxu0 0
        %2762 = vmatpush1.bf16.msra.mxu0 0
        %2763 = vmatprep.subr.bf16.mxu0 0
        %2764 = vmatpush1.bf16.msra.mxu0 0
        %2765 = vmatprep.subr.bf16.mxu0 0
        %2766 = vmatpush1.bf16.msra.mxu0 %v2747
        %2767 = vmatprep.subr.bf16.mxu0 0
        %2768 = vmatpush1.bf16.msra.mxu0 %v2746
        %2769 = vmatprep.subr.bf16.mxu0 0
        %2770 = vmatpush2.bf16.msra.mxu0 0
        %2771 = vmatprep.subr.bf16.mxu0 0
        %2772 = vmatpush2.bf16.msra.mxu0 0
        %2773 = vmatprep.subr.bf16.mxu0 0
        %2774 = vmatpush2.bf16.msra.mxu0 0
        %2775 = vmatprep.subr.bf16.mxu0 0
        %2776 = vmatpush2.bf16.msra.mxu0 0
        %2777 = vmatprep.subr.bf16.mxu0 0
        %2778 = vmatpush2.bf16.msra.mxu0 0
        %2779 = vmatprep.subr.bf16.mxu0 0
        %2780 = vmatpush2.bf16.msra.mxu0 0
        %2781 = vmatprep.subr.bf16.mxu0 0
        %2782 = vmatpush2.bf16.msra.mxu0 0
        %2783 = vmatprep.subr.bf16.mxu0 0
        %2784 = vmatpush2.bf16.msra.mxu0 0
        %2785 = vmatprep.mubr.bf16.mxu0 0
        %2786 = vmatmul.mubr.bf16.gmra.mxu0 %v2751
        %v2787 = vpop.f32.mrf.mxu0
        %v2788 = vadd.f32 %v2736, %v2787
        %v2789 = vpop.f32.mrf.mxu0
        %v2790 = vpop.f32.mrf.mxu0
        %v2791 = vpop.f32.mrf.mxu0
        %2792 = vdwg.mxu0
        %vm2793 = vcmask 27648
        %v2794 = vsel %vm2793, %v2788, -inf
        %2795 = vmax.xlane.f32.xlu0 %v2794
        %v2796 = vpop.xlane.xlu0 %2795
        %v2797 = vsub.f32 %v2788, %v2796
        %v2798 = vmul.f32 %v2797, 1.442695
        %v2799 = vpow.pop %v2798
        %v2800 = vsel %vm2793, %v2799, 0.0
        %2801 = vadd.xlane.f32.xlu0 %v2800
        %v2802 = vpop.xlane.xlu0 %2801
        %v2803 = vlog2.pop %v2802
        %v2804 = vmul.f32 %v2803, 0.6931472
        %v2805 = vsub.f32 %v2797, %v2804
        %2806 = vst.msk [vmem:[%s943] sm:$0xf] %vm2793, %v2805
        %s2807 = sand.u32 %s521, 1
        %s2808 = scalar_lea.sflag [#allocation4], %s2807
        %s2809 = sand.u32 %s521, 1
        %s2810 = smul.addr %s2809, 4
        %s2811 = scalar_lea.vmem [#allocation19], %s2810
        // Predicated region
        $region141: #{tpu_custom_call.1} parent=99 // pred_check
          %p2812 = pneg %p531
        $region142: #{tpu_custom_call.1} parent=99 // pred_check_branch
          %2814 = sbr.rel (%p2812) target = $region144
        $region143: #{tpu_custom_call.1} parent=99 // pred_region
          %s2816 = ssub.s32 64, 64
          %2817 = vsyncadd %s2808, %s2816
          %s2818 = smul.addr %s48, 64
          %s2819 = scalar_lea.hbm %s20, %s2818
          %s2821 = sshll.u32 %s2811, 4
          %s2822 = int_to_ptr.vmem [resolvable:$true] %s2821
          %2824 = dma.vmem_to_hbm [thread:$0]  %s2822, 64, %s2819, %s2808
        $region144: #{tpu_custom_call.1} parent=99 // pred_fallthru
          _
      $region100: #{tpu_custom_call.1} parent=5 // pred_fallthru
        _
      %p2825 = scmp.le.s32.totalorder 2, %s43
      // Predicated region
      $region145: #{tpu_custom_call.1} parent=5 // pred_check
        %p2826 = pneg %p2825
      $region146: #{tpu_custom_call.1} parent=5 // pred_check_branch
        %2828 = sbr.rel (%p2826) target = $region148
      $region147: #{tpu_custom_call.1} parent=5 // pred_region
        %s2829 = ssub.s32 %s43, 2
        // Predicated region
        $region149: #{tpu_custom_call.1} parent=147 // pred_check
          %p2830 = pneg %p537
        $region150: #{tpu_custom_call.1} parent=147 // pred_check_branch
          %2832 = sbr.rel (%p2830) target = $region152
        $region151: #{tpu_custom_call.1} parent=147 // pred_region
          %s2833 = sand.u32 %s522, 1
          %s2834 = scalar_lea.sflag [#allocation4], %s2833
          %s2835 = sand.u32 %s522, 1
          %s2836 = smul.addr %s2835, 4
          %s2837 = scalar_lea.vmem [#allocation19], %s2836
          %2838 = dma.done %s2834, 64
        $region152: #{tpu_custom_call.1} parent=147 // pred_fallthru
          _
      $region148: #{tpu_custom_call.1} parent=5 // pred_fallthru
        _
    $region6: #{tpu_custom_call.1} parent=1 // loop_footer
      %s47 = sadd.s32 1, %s43
    $region7: #{tpu_custom_call.1} parent=1 // loop_footer_branch
      %42 = sbr.rel target = $region3
    $region8: #{tpu_custom_call.1} parent=1 // loop_exit
      _
    %2839 = vsyncpa [#allocation3], 1
    %s2840 = scalar_lea.sflag [#allocation3], 1
    %2841 = vsyncpa %s2840, 1
    %2842 = vsyncpa [#allocation6], 1
    %s2843 = scalar_lea.sflag [#allocation6], 1
    %2844 = vsyncpa %s2843, 1
    %2845 = vsyncpa [#allocation9], 1
    %s2846 = scalar_lea.sflag [#allocation9], 1
    %2847 = vsyncpa %s2846, 1
    %2848 = vsyncpa [#allocation12], 1
    %s2849 = scalar_lea.sflag [#allocation12], 1
    %2850 = vsyncpa %s2849, 1
    %2851 = vsyncpa [#allocation15], 1
    %2852 = vsyncpa [#allocation18], 1
    %2853 = vsyncpa [#allocation4], 1
    %s2854 = scalar_lea.sflag [#allocation4], 1
    %2855 = vsyncpa %s2854, 1

</llo_original>
